<compile_context>
chip_gen: v6e
topology: v6e:2x2x1
jax: 0.10.0
libtpu: 0.0.40
codegen_flags: <defaults>
</compile_context>

<pallas_src>
import functools

import numpy as np
import jax
import jax.numpy as jnp
from jax import lax
from jax.experimental import pallas as pl
from jax.experimental.pallas import tpu as pltpu

N_OUT = 100  # final Linear(128, 100)


def _vmem_spec():
    # Full-array block resident in VMEM (all operands here are tiny).
    return pl.BlockSpec(memory_space=pltpu.MemorySpace.VMEM)


# ----------------------------- Fused Pallas kernel --------------------------

def network_kernel(hw_n, bp, x_ref, s_ref, tcat_ref,
                   w1_ref, b1_ref, w2_ref, b2_ref, w3_ref, b3_ref,
                   v1_ref, fb1_ref, fw2_ref, fb2_ref, fw3_ref, fb3_ref,
                   o_ref):
    """Entire forward pass; only 2-D MXU matmuls + VPU bias/ReLU + static slices."""
    f32 = jnp.float32
    n_taps = s_ref.shape[0]          # 9

    def conv3x3_relu(h, wcat_ref, b_ref):
        # h: (BHW, Cin); wcat: (Cin, 9*Cout); S[tap]: (BHW, BHW) row-shift/pad.
        cout = b_ref.shape[1]
        a = jnp.dot(h, wcat_ref[...], preferred_element_type=f32)     # (BHW, 9*Cout)
        acc = jnp.dot(s_ref[0], a[:, 0:cout], preferred_element_type=f32)
        for tap in range(1, n_taps):                                  # unrolled 9 taps
            acc = acc + jnp.dot(s_ref[tap], a[:, tap * cout:(tap + 1) * cout],
                                preferred_element_type=f32)
        return jnp.maximum(acc + b_ref[...], 0.0)

    h = conv3x3_relu(x_ref[...], w1_ref, b1_ref)     # (BHW, 32)
    h = conv3x3_relu(h, w2_ref, b2_ref)              # (BHW, 64)
    h = conv3x3_relu(h, w3_ref, b3_ref)              # (BHW, 64)

    # NCHW flatten + fc1.  g[hw*BP + b, :] = h[b*HW + hw, :]  (row-gather matmul),
    # then aligned (BP, C3) blocks are concatenated along lanes into (BP, HW*C3),
    # which is exactly PyTorch's flatten once fc1's weight is permuted host-side.
    g = jnp.dot(tcat_ref[...], h, preferred_element_type=f32)         # (HW*BP, C3)
    x_fc = jnp.concatenate([g[i * bp:(i + 1) * bp, :] for i in range(hw_n)], axis=1)
    h1 = jnp.maximum(
        jnp.dot(x_fc, v1_ref[...], preferred_element_type=f32) + fb1_ref[...], 0.0)
    h2 = jnp.maximum(
        jnp.dot(h1, fw2_ref[...], preferred_element_type=f32) + fb2_ref[...], 0.0)
    o_ref[...] = jnp.dot(h2, fw3_ref[...], preferred_element_type=f32) + fb3_ref[...]


# ----------------------------- JAX wrapper ----------------------------------

def network_forward(x_nchw, kp):
    """x_nchw: (B, C, H, W) float32 -> (B, 100) float32 (matches Network.forward)."""
    B, C, H, W = x_nchw.shape
    # Single tiny relayout outside the kernel: NCHW -> rows p = b*H*W + h*W + w.
    x2d = jnp.transpose(x_nchw, (0, 2, 3, 1)).reshape(B * H * W, C).astype(jnp.float32)
    HW = H * W
    BP = kp["t"].shape[0] // HW          # batch rows padded to a multiple of 8
    NPAD = kp["fw3"].shape[1]            # final output lane-padded 100 -> 128
    kernel = functools.partial(network_kernel, HW, BP)
    out = pl.pallas_call(
        kernel,
        out_shape=jax.ShapeDtypeStruct((BP, NPAD), jnp.float32),
        in_specs=[_vmem_spec()] * 15,
        out_specs=_vmem_spec(),
    )(x2d, kp["s"], kp["t"],
      kp["w1"], kp["b1"], kp["w2"], kp["b2"], kp["w3"], kp["b3"],
      kp["v1"], kp["fb1"], kp["fw2"], kp["fb2"], kp["fw3"], kp["fb3"])
    return out[:B, :N_OUT]


# ----------------------------- Parameters -----------------------------------

def init_torch_params(key, input_channels=8, board_size=(5, 5)):
    """PyTorch-layout params (Conv2d: OIHW (Cout,Cin,3,3); Linear: (out,in))."""
    H, W = board_size
    specs = [
        ("conv1", (32, input_channels, 3, 3), 9 * input_channels),
        ("conv2", (64, 32, 3, 3), 9 * 32),
        ("conv3", (64, 64, 3, 3), 9 * 64),
        ("fc1", (128, 64 * H * W), 64 * H * W),
        ("fc2", (128, 128), 128),
        ("fc3", (N_OUT, 128), 128),
    ]
    p = {}
    for name, wshape, fan_in in specs:
        key, kw, kb = jax.random.split(key, 3)
        bound = float(1.0 / np.sqrt(fan_in))
        p[name + "_w"] = jax.random.uniform(kw, wshape, jnp.float32, -bound, bound)
        p[name + "_b"] = jax.random.uniform(kb, (wshape[0],), jnp.float32, -bound, bound)
    return p


def prepare_kernel_params(p, batch, board_size=(5, 5)):
    """One-time host-side conversion of PyTorch-layout params to kernel layouts,
    plus the constant shift / row-gather matrices."""
    H, W = board_size
    HW = H * W
    BHW = batch * HW
    BP = max(8, ((batch + 7) // 8) * 8)   # per-spatial batch block (sublane aligned)
    NPAD = 128                             # lane-pad the final output (100 -> 128)

    def conv_wcat(w):   # (Cout, Cin, 3, 3) -> (Cin, 9*Cout), tap = kh*3 + kw
        cout, cin = w.shape[0], w.shape[1]
        wt = jnp.transpose(w, (2, 3, 1, 0)).reshape(9, cin, cout)     # (tap, cin, cout)
        return jnp.transpose(wt, (1, 0, 2)).reshape(cin, 9 * cout)

    def bias_row(b, pad_to=None):
        n = b.shape[0]
        pad_to = n if pad_to is None else pad_to
        return jnp.zeros((1, pad_to), jnp.float32).at[0, :n].set(b)

    # 3x3 shift matrices: (S[tap] @ x)[p] = x at the neighbouring pixel, or 0 at borders.
    s = np.zeros((9, BHW, BHW), np.float32)
    for b in range(batch):
        for h in range(H):
            for w in range(W):
                prow = b * HW + h * W + w
                for kh in range(3):
                    for kw in range(3):
                        hh, ww = h + kh - 1, w + kw - 1
                        if 0 <= hh < H and 0 <= ww < W:
                            s[kh * 3 + kw, prow, b * HW + hh * W + ww] = 1.0

    # Row-gather matrix for the flatten: Tcat[hw*BP + b, b*HW + hw] = 1.
    t = np.zeros((HW * BP, BHW), np.float32)
    for b in range(batch):
        for hw in range(HW):
            t[hw * BP + b, b * HW + hw] = 1.0

    # fc1 weight with the NCHW flatten folded in: V[hw*C3 + c, o] = fc1_w[o, c*HW + hw].
    n_h1, n_flat = p["fc1_w"].shape
    c3 = n_flat // HW
    v1 = jnp.transpose(p["fc1_w"].reshape(n_h1, c3, HW), (2, 1, 0)).reshape(HW * c3, n_h1)

    fw3 = jnp.zeros((p["fc3_w"].shape[1], NPAD), jnp.float32).at[:, :N_OUT].set(p["fc3_w"].T)

    return {
        "s": jnp.asarray(s), "t": jnp.asarray(t),
        "w1": conv_wcat(p["conv1_w"]), "b1": bias_row(p["conv1_b"]),
        "w2": conv_wcat(p["conv2_w"]), "b2": bias_row(p["conv2_b"]),
        "w3": conv_wcat(p["conv3_w"]), "b3": bias_row(p["conv3_b"]),
        "v1": v1, "fb1": bias_row(p["fc1_b"]),
        "fw2": p["fc2_w"].T, "fb2": bias_row(p["fc2_b"]),
        "fw3": fw3, "fb3": bias_row(p["fc3_b"], NPAD),
    }


# ----------------------------- Pure-JAX reference ----------------------------

def reference_forward(x_nchw, p):
    y = x_nchw.astype(jnp.float32)
    for name in ("conv1", "conv2", "conv3"):
        y = lax.conv_general_dilated(
            y, p[name + "_w"], window_strides=(1, 1), padding=((1, 1), (1, 1)),
            dimension_numbers=("NCHW", "OIHW", "NCHW"), precision=lax.Precision.HIGHEST)
        y = jnp.maximum(y + p[name + "_b"][None, :, None, None], 0.0)
    flat = y.reshape(y.shape[0], -1)                          # PyTorch NCHW flatten
    h = jnp.maximum(jnp.dot(flat, p["fc1_w"].T, precision=lax.Precision.HIGHEST)
                    + p["fc1_b"], 0.0)
    h = jnp.maximum(jnp.dot(h, p["fc2_w"].T, precision=lax.Precision.HIGHEST)
                    + p["fc2_b"], 0.0)
    return jnp.dot(h, p["fc3_w"].T, precision=lax.Precision.HIGHEST) + p["fc3_b"]


# ----------------------------- Main ------------------------------------------

if __name__ == "__main__":
    input_channels = 8
    board_size = (5, 5)
    batch = 2

    root = jax.random.PRNGKey(0)
    kparam, kx = jax.random.split(root)
    torch_params = init_torch_params(kparam, input_channels, board_size)
    kernel_params = prepare_kernel_params(torch_params, batch, board_size)

    # PyTorch-convention NCHW input: (B, C, H, W)
    x = jax.random.normal(kx, (batch, input_channels, *board_size), jnp.float32)

    fwd = jax.jit(network_forward)
    out = jax.block_until_ready(fwd(x, kernel_params))

    assert out.shape == (batch, N_OUT), out.shape
    assert out.dtype == jnp.float32, out.dtype
    assert bool(jnp.all(jnp.isfinite(out)))

    ref = jax.block_until_ready(jax.jit(reference_forward)(x, torch_params))
    np.testing.assert_allclose(np.asarray(out), np.asarray(ref), rtol=5e-2, atol=5e-2)

    print("KERNEL_OK")
</pallas_src>

<mosaic_0001>
module attributes {stable_mosaic.version = 11 : i64} {
  func.func @network_kernel(%arg0: memref<50x8xf32, #tpu.memory_space<vmem>>, %arg1: memref<9x50x50xf32, #tpu.memory_space<vmem>>, %arg2: memref<200x50xf32, #tpu.memory_space<vmem>>, %arg3: memref<8x288xf32, #tpu.memory_space<vmem>>, %arg4: memref<1x32xf32, #tpu.memory_space<vmem>>, %arg5: memref<32x576xf32, #tpu.memory_space<vmem>>, %arg6: memref<1x64xf32, #tpu.memory_space<vmem>>, %arg7: memref<64x576xf32, #tpu.memory_space<vmem>>, %arg8: memref<1x64xf32, #tpu.memory_space<vmem>>, %arg9: memref<1600x128xf32, #tpu.memory_space<vmem>>, %arg10: memref<1x128xf32, #tpu.memory_space<vmem>>, %arg11: memref<128x128xf32, #tpu.memory_space<vmem>>, %arg12: memref<1x128xf32, #tpu.memory_space<vmem>>, %arg13: memref<128x128xf32, #tpu.memory_space<vmem>>, %arg14: memref<1x128xf32, #tpu.memory_space<vmem>>, %arg15: memref<8x128xf32, #tpu.memory_space<vmem>>) attributes {dimension_semantics = [], scalar_prefetch = 0 : i64, scratch_operands = 0 : i64, tpu.core_type = #tpu.core_type<tc>} {
    %c0 = arith.constant 0 : index
    %c0_0 = arith.constant 0 : index
    %0 = vector.load %arg0[%c0, %c0_0] : memref<50x8xf32, #tpu.memory_space<vmem>>, vector<50x8xf32>
    %c0_1 = arith.constant 0 : index
    %c0_2 = arith.constant 0 : index
    %1 = vector.load %arg3[%c0_1, %c0_2] : memref<8x288xf32, #tpu.memory_space<vmem>>, vector<8x288xf32>
    %cst = arith.constant dense<0.000000e+00> : vector<50x288xf32>
    %2 = tpu.matmul %0, %1, %cst {dimension_numbers = #tpu.dot_dimension_numbers<[1], [0], [0], [1], [0, 0, 1, 1], [], []>} : vector<50x8xf32>, vector<8x288xf32>, vector<50x288xf32> -> vector<50x288xf32>
    %c0_3 = arith.constant 0 : index
    %c0_4 = arith.constant 0 : index
    %c0_5 = arith.constant 0 : index
    %3 = vector.load %arg1[%c0_3, %c0_4, %c0_5] : memref<9x50x50xf32, #tpu.memory_space<vmem>>, vector<1x50x50xf32>
    %4 = vector.shape_cast %3 : vector<1x50x50xf32> to vector<50x50xf32>
    %5 = vector.extract_strided_slice %2 {offsets = [0, 0], sizes = [50, 32], strides = [1, 1]} : vector<50x288xf32> to vector<50x32xf32>
    %cst_6 = arith.constant dense<0.000000e+00> : vector<50x32xf32>
    %6 = tpu.matmul %4, %5, %cst_6 {dimension_numbers = #tpu.dot_dimension_numbers<[1], [0], [0], [1], [0, 0, 1, 1], [], []>} : vector<50x50xf32>, vector<50x32xf32>, vector<50x32xf32> -> vector<50x32xf32>
    %c1 = arith.constant 1 : index
    %c0_7 = arith.constant 0 : index
    %c0_8 = arith.constant 0 : index
    %7 = vector.load %arg1[%c1, %c0_7, %c0_8] : memref<9x50x50xf32, #tpu.memory_space<vmem>>, vector<1x50x50xf32>
    %8 = vector.shape_cast %7 : vector<1x50x50xf32> to vector<50x50xf32>
    %9 = vector.extract_strided_slice %2 {offsets = [0, 32], sizes = [50, 32], strides = [1, 1]} : vector<50x288xf32> to vector<50x32xf32>
    %cst_9 = arith.constant dense<0.000000e+00> : vector<50x32xf32>
    %10 = tpu.matmul %8, %9, %cst_9 {dimension_numbers = #tpu.dot_dimension_numbers<[1], [0], [0], [1], [0, 0, 1, 1], [], []>} : vector<50x50xf32>, vector<50x32xf32>, vector<50x32xf32> -> vector<50x32xf32>
    %11 = arith.addf %6, %10 : vector<50x32xf32>
    %c2 = arith.constant 2 : index
    %c0_10 = arith.constant 0 : index
    %c0_11 = arith.constant 0 : index
    %12 = vector.load %arg1[%c2, %c0_10, %c0_11] : memref<9x50x50xf32, #tpu.memory_space<vmem>>, vector<1x50x50xf32>
    %13 = vector.shape_cast %12 : vector<1x50x50xf32> to vector<50x50xf32>
    %14 = vector.extract_strided_slice %2 {offsets = [0, 64], sizes = [50, 32], strides = [1, 1]} : vector<50x288xf32> to vector<50x32xf32>
    %cst_12 = arith.constant dense<0.000000e+00> : vector<50x32xf32>
    %15 = tpu.matmul %13, %14, %cst_12 {dimension_numbers = #tpu.dot_dimension_numbers<[1], [0], [0], [1], [0, 0, 1, 1], [], []>} : vector<50x50xf32>, vector<50x32xf32>, vector<50x32xf32> -> vector<50x32xf32>
    %16 = arith.addf %11, %15 : vector<50x32xf32>
    %c3 = arith.constant 3 : index
    %c0_13 = arith.constant 0 : index
    %c0_14 = arith.constant 0 : index
    %17 = vector.load %arg1[%c3, %c0_13, %c0_14] : memref<9x50x50xf32, #tpu.memory_space<vmem>>, vector<1x50x50xf32>
    %18 = vector.shape_cast %17 : vector<1x50x50xf32> to vector<50x50xf32>
    %19 = vector.extract_strided_slice %2 {offsets = [0, 96], sizes = [50, 32], strides = [1, 1]} : vector<50x288xf32> to vector<50x32xf32>
    %cst_15 = arith.constant dense<0.000000e+00> : vector<50x32xf32>
    %20 = tpu.matmul %18, %19, %cst_15 {dimension_numbers = #tpu.dot_dimension_numbers<[1], [0], [0], [1], [0, 0, 1, 1], [], []>} : vector<50x50xf32>, vector<50x32xf32>, vector<50x32xf32> -> vector<50x32xf32>
    %21 = arith.addf %16, %20 : vector<50x32xf32>
    %c4 = arith.constant 4 : index
    %c0_16 = arith.constant 0 : index
    %c0_17 = arith.constant 0 : index
    %22 = vector.load %arg1[%c4, %c0_16, %c0_17] : memref<9x50x50xf32, #tpu.memory_space<vmem>>, vector<1x50x50xf32>
    %23 = vector.shape_cast %22 : vector<1x50x50xf32> to vector<50x50xf32>
    %24 = vector.extract_strided_slice %2 {offsets = [0, 128], sizes = [50, 32], strides = [1, 1]} : vector<50x288xf32> to vector<50x32xf32>
    %cst_18 = arith.constant dense<0.000000e+00> : vector<50x32xf32>
    %25 = tpu.matmul %23, %24, %cst_18 {dimension_numbers = #tpu.dot_dimension_numbers<[1], [0], [0], [1], [0, 0, 1, 1], [], []>} : vector<50x50xf32>, vector<50x32xf32>, vector<50x32xf32> -> vector<50x32xf32>
    %26 = arith.addf %21, %25 : vector<50x32xf32>
    %c5 = arith.constant 5 : index
    %c0_19 = arith.constant 0 : index
    %c0_20 = arith.constant 0 : index
    %27 = vector.load %arg1[%c5, %c0_19, %c0_20] : memref<9x50x50xf32, #tpu.memory_space<vmem>>, vector<1x50x50xf32>
    %28 = vector.shape_cast %27 : vector<1x50x50xf32> to vector<50x50xf32>
    %29 = vector.extract_strided_slice %2 {offsets = [0, 160], sizes = [50, 32], strides = [1, 1]} : vector<50x288xf32> to vector<50x32xf32>
    %cst_21 = arith.constant dense<0.000000e+00> : vector<50x32xf32>
    %30 = tpu.matmul %28, %29, %cst_21 {dimension_numbers = #tpu.dot_dimension_numbers<[1], [0], [0], [1], [0, 0, 1, 1], [], []>} : vector<50x50xf32>, vector<50x32xf32>, vector<50x32xf32> -> vector<50x32xf32>
    %31 = arith.addf %26, %30 : vector<50x32xf32>
    %c6 = arith.constant 6 : index
    %c0_22 = arith.constant 0 : index
    %c0_23 = arith.constant 0 : index
    %32 = vector.load %arg1[%c6, %c0_22, %c0_23] : memref<9x50x50xf32, #tpu.memory_space<vmem>>, vector<1x50x50xf32>
    %33 = vector.shape_cast %32 : vector<1x50x50xf32> to vector<50x50xf32>
    %34 = vector.extract_strided_slice %2 {offsets = [0, 192], sizes = [50, 32], strides = [1, 1]} : vector<50x288xf32> to vector<50x32xf32>
    %cst_24 = arith.constant dense<0.000000e+00> : vector<50x32xf32>
    %35 = tpu.matmul %33, %34, %cst_24 {dimension_numbers = #tpu.dot_dimension_numbers<[1], [0], [0], [1], [0, 0, 1, 1], [], []>} : vector<50x50xf32>, vector<50x32xf32>, vector<50x32xf32> -> vector<50x32xf32>
    %36 = arith.addf %31, %35 : vector<50x32xf32>
    %c7 = arith.constant 7 : index
    %c0_25 = arith.constant 0 : index
    %c0_26 = arith.constant 0 : index
    %37 = vector.load %arg1[%c7, %c0_25, %c0_26] : memref<9x50x50xf32, #tpu.memory_space<vmem>>, vector<1x50x50xf32>
    %38 = vector.shape_cast %37 : vector<1x50x50xf32> to vector<50x50xf32>
    %39 = vector.extract_strided_slice %2 {offsets = [0, 224], sizes = [50, 32], strides = [1, 1]} : vector<50x288xf32> to vector<50x32xf32>
    %cst_27 = arith.constant dense<0.000000e+00> : vector<50x32xf32>
    %40 = tpu.matmul %38, %39, %cst_27 {dimension_numbers = #tpu.dot_dimension_numbers<[1], [0], [0], [1], [0, 0, 1, 1], [], []>} : vector<50x50xf32>, vector<50x32xf32>, vector<50x32xf32> -> vector<50x32xf32>
    %41 = arith.addf %36, %40 : vector<50x32xf32>
    %c8 = arith.constant 8 : index
    %c0_28 = arith.constant 0 : index
    %c0_29 = arith.constant 0 : index
    %42 = vector.load %arg1[%c8, %c0_28, %c0_29] : memref<9x50x50xf32, #tpu.memory_space<vmem>>, vector<1x50x50xf32>
    %43 = vector.shape_cast %42 : vector<1x50x50xf32> to vector<50x50xf32>
    %44 = vector.extract_strided_slice %2 {offsets = [0, 256], sizes = [50, 32], strides = [1, 1]} : vector<50x288xf32> to vector<50x32xf32>
    %cst_30 = arith.constant dense<0.000000e+00> : vector<50x32xf32>
    %45 = tpu.matmul %43, %44, %cst_30 {dimension_numbers = #tpu.dot_dimension_numbers<[1], [0], [0], [1], [0, 0, 1, 1], [], []>} : vector<50x50xf32>, vector<50x32xf32>, vector<50x32xf32> -> vector<50x32xf32>
    %46 = arith.addf %41, %45 : vector<50x32xf32>
    %c0_31 = arith.constant 0 : index
    %c0_32 = arith.constant 0 : index
    %47 = vector.load %arg4[%c0_31, %c0_32] : memref<1x32xf32, #tpu.memory_space<vmem>>, vector<1x32xf32>
    %48 = vector.broadcast %47 : vector<1x32xf32> to vector<50x32xf32>
    %49 = arith.addf %46, %48 : vector<50x32xf32>
    %cst_33 = arith.constant 0.000000e+00 : f32
    %50 = vector.broadcast %cst_33 : f32 to vector<50x32xf32>
    %51 = arith.maximumf %49, %50 : vector<50x32xf32>
    %c0_34 = arith.constant 0 : index
    %c0_35 = arith.constant 0 : index
    %52 = vector.load %arg5[%c0_34, %c0_35] : memref<32x576xf32, #tpu.memory_space<vmem>>, vector<32x576xf32>
    %cst_36 = arith.constant dense<0.000000e+00> : vector<50x576xf32>
    %53 = tpu.matmul %51, %52, %cst_36 {dimension_numbers = #tpu.dot_dimension_numbers<[1], [0], [0], [1], [0, 0, 1, 1], [], []>} : vector<50x32xf32>, vector<32x576xf32>, vector<50x576xf32> -> vector<50x576xf32>
    %c0_37 = arith.constant 0 : index
    %c0_38 = arith.constant 0 : index
    %c0_39 = arith.constant 0 : index
    %54 = vector.load %arg1[%c0_37, %c0_38, %c0_39] : memref<9x50x50xf32, #tpu.memory_space<vmem>>, vector<1x50x50xf32>
    %55 = vector.shape_cast %54 : vector<1x50x50xf32> to vector<50x50xf32>
    %56 = vector.extract_strided_slice %53 {offsets = [0, 0], sizes = [50, 64], strides = [1, 1]} : vector<50x576xf32> to vector<50x64xf32>
    %cst_40 = arith.constant dense<0.000000e+00> : vector<50x64xf32>
    %57 = tpu.matmul %55, %56, %cst_40 {dimension_numbers = #tpu.dot_dimension_numbers<[1], [0], [0], [1], [0, 0, 1, 1], [], []>} : vector<50x50xf32>, vector<50x64xf32>, vector<50x64xf32> -> vector<50x64xf32>
    %c1_41 = arith.constant 1 : index
    %c0_42 = arith.constant 0 : index
    %c0_43 = arith.constant 0 : index
    %58 = vector.load %arg1[%c1_41, %c0_42, %c0_43] : memref<9x50x50xf32, #tpu.memory_space<vmem>>, vector<1x50x50xf32>
    %59 = vector.shape_cast %58 : vector<1x50x50xf32> to vector<50x50xf32>
    %60 = vector.extract_strided_slice %53 {offsets = [0, 64], sizes = [50, 64], strides = [1, 1]} : vector<50x576xf32> to vector<50x64xf32>
    %cst_44 = arith.constant dense<0.000000e+00> : vector<50x64xf32>
    %61 = tpu.matmul %59, %60, %cst_44 {dimension_numbers = #tpu.dot_dimension_numbers<[1], [0], [0], [1], [0, 0, 1, 1], [], []>} : vector<50x50xf32>, vector<50x64xf32>, vector<50x64xf32> -> vector<50x64xf32>
    %62 = arith.addf %57, %61 : vector<50x64xf32>
    %c2_45 = arith.constant 2 : index
    %c0_46 = arith.constant 0 : index
    %c0_47 = arith.constant 0 : index
    %63 = vector.load %arg1[%c2_45, %c0_46, %c0_47] : memref<9x50x50xf32, #tpu.memory_space<vmem>>, vector<1x50x50xf32>
    %64 = vector.shape_cast %63 : vector<1x50x50xf32> to vector<50x50xf32>
    %65 = vector.extract_strided_slice %53 {offsets = [0, 128], sizes = [50, 64], strides = [1, 1]} : vector<50x576xf32> to vector<50x64xf32>
    %cst_48 = arith.constant dense<0.000000e+00> : vector<50x64xf32>
    %66 = tpu.matmul %64, %65, %cst_48 {dimension_numbers = #tpu.dot_dimension_numbers<[1], [0], [0], [1], [0, 0, 1, 1], [], []>} : vector<50x50xf32>, vector<50x64xf32>, vector<50x64xf32> -> vector<50x64xf32>
    %67 = arith.addf %62, %66 : vector<50x64xf32>
    %c3_49 = arith.constant 3 : index
    %c0_50 = arith.constant 0 : index
    %c0_51 = arith.constant 0 : index
    %68 = vector.load %arg1[%c3_49, %c0_50, %c0_51] : memref<9x50x50xf32, #tpu.memory_space<vmem>>, vector<1x50x50xf32>
    %69 = vector.shape_cast %68 : vector<1x50x50xf32> to vector<50x50xf32>
    %70 = vector.extract_strided_slice %53 {offsets = [0, 192], sizes = [50, 64], strides = [1, 1]} : vector<50x576xf32> to vector<50x64xf32>
    %cst_52 = arith.constant dense<0.000000e+00> : vector<50x64xf32>
    %71 = tpu.matmul %69, %70, %cst_52 {dimension_numbers = #tpu.dot_dimension_numbers<[1], [0], [0], [1], [0, 0, 1, 1], [], []>} : vector<50x50xf32>, vector<50x64xf32>, vector<50x64xf32> -> vector<50x64xf32>
    %72 = arith.addf %67, %71 : vector<50x64xf32>
    %c4_53 = arith.constant 4 : index
    %c0_54 = arith.constant 0 : index
    %c0_55 = arith.constant 0 : index
    %73 = vector.load %arg1[%c4_53, %c0_54, %c0_55] : memref<9x50x50xf32, #tpu.memory_space<vmem>>, vector<1x50x50xf32>
    %74 = vector.shape_cast %73 : vector<1x50x50xf32> to vector<50x50xf32>
    %75 = vector.extract_strided_slice %53 {offsets = [0, 256], sizes = [50, 64], strides = [1, 1]} : vector<50x576xf32> to vector<50x64xf32>
    %cst_56 = arith.constant dense<0.000000e+00> : vector<50x64xf32>
    %76 = tpu.matmul %74, %75, %cst_56 {dimension_numbers = #tpu.dot_dimension_numbers<[1], [0], [0], [1], [0, 0, 1, 1], [], []>} : vector<50x50xf32>, vector<50x64xf32>, vector<50x64xf32> -> vector<50x64xf32>
    %77 = arith.addf %72, %76 : vector<50x64xf32>
    %c5_57 = arith.constant 5 : index
    %c0_58 = arith.constant 0 : index
    %c0_59 = arith.constant 0 : index
    %78 = vector.load %arg1[%c5_57, %c0_58, %c0_59] : memref<9x50x50xf32, #tpu.memory_space<vmem>>, vector<1x50x50xf32>
    %79 = vector.shape_cast %78 : vector<1x50x50xf32> to vector<50x50xf32>
    %80 = vector.extract_strided_slice %53 {offsets = [0, 320], sizes = [50, 64], strides = [1, 1]} : vector<50x576xf32> to vector<50x64xf32>
    %cst_60 = arith.constant dense<0.000000e+00> : vector<50x64xf32>
    %81 = tpu.matmul %79, %80, %cst_60 {dimension_numbers = #tpu.dot_dimension_numbers<[1], [0], [0], [1], [0, 0, 1, 1], [], []>} : vector<50x50xf32>, vector<50x64xf32>, vector<50x64xf32> -> vector<50x64xf32>
    %82 = arith.addf %77, %81 : vector<50x64xf32>
    %c6_61 = arith.constant 6 : index
    %c0_62 = arith.constant 0 : index
    %c0_63 = arith.constant 0 : index
    %83 = vector.load %arg1[%c6_61, %c0_62, %c0_63] : memref<9x50x50xf32, #tpu.memory_space<vmem>>, vector<1x50x50xf32>
    %84 = vector.shape_cast %83 : vector<1x50x50xf32> to vector<50x50xf32>
    %85 = vector.extract_strided_slice %53 {offsets = [0, 384], sizes = [50, 64], strides = [1, 1]} : vector<50x576xf32> to vector<50x64xf32>
    %cst_64 = arith.constant dense<0.000000e+00> : vector<50x64xf32>
    %86 = tpu.matmul %84, %85, %cst_64 {dimension_numbers = #tpu.dot_dimension_numbers<[1], [0], [0], [1], [0, 0, 1, 1], [], []>} : vector<50x50xf32>, vector<50x64xf32>, vector<50x64xf32> -> vector<50x64xf32>
    %87 = arith.addf %82, %86 : vector<50x64xf32>
    %c7_65 = arith.constant 7 : index
    %c0_66 = arith.constant 0 : index
    %c0_67 = arith.constant 0 : index
    %88 = vector.load %arg1[%c7_65, %c0_66, %c0_67] : memref<9x50x50xf32, #tpu.memory_space<vmem>>, vector<1x50x50xf32>
    %89 = vector.shape_cast %88 : vector<1x50x50xf32> to vector<50x50xf32>
    %90 = vector.extract_strided_slice %53 {offsets = [0, 448], sizes = [50, 64], strides = [1, 1]} : vector<50x576xf32> to vector<50x64xf32>
    %cst_68 = arith.constant dense<0.000000e+00> : vector<50x64xf32>
    %91 = tpu.matmul %89, %90, %cst_68 {dimension_numbers = #tpu.dot_dimension_numbers<[1], [0], [0], [1], [0, 0, 1, 1], [], []>} : vector<50x50xf32>, vector<50x64xf32>, vector<50x64xf32> -> vector<50x64xf32>
    %92 = arith.addf %87, %91 : vector<50x64xf32>
    %c8_69 = arith.constant 8 : index
    %c0_70 = arith.constant 0 : index
    %c0_71 = arith.constant 0 : index
    %93 = vector.load %arg1[%c8_69, %c0_70, %c0_71] : memref<9x50x50xf32, #tpu.memory_space<vmem>>, vector<1x50x50xf32>
    %94 = vector.shape_cast %93 : vector<1x50x50xf32> to vector<50x50xf32>
    %95 = vector.extract_strided_slice %53 {offsets = [0, 512], sizes = [50, 64], strides = [1, 1]} : vector<50x576xf32> to vector<50x64xf32>
    %cst_72 = arith.constant dense<0.000000e+00> : vector<50x64xf32>
    %96 = tpu.matmul %94, %95, %cst_72 {dimension_numbers = #tpu.dot_dimension_numbers<[1], [0], [0], [1], [0, 0, 1, 1], [], []>} : vector<50x50xf32>, vector<50x64xf32>, vector<50x64xf32> -> vector<50x64xf32>
    %97 = arith.addf %92, %96 : vector<50x64xf32>
    %c0_73 = arith.constant 0 : index
    %c0_74 = arith.constant 0 : index
    %98 = vector.load %arg6[%c0_73, %c0_74] : memref<1x64xf32, #tpu.memory_space<vmem>>, vector<1x64xf32>
    %99 = vector.broadcast %98 : vector<1x64xf32> to vector<50x64xf32>
    %100 = arith.addf %97, %99 : vector<50x64xf32>
    %cst_75 = arith.constant 0.000000e+00 : f32
    %101 = vector.broadcast %cst_75 : f32 to vector<50x64xf32>
    %102 = arith.maximumf %100, %101 : vector<50x64xf32>
    %c0_76 = arith.constant 0 : index
    %c0_77 = arith.constant 0 : index
    %103 = vector.load %arg7[%c0_76, %c0_77] : memref<64x576xf32, #tpu.memory_space<vmem>>, vector<64x576xf32>
    %cst_78 = arith.constant dense<0.000000e+00> : vector<50x576xf32>
    %104 = tpu.matmul %102, %103, %cst_78 {dimension_numbers = #tpu.dot_dimension_numbers<[1], [0], [0], [1], [0, 0, 1, 1], [], []>} : vector<50x64xf32>, vector<64x576xf32>, vector<50x576xf32> -> vector<50x576xf32>
    %c0_79 = arith.constant 0 : index
    %c0_80 = arith.constant 0 : index
    %c0_81 = arith.constant 0 : index
    %105 = vector.load %arg1[%c0_79, %c0_80, %c0_81] : memref<9x50x50xf32, #tpu.memory_space<vmem>>, vector<1x50x50xf32>
    %106 = vector.shape_cast %105 : vector<1x50x50xf32> to vector<50x50xf32>
    %107 = vector.extract_strided_slice %104 {offsets = [0, 0], sizes = [50, 64], strides = [1, 1]} : vector<50x576xf32> to vector<50x64xf32>
    %cst_82 = arith.constant dense<0.000000e+00> : vector<50x64xf32>
    %108 = tpu.matmul %106, %107, %cst_82 {dimension_numbers = #tpu.dot_dimension_numbers<[1], [0], [0], [1], [0, 0, 1, 1], [], []>} : vector<50x50xf32>, vector<50x64xf32>, vector<50x64xf32> -> vector<50x64xf32>
    %c1_83 = arith.constant 1 : index
    %c0_84 = arith.constant 0 : index
    %c0_85 = arith.constant 0 : index
    %109 = vector.load %arg1[%c1_83, %c0_84, %c0_85] : memref<9x50x50xf32, #tpu.memory_space<vmem>>, vector<1x50x50xf32>
    %110 = vector.shape_cast %109 : vector<1x50x50xf32> to vector<50x50xf32>
    %111 = vector.extract_strided_slice %104 {offsets = [0, 64], sizes = [50, 64], strides = [1, 1]} : vector<50x576xf32> to vector<50x64xf32>
    %cst_86 = arith.constant dense<0.000000e+00> : vector<50x64xf32>
    %112 = tpu.matmul %110, %111, %cst_86 {dimension_numbers = #tpu.dot_dimension_numbers<[1], [0], [0], [1], [0, 0, 1, 1], [], []>} : vector<50x50xf32>, vector<50x64xf32>, vector<50x64xf32> -> vector<50x64xf32>
    %113 = arith.addf %108, %112 : vector<50x64xf32>
    %c2_87 = arith.constant 2 : index
    %c0_88 = arith.constant 0 : index
    %c0_89 = arith.constant 0 : index
    %114 = vector.load %arg1[%c2_87, %c0_88, %c0_89] : memref<9x50x50xf32, #tpu.memory_space<vmem>>, vector<1x50x50xf32>
    %115 = vector.shape_cast %114 : vector<1x50x50xf32> to vector<50x50xf32>
    %116 = vector.extract_strided_slice %104 {offsets = [0, 128], sizes = [50, 64], strides = [1, 1]} : vector<50x576xf32> to vector<50x64xf32>
    %cst_90 = arith.constant dense<0.000000e+00> : vector<50x64xf32>
    %117 = tpu.matmul %115, %116, %cst_90 {dimension_numbers = #tpu.dot_dimension_numbers<[1], [0], [0], [1], [0, 0, 1, 1], [], []>} : vector<50x50xf32>, vector<50x64xf32>, vector<50x64xf32> -> vector<50x64xf32>
    %118 = arith.addf %113, %117 : vector<50x64xf32>
    %c3_91 = arith.constant 3 : index
    %c0_92 = arith.constant 0 : index
    %c0_93 = arith.constant 0 : index
    %119 = vector.load %arg1[%c3_91, %c0_92, %c0_93] : memref<9x50x50xf32, #tpu.memory_space<vmem>>, vector<1x50x50xf32>
    %120 = vector.shape_cast %119 : vector<1x50x50xf32> to vector<50x50xf32>
    %121 = vector.extract_strided_slice %104 {offsets = [0, 192], sizes = [50, 64], strides = [1, 1]} : vector<50x576xf32> to vector<50x64xf32>
    %cst_94 = arith.constant dense<0.000000e+00> : vector<50x64xf32>
    %122 = tpu.matmul %120, %121, %cst_94 {dimension_numbers = #tpu.dot_dimension_numbers<[1], [0], [0], [1], [0, 0, 1, 1], [], []>} : vector<50x50xf32>, vector<50x64xf32>, vector<50x64xf32> -> vector<50x64xf32>
    %123 = arith.addf %118, %122 : vector<50x64xf32>
    %c4_95 = arith.constant 4 : index
    %c0_96 = arith.constant 0 : index
    %c0_97 = arith.constant 0 : index
    %124 = vector.load %arg1[%c4_95, %c0_96, %c0_97] : memref<9x50x50xf32, #tpu.memory_space<vmem>>, vector<1x50x50xf32>
    %125 = vector.shape_cast %124 : vector<1x50x50xf32> to vector<50x50xf32>
    %126 = vector.extract_strided_slice %104 {offsets = [0, 256], sizes = [50, 64], strides = [1, 1]} : vector<50x576xf32> to vector<50x64xf32>
    %cst_98 = arith.constant dense<0.000000e+00> : vector<50x64xf32>
    %127 = tpu.matmul %125, %126, %cst_98 {dimension_numbers = #tpu.dot_dimension_numbers<[1], [0], [0], [1], [0, 0, 1, 1], [], []>} : vector<50x50xf32>, vector<50x64xf32>, vector<50x64xf32> -> vector<50x64xf32>
    %128 = arith.addf %123, %127 : vector<50x64xf32>
    %c5_99 = arith.constant 5 : index
    %c0_100 = arith.constant 0 : index
    %c0_101 = arith.constant 0 : index
    %129 = vector.load %arg1[%c5_99, %c0_100, %c0_101] : memref<9x50x50xf32, #tpu.memory_space<vmem>>, vector<1x50x50xf32>
    %130 = vector.shape_cast %129 : vector<1x50x50xf32> to vector<50x50xf32>
    %131 = vector.extract_strided_slice %104 {offsets = [0, 320], sizes = [50, 64], strides = [1, 1]} : vector<50x576xf32> to vector<50x64xf32>
    %cst_102 = arith.constant dense<0.000000e+00> : vector<50x64xf32>
    %132 = tpu.matmul %130, %131, %cst_102 {dimension_numbers = #tpu.dot_dimension_numbers<[1], [0], [0], [1], [0, 0, 1, 1], [], []>} : vector<50x50xf32>, vector<50x64xf32>, vector<50x64xf32> -> vector<50x64xf32>
    %133 = arith.addf %128, %132 : vector<50x64xf32>
    %c6_103 = arith.constant 6 : index
    %c0_104 = arith.constant 0 : index
    %c0_105 = arith.constant 0 : index
    %134 = vector.load %arg1[%c6_103, %c0_104, %c0_105] : memref<9x50x50xf32, #tpu.memory_space<vmem>>, vector<1x50x50xf32>
    %135 = vector.shape_cast %134 : vector<1x50x50xf32> to vector<50x50xf32>
    %136 = vector.extract_strided_slice %104 {offsets = [0, 384], sizes = [50, 64], strides = [1, 1]} : vector<50x576xf32> to vector<50x64xf32>
    %cst_106 = arith.constant dense<0.000000e+00> : vector<50x64xf32>
    %137 = tpu.matmul %135, %136, %cst_106 {dimension_numbers = #tpu.dot_dimension_numbers<[1], [0], [0], [1], [0, 0, 1, 1], [], []>} : vector<50x50xf32>, vector<50x64xf32>, vector<50x64xf32> -> vector<50x64xf32>
    %138 = arith.addf %133, %137 : vector<50x64xf32>
    %c7_107 = arith.constant 7 : index
    %c0_108 = arith.constant 0 : index
    %c0_109 = arith.constant 0 : index
    %139 = vector.load %arg1[%c7_107, %c0_108, %c0_109] : memref<9x50x50xf32, #tpu.memory_space<vmem>>, vector<1x50x50xf32>
    %140 = vector.shape_cast %139 : vector<1x50x50xf32> to vector<50x50xf32>
    %141 = vector.extract_strided_slice %104 {offsets = [0, 448], sizes = [50, 64], strides = [1, 1]} : vector<50x576xf32> to vector<50x64xf32>
    %cst_110 = arith.constant dense<0.000000e+00> : vector<50x64xf32>
    %142 = tpu.matmul %140, %141, %cst_110 {dimension_numbers = #tpu.dot_dimension_numbers<[1], [0], [0], [1], [0, 0, 1, 1], [], []>} : vector<50x50xf32>, vector<50x64xf32>, vector<50x64xf32> -> vector<50x64xf32>
    %143 = arith.addf %138, %142 : vector<50x64xf32>
    %c8_111 = arith.constant 8 : index
    %c0_112 = arith.constant 0 : index
    %c0_113 = arith.constant 0 : index
    %144 = vector.load %arg1[%c8_111, %c0_112, %c0_113] : memref<9x50x50xf32, #tpu.memory_space<vmem>>, vector<1x50x50xf32>
    %145 = vector.shape_cast %144 : vector<1x50x50xf32> to vector<50x50xf32>
    %146 = vector.extract_strided_slice %104 {offsets = [0, 512], sizes = [50, 64], strides = [1, 1]} : vector<50x576xf32> to vector<50x64xf32>
    %cst_114 = arith.constant dense<0.000000e+00> : vector<50x64xf32>
    %147 = tpu.matmul %145, %146, %cst_114 {dimension_numbers = #tpu.dot_dimension_numbers<[1], [0], [0], [1], [0, 0, 1, 1], [], []>} : vector<50x50xf32>, vector<50x64xf32>, vector<50x64xf32> -> vector<50x64xf32>
    %148 = arith.addf %143, %147 : vector<50x64xf32>
    %c0_115 = arith.constant 0 : index
    %c0_116 = arith.constant 0 : index
    %149 = vector.load %arg8[%c0_115, %c0_116] : memref<1x64xf32, #tpu.memory_space<vmem>>, vector<1x64xf32>
    %150 = vector.broadcast %149 : vector<1x64xf32> to vector<50x64xf32>
    %151 = arith.addf %148, %150 : vector<50x64xf32>
    %cst_117 = arith.constant 0.000000e+00 : f32
    %152 = vector.broadcast %cst_117 : f32 to vector<50x64xf32>
    %153 = arith.maximumf %151, %152 : vector<50x64xf32>
    %c0_118 = arith.constant 0 : index
    %c0_119 = arith.constant 0 : index
    %154 = vector.load %arg2[%c0_118, %c0_119] : memref<200x50xf32, #tpu.memory_space<vmem>>, vector<200x50xf32>
    %cst_120 = arith.constant dense<0.000000e+00> : vector<200x64xf32>
    %155 = tpu.matmul %154, %153, %cst_120 {dimension_numbers = #tpu.dot_dimension_numbers<[1], [0], [0], [1], [0, 0, 1, 1], [], []>} : vector<200x50xf32>, vector<50x64xf32>, vector<200x64xf32> -> vector<200x64xf32>
    %156 = vector.extract_strided_slice %155 {offsets = [0, 0], sizes = [8, 64], strides = [1, 1]} : vector<200x64xf32> to vector<8x64xf32>
    %157 = vector.extract_strided_slice %155 {offsets = [8, 0], sizes = [8, 64], strides = [1, 1]} : vector<200x64xf32> to vector<8x64xf32>
    %158 = vector.extract_strided_slice %155 {offsets = [16, 0], sizes = [8, 64], strides = [1, 1]} : vector<200x64xf32> to vector<8x64xf32>
    %159 = vector.extract_strided_slice %155 {offsets = [24, 0], sizes = [8, 64], strides = [1, 1]} : vector<200x64xf32> to vector<8x64xf32>
    %160 = vector.extract_strided_slice %155 {offsets = [32, 0], sizes = [8, 64], strides = [1, 1]} : vector<200x64xf32> to vector<8x64xf32>
    %161 = vector.extract_strided_slice %155 {offsets = [40, 0], sizes = [8, 64], strides = [1, 1]} : vector<200x64xf32> to vector<8x64xf32>
    %162 = vector.extract_strided_slice %155 {offsets = [48, 0], sizes = [8, 64], strides = [1, 1]} : vector<200x64xf32> to vector<8x64xf32>
    %163 = vector.extract_strided_slice %155 {offsets = [56, 0], sizes = [8, 64], strides = [1, 1]} : vector<200x64xf32> to vector<8x64xf32>
    %164 = vector.extract_strided_slice %155 {offsets = [64, 0], sizes = [8, 64], strides = [1, 1]} : vector<200x64xf32> to vector<8x64xf32>
    %165 = vector.extract_strided_slice %155 {offsets = [72, 0], sizes = [8, 64], strides = [1, 1]} : vector<200x64xf32> to vector<8x64xf32>
    %166 = vector.extract_strided_slice %155 {offsets = [80, 0], sizes = [8, 64], strides = [1, 1]} : vector<200x64xf32> to vector<8x64xf32>
    %167 = vector.extract_strided_slice %155 {offsets = [88, 0], sizes = [8, 64], strides = [1, 1]} : vector<200x64xf32> to vector<8x64xf32>
    %168 = vector.extract_strided_slice %155 {offsets = [96, 0], sizes = [8, 64], strides = [1, 1]} : vector<200x64xf32> to vector<8x64xf32>
    %169 = vector.extract_strided_slice %155 {offsets = [104, 0], sizes = [8, 64], strides = [1, 1]} : vector<200x64xf32> to vector<8x64xf32>
    %170 = vector.extract_strided_slice %155 {offsets = [112, 0], sizes = [8, 64], strides = [1, 1]} : vector<200x64xf32> to vector<8x64xf32>
    %171 = vector.extract_strided_slice %155 {offsets = [120, 0], sizes = [8, 64], strides = [1, 1]} : vector<200x64xf32> to vector<8x64xf32>
    %172 = vector.extract_strided_slice %155 {offsets = [128, 0], sizes = [8, 64], strides = [1, 1]} : vector<200x64xf32> to vector<8x64xf32>
    %173 = vector.extract_strided_slice %155 {offsets = [136, 0], sizes = [8, 64], strides = [1, 1]} : vector<200x64xf32> to vector<8x64xf32>
    %174 = vector.extract_strided_slice %155 {offsets = [144, 0], sizes = [8, 64], strides = [1, 1]} : vector<200x64xf32> to vector<8x64xf32>
    %175 = vector.extract_strided_slice %155 {offsets = [152, 0], sizes = [8, 64], strides = [1, 1]} : vector<200x64xf32> to vector<8x64xf32>
    %176 = vector.extract_strided_slice %155 {offsets = [160, 0], sizes = [8, 64], strides = [1, 1]} : vector<200x64xf32> to vector<8x64xf32>
    %177 = vector.extract_strided_slice %155 {offsets = [168, 0], sizes = [8, 64], strides = [1, 1]} : vector<200x64xf32> to vector<8x64xf32>
    %178 = vector.extract_strided_slice %155 {offsets = [176, 0], sizes = [8, 64], strides = [1, 1]} : vector<200x64xf32> to vector<8x64xf32>
    %179 = vector.extract_strided_slice %155 {offsets = [184, 0], sizes = [8, 64], strides = [1, 1]} : vector<200x64xf32> to vector<8x64xf32>
    %180 = vector.extract_strided_slice %155 {offsets = [192, 0], sizes = [8, 64], strides = [1, 1]} : vector<200x64xf32> to vector<8x64xf32>
    %181 = tpu.concatenate %156, %157, %158, %159, %160, %161, %162, %163, %164, %165, %166, %167, %168, %169, %170, %171 in 1 : vector<8x64xf32>, vector<8x64xf32>, vector<8x64xf32>, vector<8x64xf32>, vector<8x64xf32>, vector<8x64xf32>, vector<8x64xf32>, vector<8x64xf32>, vector<8x64xf32>, vector<8x64xf32>, vector<8x64xf32>, vector<8x64xf32>, vector<8x64xf32>, vector<8x64xf32>, vector<8x64xf32>, vector<8x64xf32> -> vector<8x1024xf32>
    %182 = tpu.concatenate %172, %173, %174, %175, %176, %177, %178, %179, %180 in 1 : vector<8x64xf32>, vector<8x64xf32>, vector<8x64xf32>, vector<8x64xf32>, vector<8x64xf32>, vector<8x64xf32>, vector<8x64xf32>, vector<8x64xf32>, vector<8x64xf32> -> vector<8x576xf32>
    %183 = tpu.concatenate %181, %182 in 1 : vector<8x1024xf32>, vector<8x576xf32> -> vector<8x1600xf32>
    %c0_121 = arith.constant 0 : index
    %c0_122 = arith.constant 0 : index
    %184 = vector.load %arg9[%c0_121, %c0_122] : memref<1600x128xf32, #tpu.memory_space<vmem>>, vector<1600x128xf32>
    %cst_123 = arith.constant dense<0.000000e+00> : vector<8x128xf32>
    %185 = tpu.matmul %183, %184, %cst_123 {dimension_numbers = #tpu.dot_dimension_numbers<[1], [0], [0], [1], [0, 0, 1, 1], [], []>} : vector<8x1600xf32>, vector<1600x128xf32>, vector<8x128xf32> -> vector<8x128xf32>
    %c0_124 = arith.constant 0 : index
    %c0_125 = arith.constant 0 : index
    %186 = vector.load %arg10[%c0_124, %c0_125] : memref<1x128xf32, #tpu.memory_space<vmem>>, vector<1x128xf32>
    %187 = vector.broadcast %186 : vector<1x128xf32> to vector<8x128xf32>
    %188 = arith.addf %185, %187 : vector<8x128xf32>
    %cst_126 = arith.constant 0.000000e+00 : f32
    %189 = vector.broadcast %cst_126 : f32 to vector<8x128xf32>
    %190 = arith.maximumf %188, %189 : vector<8x128xf32>
    %c0_127 = arith.constant 0 : index
    %c0_128 = arith.constant 0 : index
    %191 = vector.load %arg11[%c0_127, %c0_128] : memref<128x128xf32, #tpu.memory_space<vmem>>, vector<128x128xf32>
    %cst_129 = arith.constant dense<0.000000e+00> : vector<8x128xf32>
    %192 = tpu.matmul %190, %191, %cst_129 {dimension_numbers = #tpu.dot_dimension_numbers<[1], [0], [0], [1], [0, 0, 1, 1], [], []>} : vector<8x128xf32>, vector<128x128xf32>, vector<8x128xf32> -> vector<8x128xf32>
    %c0_130 = arith.constant 0 : index
    %c0_131 = arith.constant 0 : index
    %193 = vector.load %arg12[%c0_130, %c0_131] : memref<1x128xf32, #tpu.memory_space<vmem>>, vector<1x128xf32>
    %194 = vector.broadcast %193 : vector<1x128xf32> to vector<8x128xf32>
    %195 = arith.addf %192, %194 : vector<8x128xf32>
    %cst_132 = arith.constant 0.000000e+00 : f32
    %196 = vector.broadcast %cst_132 : f32 to vector<8x128xf32>
    %197 = arith.maximumf %195, %196 : vector<8x128xf32>
    %c0_133 = arith.constant 0 : index
    %c0_134 = arith.constant 0 : index
    %198 = vector.load %arg13[%c0_133, %c0_134] : memref<128x128xf32, #tpu.memory_space<vmem>>, vector<128x128xf32>
    %cst_135 = arith.constant dense<0.000000e+00> : vector<8x128xf32>
    %199 = tpu.matmul %197, %198, %cst_135 {dimension_numbers = #tpu.dot_dimension_numbers<[1], [0], [0], [1], [0, 0, 1, 1], [], []>} : vector<8x128xf32>, vector<128x128xf32>, vector<8x128xf32> -> vector<8x128xf32>
    %c0_136 = arith.constant 0 : index
    %c0_137 = arith.constant 0 : index
    %200 = vector.load %arg14[%c0_136, %c0_137] : memref<1x128xf32, #tpu.memory_space<vmem>>, vector<1x128xf32>
    %201 = vector.broadcast %200 : vector<1x128xf32> to vector<8x128xf32>
    %202 = arith.addf %199, %201 : vector<8x128xf32>
    %c0_138 = arith.constant 0 : index
    %c0_139 = arith.constant 0 : index
    %203 = vector.load %arg15[%c0_138, %c0_139] : memref<8x128xf32, #tpu.memory_space<vmem>>, vector<8x128xf32>
    tpu.vector_store %arg15[%c0_138, %c0_139], %202 {strides = array<i32>} : memref<8x128xf32, #tpu.memory_space<vmem>>, vector<8x128xf32>,
    return
  }
}

</mosaic_0001>

<llo_original>
// kernel: network_forward.1
$region0: #{network_forward.1}
  #allocation0 [shape = 'u32[]', space=smem, size = 0x4, offset = 0x4, fixed_abs, tag = 'smem constant byte address 0x4 - core index']
  #allocation1 [shape = 'u32[144,128]{1,0:T(1,128)}', space=vmem, size = 0x12000, scoped, tag = 'internal scratch']
  %s0 = inlined_call_operand.vmem [shape: f32[50,8], index: 0, kind: input, shape index: {}]
  %s1 = inlined_call_operand.vmem [shape: f32[9,50,50], index: 1, kind: input, shape index: {}]
  %s2 = inlined_call_operand.vmem [shape: f32[200,50], index: 2, kind: input, shape index: {}]
  %s3 = inlined_call_operand.vmem [shape: f32[8,288], index: 3, kind: input, shape index: {}]
  %s4 = inlined_call_operand.vmem [shape: f32[1,32], index: 4, kind: input, shape index: {}]
  %s5 = inlined_call_operand.hbm [shape: f32[32,576], index: 5, kind: input, shape index: {}]
  %s6 = inlined_call_operand.vmem [shape: f32[1,64], index: 6, kind: input, shape index: {}]
  %s7 = inlined_call_operand.hbm [shape: f32[64,576], index: 7, kind: input, shape index: {}]
  %s8 = inlined_call_operand.vmem [shape: f32[1,64], index: 8, kind: input, shape index: {}]
  %s9 = inlined_call_operand.hbm [shape: f32[1600,128], index: 9, kind: input, shape index: {}]
  %s10 = inlined_call_operand.vmem [shape: f32[1,128], index: 10, kind: input, shape index: {}]
  %s11 = inlined_call_operand.hbm [shape: f32[128,128], index: 11, kind: input, shape index: {}]
  %s12 = inlined_call_operand.vmem [shape: f32[1,128], index: 12, kind: input, shape index: {}]
  %s13 = inlined_call_operand.hbm [shape: f32[128,128], index: 13, kind: input, shape index: {}]
  %s14 = inlined_call_operand.vmem [shape: f32[1,128], index: 14, kind: input, shape index: {}]
  %s15 = inlined_call_operand.vmem [shape: f32[8,128], index: 15, kind: output, shape index: {}]
  %s16 = sld [smem:[#allocation0]]
  $region90: #{network_forward.1} parent=0
    _
  %s18 = ssub.s32 1, %s16
  %s19 = scalar_select 0, %s18, %s16
  $region1: #{network_forward.1} parent=0
    #allocation2 [shape = 'u8[81920]{0}', space=vmem, size = 0x14000, scoped, tag = 'input window, operand 5, single buffered']
    #allocation3 [shape = 's32[1]{0}', space=sflag, size = 0x4, scoped, tag = 'scoped memory for network_forward.1']
    #allocation4 [shape = 'u8[163840]{0}', space=vmem, size = 0x28000, scoped, tag = 'input window, operand 7, single buffered']
    #allocation5 [shape = 's32[1]{0}', space=sflag, size = 0x4, scoped, tag = 'scoped memory for network_forward.1']
    #allocation6 [shape = 'u8[819200]{0}', space=vmem, size = 0xc8000, scoped, tag = 'input window, operand 9, single buffered']
    #allocation7 [shape = 'u8[65536]{0}', space=vmem, size = 0x10000, scoped, tag = 'input window, operand 11, single buffered']
    #allocation8 [shape = 's32[1]{0}', space=sflag, size = 0x4, scoped, tag = 'scoped memory for network_forward.1']
    #allocation9 [shape = 'u8[65536]{0}', space=vmem, size = 0x10000, scoped, tag = 'input window, operand 13, single buffered']
    %20 = vsyncpa [#allocation3], 0
    %21 = vsyncpa [#allocation5], 0
    %22 = vsyncpa [#allocation8], 0
    // Predicated region
    $region2: #{network_forward.1} parent=1 // pred_check
      _
    $region3: #{network_forward.1} parent=1 // pred_check_branch
      %24 = sbr.rel (0) target = $region5
    $region4: #{network_forward.1} parent=1 // pred_region
      _
    $region5: #{network_forward.1} parent=1 // pred_fallthru
      _
    // Predicated region
    $region6: #{network_forward.1} parent=1 // pred_check
      _
    $region7: #{network_forward.1} parent=1 // pred_check_branch
      %26 = sbr.rel (0) target = $region9
    $region8: #{network_forward.1} parent=1 // pred_region
      _
    $region9: #{network_forward.1} parent=1 // pred_fallthru
      _
    // Predicated region
    $region10: #{network_forward.1} parent=1 // pred_check
      _
    $region11: #{network_forward.1} parent=1 // pred_check_branch
      %28 = sbr.rel (0) target = $region13
    $region12: #{network_forward.1} parent=1 // pred_region
      _
    $region13: #{network_forward.1} parent=1 // pred_fallthru
      _
    // Predicated region
    $region14: #{network_forward.1} parent=1 // pred_check
      _
    $region15: #{network_forward.1} parent=1 // pred_check_branch
      %30 = sbr.rel (0) target = $region17
    $region16: #{network_forward.1} parent=1 // pred_region
      _
    $region17: #{network_forward.1} parent=1 // pred_fallthru
      _
    // Predicated region
    $region18: #{network_forward.1} parent=1 // pred_check
      _
    $region19: #{network_forward.1} parent=1 // pred_check_branch
      %32 = sbr.rel (0) target = $region21
    $region20: #{network_forward.1} parent=1 // pred_region
      _
    $region21: #{network_forward.1} parent=1 // pred_fallthru
      _
    // Predicated region
    $region22: #{network_forward.1} parent=1 // pred_check
      _
    $region23: #{network_forward.1} parent=1 // pred_check_branch
      %34 = sbr.rel (0) target = $region25
    $region24: #{network_forward.1} parent=1 // pred_region
      %s36 = ssub.s32 2560, 2560
      %37 = vsyncadd [#allocation3], %s36
      %s38 = sshll.u32 [#allocation2], 4
      %s39 = int_to_ptr.vmem [resolvable:$true] %s38
      %44 = dma.hbm_to_vmem [thread:$0]  %s5, 2560, %s39, [#allocation3], 640, 640, 40
    $region25: #{network_forward.1} parent=1 // pred_fallthru
      _
    // Predicated region
    $region26: #{network_forward.1} parent=1 // pred_check
      _
    $region27: #{network_forward.1} parent=1 // pred_check_branch
      %46 = sbr.rel (0) target = $region29
    $region28: #{network_forward.1} parent=1 // pred_region
      _
    $region29: #{network_forward.1} parent=1 // pred_fallthru
      _
    // Predicated region
    $region30: #{network_forward.1} parent=1 // pred_check
      _
    $region31: #{network_forward.1} parent=1 // pred_check_branch
      %48 = sbr.rel (0) target = $region33
    $region32: #{network_forward.1} parent=1 // pred_region
      %s50 = ssub.s32 5120, 5120
      %51 = vsyncadd [#allocation5], %s50
      %s52 = sshll.u32 [#allocation4], 4
      %s53 = int_to_ptr.vmem [resolvable:$true] %s52
      %58 = dma.hbm_to_vmem [thread:$0]  %s7, 5120, %s53, [#allocation5], 640, 640, 40
    $region33: #{network_forward.1} parent=1 // pred_fallthru
      _
    // Predicated region
    $region34: #{network_forward.1} parent=1 // pred_check
      _
    $region35: #{network_forward.1} parent=1 // pred_check_branch
      %60 = sbr.rel (0) target = $region37
    $region36: #{network_forward.1} parent=1 // pred_region
      _
    $region37: #{network_forward.1} parent=1 // pred_fallthru
      _
    // Predicated region
    $region38: #{network_forward.1} parent=1 // pred_check
      _
    $region39: #{network_forward.1} parent=1 // pred_check_branch
      %62 = sbr.rel (0) target = $region41
    $region40: #{network_forward.1} parent=1 // pred_region
      %s64 = ssub.s32 25600, 25600
      %65 = vsyncadd [#allocation5], %s64
      %s66 = sshll.u32 [#allocation6], 4
      %s67 = int_to_ptr.vmem [resolvable:$true] %s66
      %72 = dma.hbm_to_vmem [thread:$0]  %s9, 25600, %s67, [#allocation5], 128, 128, 8
    $region41: #{network_forward.1} parent=1 // pred_fallthru
      _
    // Predicated region
    $region42: #{network_forward.1} parent=1 // pred_check
      _
    $region43: #{network_forward.1} parent=1 // pred_check_branch
      %74 = sbr.rel (0) target = $region45
    $region44: #{network_forward.1} parent=1 // pred_region
      _
    $region45: #{network_forward.1} parent=1 // pred_fallthru
      _
    // Predicated region
    $region46: #{network_forward.1} parent=1 // pred_check
      _
    $region47: #{network_forward.1} parent=1 // pred_check_branch
      %76 = sbr.rel (0) target = $region49
    $region48: #{network_forward.1} parent=1 // pred_region
      %s78 = ssub.s32 2048, 2048
      %79 = vsyncadd [#allocation8], %s78
      %s80 = sshll.u32 [#allocation7], 4
      %s81 = int_to_ptr.vmem [resolvable:$true] %s80
      %86 = dma.hbm_to_vmem [thread:$0]  %s11, 2048, %s81, [#allocation8], 128, 128, 8
    $region49: #{network_forward.1} parent=1 // pred_fallthru
      _
    // Predicated region
    $region50: #{network_forward.1} parent=1 // pred_check
      _
    $region51: #{network_forward.1} parent=1 // pred_check_branch
      %88 = sbr.rel (0) target = $region53
    $region52: #{network_forward.1} parent=1 // pred_region
      _
    $region53: #{network_forward.1} parent=1 // pred_fallthru
      _
    // Predicated region
    $region54: #{network_forward.1} parent=1 // pred_check
      _
    $region55: #{network_forward.1} parent=1 // pred_check_branch
      %90 = sbr.rel (0) target = $region57
    $region56: #{network_forward.1} parent=1 // pred_region
      %s92 = ssub.s32 2048, 2048
      %93 = vsyncadd [#allocation8], %s92
      %s94 = sshll.u32 [#allocation9], 4
      %s95 = int_to_ptr.vmem [resolvable:$true] %s94
      %100 = dma.hbm_to_vmem [thread:$0]  %s13, 2048, %s95, [#allocation8], 128, 128, 8
    $region57: #{network_forward.1} parent=1 // pred_fallthru
      _
    // Predicated region
    $region58: #{network_forward.1} parent=1 // pred_check
      _
    $region59: #{network_forward.1} parent=1 // pred_check_branch
      %102 = sbr.rel (0) target = $region61
    $region60: #{network_forward.1} parent=1 // pred_region
      _
    $region61: #{network_forward.1} parent=1 // pred_fallthru
      _
    // Predicated region
    $region62: #{network_forward.1} parent=1 // pred_check
      _
    $region63: #{network_forward.1} parent=1 // pred_check_branch
      %104 = sbr.rel (0) target = $region65
    $region64: #{network_forward.1} parent=1 // pred_region
      %105 = dma.done [#allocation3], 2560
    $region65: #{network_forward.1} parent=1 // pred_fallthru
      _
    // Predicated region
    $region66: #{network_forward.1} parent=1 // pred_check
      _
    $region67: #{network_forward.1} parent=1 // pred_check_branch
      %107 = sbr.rel (0) target = $region69
    $region68: #{network_forward.1} parent=1 // pred_region
      %108 = dma.done [#allocation5], 5120
    $region69: #{network_forward.1} parent=1 // pred_fallthru
      _
    // Predicated region
    $region70: #{network_forward.1} parent=1 // pred_check
      _
    $region71: #{network_forward.1} parent=1 // pred_check_branch
      %110 = sbr.rel (0) target = $region73
    $region72: #{network_forward.1} parent=1 // pred_region
      %111 = dma.done [#allocation5], 25600
    $region73: #{network_forward.1} parent=1 // pred_fallthru
      _
    // Predicated region
    $region74: #{network_forward.1} parent=1 // pred_check
      _
    $region75: #{network_forward.1} parent=1 // pred_check_branch
      %113 = sbr.rel (0) target = $region77
    $region76: #{network_forward.1} parent=1 // pred_region
      %114 = dma.done [#allocation8], 2048
    $region77: #{network_forward.1} parent=1 // pred_fallthru
      _
    // Predicated region
    $region78: #{network_forward.1} parent=1 // pred_check
      _
    $region79: #{network_forward.1} parent=1 // pred_check_branch
      %116 = sbr.rel (0) target = $region81
    $region80: #{network_forward.1} parent=1 // pred_region
      %117 = dma.done [#allocation8], 2048
    $region81: #{network_forward.1} parent=1 // pred_fallthru
      _
    %v118 = vld [vmem:[%s0] sm:$0xff]
    %v119 = vld [vmem:[%s0 + $0x8] sm:$0xff]
    %v120 = vld [vmem:[%s0 + $0x10] sm:$0xff]
    %v121 = vld [vmem:[%s0 + $0x18] sm:$0xff]
    %v122 = vld [vmem:[%s0 + $0x20] sm:$0xff]
    %v123 = vld [vmem:[%s0 + $0x28] sm:$0xff]
    %v124 = vld [vmem:[%s0 + $0x30] sm:$0x3]
    %v125 = vld [vmem:[%s3] sm:$0xff]
    %v126 = vld [vmem:[%s3 + $0x8] sm:$0xff]
    %v127 = vld [vmem:[%s3 + $0x10] sm:$0xff]
    %vm128 = vcmask 64512
    %v130 = vsel %vm128, %v118, 0
    %v133 = vsel %vm128, %v119, 0
    %v136 = vsel %vm128, %v120, 0
    %v139 = vsel %vm128, %v121, 0
    %v142 = vsel %vm128, %v122, 0
    %v145 = vsel %vm128, %v123, 0
    %v148 = vsel %vm128, %v124, 0
    %150 = vmatprep.subr.mxu0 0.0
    %151 = vmatpush1.msra.mxu0 0.0
    %152 = vmatprep.subr.mxu0 0.0
    %153 = vmatpush1.msra.mxu0 0.0
    %154 = vmatprep.subr.mxu0 0.0
    %155 = vmatpush1.msra.mxu0 0.0
    %156 = vmatprep.subr.mxu0 0.0
    %157 = vmatpush1.msra.mxu0 0.0
    %158 = vmatprep.subr.mxu0 0.0
    %159 = vmatpush1.msra.mxu0 0.0
    %160 = vmatprep.subr.mxu0 0.0
    %161 = vmatpush1.msra.mxu0 0.0
    %162 = vmatprep.subr.mxu0 0.0
    %163 = vmatpush1.msra.mxu0 0.0
    %164 = vmatprep.subr.mxu0 0.0
    %165 = vmatpush1.msra.mxu0 0.0
    %166 = vmatprep.subr.mxu0 0.0
    %167 = vmatpush1.msra.mxu0 0.0
    %168 = vmatprep.subr.mxu0 0.0
    %169 = vmatpush1.msra.mxu0 0.0
    %170 = vmatprep.subr.mxu0 0.0
    %171 = vmatpush1.msra.mxu0 0.0
    %172 = vmatprep.subr.mxu0 0.0
    %173 = vmatpush1.msra.mxu0 0.0
    %174 = vmatprep.subr.mxu0 0.0
    %175 = vmatpush1.msra.mxu0 0.0
    %176 = vmatprep.subr.mxu0 0.0
    %177 = vmatpush1.msra.mxu0 0.0
    %178 = vmatprep.subr.mxu0 0.0
    %179 = vmatpush1.msra.mxu0 0.0
    %180 = vmatprep.subr.mxu0 %v126
    %181 = vmatpush1.msra.mxu0 %v125
    %182 = vmatprep.subr.mxu0 0.0
    %183 = vmatpush2.msra.mxu0 0.0
    %184 = vmatprep.subr.mxu0 0.0
    %185 = vmatpush2.msra.mxu0 0.0
    %186 = vmatprep.subr.mxu0 0.0
    %187 = vmatpush2.msra.mxu0 0.0
    %188 = vmatprep.subr.mxu0 0.0
    %189 = vmatpush2.msra.mxu0 0.0
    %190 = vmatprep.subr.mxu0 0.0
    %191 = vmatpush2.msra.mxu0 0.0
    %192 = vmatprep.subr.mxu0 0.0
    %193 = vmatpush2.msra.mxu0 0.0
    %194 = vmatprep.subr.mxu0 0.0
    %195 = vmatpush2.msra.mxu0 0.0
    %196 = vmatprep.subr.mxu0 0.0
    %197 = vmatpush2.msra.mxu0 0.0
    %198 = vmatprep.subr.mxu0 0.0
    %199 = vmatpush2.msra.mxu0 0.0
    %200 = vmatprep.subr.mxu0 0.0
    %201 = vmatpush2.msra.mxu0 0.0
    %202 = vmatprep.subr.mxu0 0.0
    %203 = vmatpush2.msra.mxu0 0.0
    %204 = vmatprep.subr.mxu0 0.0
    %205 = vmatpush2.msra.mxu0 0.0
    %206 = vmatprep.subr.mxu0 0.0
    %207 = vmatpush2.msra.mxu0 0.0
    %208 = vmatprep.subr.mxu0 0.0
    %209 = vmatpush2.msra.mxu0 0.0
    %210 = vmatprep.subr.mxu0 0.0
    %211 = vmatpush2.msra.mxu0 0.0
    %212 = vmatprep.subr.mxu0 0.0
    %213 = vmatpush2.msra.mxu0 0.0
    %214 = vmatprep.mubr.f32.mxu0 0.0
    %215 = vmatmul.mubr.f32.gmra.mxu0 %v130
    %v216 = vpop.f32.mrf.mxu0
    %v217 = vadd.f32 0.0, %v216
    %v218 = vpop.f32.mrf.mxu0
    %v219 = vadd.f32 0.0, %v218
    %220 = vmatprep.mubr.f32.mxu0 0.0
    %221 = vmatmul.mubr.f32.gmra.mxu0 %v133
    %v222 = vpop.f32.mrf.mxu0
    %v223 = vadd.f32 0.0, %v222
    %v224 = vpop.f32.mrf.mxu0
    %v225 = vadd.f32 0.0, %v224
    %226 = vmatprep.mubr.f32.mxu0 0.0
    %227 = vmatmul.mubr.f32.gmra.mxu0 %v136
    %v228 = vpop.f32.mrf.mxu0
    %v229 = vadd.f32 0.0, %v228
    %v230 = vpop.f32.mrf.mxu0
    %v231 = vadd.f32 0.0, %v230
    %232 = vmatprep.mubr.f32.mxu0 0.0
    %233 = vmatmul.mubr.f32.gmra.mxu0 %v139
    %v234 = vpop.f32.mrf.mxu0
    %v235 = vadd.f32 0.0, %v234
    %v236 = vpop.f32.mrf.mxu0
    %v237 = vadd.f32 0.0, %v236
    %238 = vmatprep.mubr.f32.mxu0 0.0
    %239 = vmatmul.mubr.f32.gmra.mxu0 %v142
    %v240 = vpop.f32.mrf.mxu0
    %v241 = vadd.f32 0.0, %v240
    %v242 = vpop.f32.mrf.mxu0
    %v243 = vadd.f32 0.0, %v242
    %244 = vmatprep.mubr.f32.mxu0 0.0
    %245 = vmatmul.mubr.f32.gmra.mxu0 %v145
    %v246 = vpop.f32.mrf.mxu0
    %v247 = vadd.f32 0.0, %v246
    %v248 = vpop.f32.mrf.mxu0
    %v249 = vadd.f32 0.0, %v248
    %250 = vmatprep.mubr.f32.mxu0 0.0
    %251 = vmatmul.mubr.f32.gmra.mxu0 %v148
    %v252 = vpop.f32.mrf.mxu0
    %v253 = vadd.f32 0.0, %v252
    %v254 = vpop.f32.mrf.mxu0
    %v255 = vadd.f32 0.0, %v254
    %256 = vdwg.mxu0
    %257 = vmatprep.subr.mxu0 0.0
    %258 = vmatpush1.msra.mxu0 0.0
    %259 = vmatprep.subr.mxu0 0.0
    %260 = vmatpush1.msra.mxu0 0.0
    %261 = vmatprep.subr.mxu0 0.0
    %262 = vmatpush1.msra.mxu0 0.0
    %263 = vmatprep.subr.mxu0 0.0
    %264 = vmatpush1.msra.mxu0 0.0
    %265 = vmatprep.subr.mxu0 0.0
    %266 = vmatpush1.msra.mxu0 0.0
    %267 = vmatprep.subr.mxu0 0.0
    %268 = vmatpush1.msra.mxu0 0.0
    %269 = vmatprep.subr.mxu0 0.0
    %270 = vmatpush1.msra.mxu0 0.0
    %271 = vmatprep.subr.mxu0 0.0
    %272 = vmatpush1.msra.mxu0 0.0
    %273 = vmatprep.subr.mxu0 0.0
    %274 = vmatpush1.msra.mxu0 0.0
    %275 = vmatprep.subr.mxu0 0.0
    %276 = vmatpush1.msra.mxu0 0.0
    %277 = vmatprep.subr.mxu0 0.0
    %278 = vmatpush1.msra.mxu0 0.0
    %279 = vmatprep.subr.mxu0 0.0
    %280 = vmatpush1.msra.mxu0 0.0
    %281 = vmatprep.subr.mxu0 0.0
    %282 = vmatpush1.msra.mxu0 0.0
    %283 = vmatprep.subr.mxu0 0.0
    %284 = vmatpush1.msra.mxu0 0.0
    %285 = vmatprep.subr.mxu0 0.0
    %286 = vmatpush1.msra.mxu0 0.0
    %287 = vmatprep.subr.mxu0 0.0
    %288 = vmatpush1.msra.mxu0 %v127
    %289 = vmatprep.subr.mxu0 0.0
    %290 = vmatpush2.msra.mxu0 0.0
    %291 = vmatprep.subr.mxu0 0.0
    %292 = vmatpush2.msra.mxu0 0.0
    %293 = vmatprep.subr.mxu0 0.0
    %294 = vmatpush2.msra.mxu0 0.0
    %295 = vmatprep.subr.mxu0 0.0
    %296 = vmatpush2.msra.mxu0 0.0
    %297 = vmatprep.subr.mxu0 0.0
    %298 = vmatpush2.msra.mxu0 0.0
    %299 = vmatprep.subr.mxu0 0.0
    %300 = vmatpush2.msra.mxu0 0.0
    %301 = vmatprep.subr.mxu0 0.0
    %302 = vmatpush2.msra.mxu0 0.0
    %303 = vmatprep.subr.mxu0 0.0
    %304 = vmatpush2.msra.mxu0 0.0
    %305 = vmatprep.subr.mxu0 0.0
    %306 = vmatpush2.msra.mxu0 0.0
    %307 = vmatprep.subr.mxu0 0.0
    %308 = vmatpush2.msra.mxu0 0.0
    %309 = vmatprep.subr.mxu0 0.0
    %310 = vmatpush2.msra.mxu0 0.0
    %311 = vmatprep.subr.mxu0 0.0
    %312 = vmatpush2.msra.mxu0 0.0
    %313 = vmatprep.subr.mxu0 0.0
    %314 = vmatpush2.msra.mxu0 0.0
    %315 = vmatprep.subr.mxu0 0.0
    %316 = vmatpush2.msra.mxu0 0.0
    %317 = vmatprep.subr.mxu0 0.0
    %318 = vmatpush2.msra.mxu0 0.0
    %319 = vmatprep.subr.mxu0 0.0
    %320 = vmatpush2.msra.mxu0 0.0
    %321 = vmatprep.mubr.f32.mxu0 0.0
    %322 = vmatmul.mubr.f32.gmra.mxu0 %v130
    %v323 = vpop.f32.mrf.mxu0
    %v324 = vadd.f32 0.0, %v323
    %v325 = vpop.f32.mrf.mxu0
    %326 = vmatprep.mubr.f32.mxu0 0.0
    %327 = vmatmul.mubr.f32.gmra.mxu0 %v133
    %v328 = vpop.f32.mrf.mxu0
    %v329 = vadd.f32 0.0, %v328
    %v330 = vpop.f32.mrf.mxu0
    %331 = vmatprep.mubr.f32.mxu0 0.0
    %332 = vmatmul.mubr.f32.gmra.mxu0 %v136
    %v333 = vpop.f32.mrf.mxu0
    %v334 = vadd.f32 0.0, %v333
    %v335 = vpop.f32.mrf.mxu0
    %336 = vmatprep.mubr.f32.mxu0 0.0
    %337 = vmatmul.mubr.f32.gmra.mxu0 %v139
    %v338 = vpop.f32.mrf.mxu0
    %v339 = vadd.f32 0.0, %v338
    %v340 = vpop.f32.mrf.mxu0
    %341 = vmatprep.mubr.f32.mxu0 0.0
    %342 = vmatmul.mubr.f32.gmra.mxu0 %v142
    %v343 = vpop.f32.mrf.mxu0
    %v344 = vadd.f32 0.0, %v343
    %v345 = vpop.f32.mrf.mxu0
    %346 = vmatprep.mubr.f32.mxu0 0.0
    %347 = vmatmul.mubr.f32.gmra.mxu0 %v145
    %v348 = vpop.f32.mrf.mxu0
    %v349 = vadd.f32 0.0, %v348
    %v350 = vpop.f32.mrf.mxu0
    %351 = vmatprep.mubr.f32.mxu0 0.0
    %352 = vmatmul.mubr.f32.gmra.mxu0 %v148
    %v353 = vpop.f32.mrf.mxu0
    %v354 = vadd.f32 0.0, %v353
    %v355 = vpop.f32.mrf.mxu0
    %356 = vdwg.mxu0
    %v357 = vld [vmem:[%s1] sm:$0xff]
    %v358 = vld [vmem:[%s1 + $0x8] sm:$0xff]
    %v359 = vld [vmem:[%s1 + $0x10] sm:$0xff]
    %v360 = vld [vmem:[%s1 + $0x18] sm:$0xff]
    %v361 = vld [vmem:[%s1 + $0x20] sm:$0xff]
    %v362 = vld [vmem:[%s1 + $0x28] sm:$0xff]
    %v363 = vld [vmem:[%s1 + $0x30] sm:$0x3]
    %s364 = scalar_lea.vmem %s1, 56
    %v365 = vld [vmem:[%s364] sm:$0xff]
    %v366 = vld [vmem:[%s364 + $0x8] sm:$0xff]
    %v367 = vld [vmem:[%s364 + $0x10] sm:$0xff]
    %v368 = vld [vmem:[%s364 + $0x18] sm:$0xff]
    %v369 = vld [vmem:[%s364 + $0x20] sm:$0xff]
    %v370 = vld [vmem:[%s364 + $0x28] sm:$0xff]
    %v371 = vld [vmem:[%s364 + $0x30] sm:$0x3]
    %379 = vrot.lane.b32.xlu0 %v217, 96
    %v380 = vpop.permute.xlu0 %379
    %381 = vrot.lane.b32.xlu0 %v223, 96
    %v382 = vpop.permute.xlu0 %381
    %383 = vrot.lane.b32.xlu0 %v229, 96
    %v384 = vpop.permute.xlu0 %383
    %385 = vrot.lane.b32.xlu0 %v235, 96
    %v386 = vpop.permute.xlu0 %385
    %387 = vrot.lane.b32.xlu0 %v241, 96
    %v388 = vpop.permute.xlu0 %387
    %389 = vrot.lane.b32.xlu0 %v247, 96
    %v390 = vpop.permute.xlu0 %389
    %391 = vrot.lane.b32.xlu0 %v253, 96
    %v392 = vpop.permute.xlu0 %391
    %vm399 = vcmask 408576
    %v401 = vsel %vm399, %v365, 0
    %v404 = vsel %vm399, %v366, 0
    %v407 = vsel %vm399, %v367, 0
    %v410 = vsel %vm399, %v368, 0
    %v413 = vsel %vm399, %v369, 0
    %v416 = vsel %vm399, %v370, 0
    %v419 = vsel %vm399, %v371, 0
    %vm421 = vcmask 1041408
    %v422 = vsel %vm421, %v392, 0
    %424 = vmatprep.subr.mxu0 0.0
    %425 = vmatpush1.msra.mxu0 0.0
    %426 = vmatprep.subr.mxu0 0.0
    %427 = vmatpush1.msra.mxu0 0.0
    %428 = vmatprep.subr.mxu0 0.0
    %429 = vmatpush1.msra.mxu0 0.0
    %430 = vmatprep.subr.mxu0 0.0
    %431 = vmatpush1.msra.mxu0 0.0
    %432 = vmatprep.subr.mxu0 0.0
    %433 = vmatpush1.msra.mxu0 0.0
    %434 = vmatprep.subr.mxu0 0.0
    %435 = vmatpush1.msra.mxu0 0.0
    %436 = vmatprep.subr.mxu0 0.0
    %437 = vmatpush1.msra.mxu0 0.0
    %438 = vmatprep.subr.mxu0 0.0
    %439 = vmatpush1.msra.mxu0 0.0
    %440 = vmatprep.subr.mxu0 0.0
    %441 = vmatpush1.msra.mxu0 0.0
    %442 = vmatprep.subr.mxu0 0.0
    %443 = vmatpush1.msra.mxu0 %v422
    %444 = vmatprep.subr.mxu0 0.0
    %445 = vmatpush1.msra.mxu0 %v390
    %446 = vmatprep.subr.mxu0 0.0
    %447 = vmatpush1.msra.mxu0 %v388
    %448 = vmatprep.subr.mxu0 0.0
    %449 = vmatpush1.msra.mxu0 %v386
    %450 = vmatprep.subr.mxu0 0.0
    %451 = vmatpush1.msra.mxu0 %v384
    %452 = vmatprep.subr.mxu0 0.0
    %453 = vmatpush1.msra.mxu0 %v382
    %454 = vmatprep.subr.mxu0 0.0
    %455 = vmatpush1.msra.mxu0 %v380
    %456 = vmatprep.subr.mxu0 0.0
    %457 = vmatpush2.msra.mxu0 0.0
    %458 = vmatprep.subr.mxu0 0.0
    %459 = vmatpush2.msra.mxu0 0.0
    %460 = vmatprep.subr.mxu0 0.0
    %461 = vmatpush2.msra.mxu0 0.0
    %462 = vmatprep.subr.mxu0 0.0
    %463 = vmatpush2.msra.mxu0 0.0
    %464 = vmatprep.subr.mxu0 0.0
    %465 = vmatpush2.msra.mxu0 0.0
    %466 = vmatprep.subr.mxu0 0.0
    %467 = vmatpush2.msra.mxu0 0.0
    %468 = vmatprep.subr.mxu0 0.0
    %469 = vmatpush2.msra.mxu0 0.0
    %470 = vmatprep.subr.mxu0 0.0
    %471 = vmatpush2.msra.mxu0 0.0
    %472 = vmatprep.subr.mxu0 0.0
    %473 = vmatpush2.msra.mxu0 0.0
    %474 = vmatprep.subr.mxu0 0.0
    %475 = vmatpush2.msra.mxu0 0.0
    %476 = vmatprep.subr.mxu0 0.0
    %477 = vmatpush2.msra.mxu0 0.0
    %478 = vmatprep.subr.mxu0 0.0
    %479 = vmatpush2.msra.mxu0 0.0
    %480 = vmatprep.subr.mxu0 0.0
    %481 = vmatpush2.msra.mxu0 0.0
    %482 = vmatprep.subr.mxu0 0.0
    %483 = vmatpush2.msra.mxu0 0.0
    %484 = vmatprep.subr.mxu0 0.0
    %485 = vmatpush2.msra.mxu0 0.0
    %486 = vmatprep.subr.mxu0 0.0
    %487 = vmatpush2.msra.mxu0 0.0
    %488 = vmatprep.mubr.f32.mxu0 0.0
    %489 = vmatmul.mubr.f32.gmra.mxu0 %v401
    %v490 = vpop.f32.mrf.mxu0
    %v491 = vadd.f32 0.0, %v490
    %v492 = vpop.f32.mrf.mxu0
    %493 = vmatprep.mubr.f32.mxu0 0.0
    %494 = vmatmul.mubr.f32.gmra.mxu0 %v404
    %v495 = vpop.f32.mrf.mxu0
    %v496 = vadd.f32 0.0, %v495
    %v497 = vpop.f32.mrf.mxu0
    %498 = vmatprep.mubr.f32.mxu0 0.0
    %499 = vmatmul.mubr.f32.gmra.mxu0 %v407
    %v500 = vpop.f32.mrf.mxu0
    %v501 = vadd.f32 0.0, %v500
    %v502 = vpop.f32.mrf.mxu0
    %503 = vmatprep.mubr.f32.mxu0 0.0
    %504 = vmatmul.mubr.f32.gmra.mxu0 %v410
    %v505 = vpop.f32.mrf.mxu0
    %v506 = vadd.f32 0.0, %v505
    %v507 = vpop.f32.mrf.mxu0
    %508 = vmatprep.mubr.f32.mxu0 0.0
    %509 = vmatmul.mubr.f32.gmra.mxu0 %v413
    %v510 = vpop.f32.mrf.mxu0
    %v511 = vadd.f32 0.0, %v510
    %v512 = vpop.f32.mrf.mxu0
    %513 = vmatprep.mubr.f32.mxu0 0.0
    %514 = vmatmul.mubr.f32.gmra.mxu0 %v416
    %v515 = vpop.f32.mrf.mxu0
    %v516 = vadd.f32 0.0, %v515
    %v517 = vpop.f32.mrf.mxu0
    %518 = vmatprep.mubr.f32.mxu0 0.0
    %519 = vmatmul.mubr.f32.gmra.mxu0 %v419
    %v520 = vpop.f32.mrf.mxu0
    %v521 = vadd.f32 0.0, %v520
    %v522 = vpop.f32.mrf.mxu0
    %523 = vdwg.mxu0
    %v525 = vsel %vm399, %v357, 0
    %v528 = vsel %vm399, %v358, 0
    %v531 = vsel %vm399, %v359, 0
    %v534 = vsel %vm399, %v360, 0
    %v537 = vsel %vm399, %v361, 0
    %v540 = vsel %vm399, %v362, 0
    %v543 = vsel %vm399, %v363, 0
    %v545 = vsel %vm421, %v253, 0
    %547 = vmatprep.subr.mxu0 0.0
    %548 = vmatpush1.msra.mxu0 0.0
    %549 = vmatprep.subr.mxu0 0.0
    %550 = vmatpush1.msra.mxu0 0.0
    %551 = vmatprep.subr.mxu0 0.0
    %552 = vmatpush1.msra.mxu0 0.0
    %553 = vmatprep.subr.mxu0 0.0
    %554 = vmatpush1.msra.mxu0 0.0
    %555 = vmatprep.subr.mxu0 0.0
    %556 = vmatpush1.msra.mxu0 0.0
    %557 = vmatprep.subr.mxu0 0.0
    %558 = vmatpush1.msra.mxu0 0.0
    %559 = vmatprep.subr.mxu0 0.0
    %560 = vmatpush1.msra.mxu0 0.0
    %561 = vmatprep.subr.mxu0 0.0
    %562 = vmatpush1.msra.mxu0 0.0
    %563 = vmatprep.subr.mxu0 0.0
    %564 = vmatpush1.msra.mxu0 0.0
    %565 = vmatprep.subr.mxu0 0.0
    %566 = vmatpush1.msra.mxu0 %v545
    %567 = vmatprep.subr.mxu0 0.0
    %568 = vmatpush1.msra.mxu0 %v247
    %569 = vmatprep.subr.mxu0 0.0
    %570 = vmatpush1.msra.mxu0 %v241
    %571 = vmatprep.subr.mxu0 0.0
    %572 = vmatpush1.msra.mxu0 %v235
    %573 = vmatprep.subr.mxu0 0.0
    %574 = vmatpush1.msra.mxu0 %v229
    %575 = vmatprep.subr.mxu0 0.0
    %576 = vmatpush1.msra.mxu0 %v223
    %577 = vmatprep.subr.mxu0 0.0
    %578 = vmatpush1.msra.mxu0 %v217
    %579 = vmatprep.subr.mxu0 0.0
    %580 = vmatpush2.msra.mxu0 0.0
    %581 = vmatprep.subr.mxu0 0.0
    %582 = vmatpush2.msra.mxu0 0.0
    %583 = vmatprep.subr.mxu0 0.0
    %584 = vmatpush2.msra.mxu0 0.0
    %585 = vmatprep.subr.mxu0 0.0
    %586 = vmatpush2.msra.mxu0 0.0
    %587 = vmatprep.subr.mxu0 0.0
    %588 = vmatpush2.msra.mxu0 0.0
    %589 = vmatprep.subr.mxu0 0.0
    %590 = vmatpush2.msra.mxu0 0.0
    %591 = vmatprep.subr.mxu0 0.0
    %592 = vmatpush2.msra.mxu0 0.0
    %593 = vmatprep.subr.mxu0 0.0
    %594 = vmatpush2.msra.mxu0 0.0
    %595 = vmatprep.subr.mxu0 0.0
    %596 = vmatpush2.msra.mxu0 0.0
    %597 = vmatprep.subr.mxu0 0.0
    %598 = vmatpush2.msra.mxu0 0.0
    %599 = vmatprep.subr.mxu0 0.0
    %600 = vmatpush2.msra.mxu0 0.0
    %601 = vmatprep.subr.mxu0 0.0
    %602 = vmatpush2.msra.mxu0 0.0
    %603 = vmatprep.subr.mxu0 0.0
    %604 = vmatpush2.msra.mxu0 0.0
    %605 = vmatprep.subr.mxu0 0.0
    %606 = vmatpush2.msra.mxu0 0.0
    %607 = vmatprep.subr.mxu0 0.0
    %608 = vmatpush2.msra.mxu0 0.0
    %609 = vmatprep.subr.mxu0 0.0
    %610 = vmatpush2.msra.mxu0 0.0
    %611 = vmatprep.mubr.f32.mxu0 0.0
    %612 = vmatmul.mubr.f32.gmra.mxu0 %v525
    %v613 = vpop.f32.mrf.mxu0
    %v614 = vadd.f32 %v491, %v613
    %v615 = vpop.f32.mrf.mxu0
    %616 = vmatprep.mubr.f32.mxu0 0.0
    %617 = vmatmul.mubr.f32.gmra.mxu0 %v528
    %v618 = vpop.f32.mrf.mxu0
    %v619 = vadd.f32 %v496, %v618
    %v620 = vpop.f32.mrf.mxu0
    %621 = vmatprep.mubr.f32.mxu0 0.0
    %622 = vmatmul.mubr.f32.gmra.mxu0 %v531
    %v623 = vpop.f32.mrf.mxu0
    %v624 = vadd.f32 %v501, %v623
    %v625 = vpop.f32.mrf.mxu0
    %626 = vmatprep.mubr.f32.mxu0 0.0
    %627 = vmatmul.mubr.f32.gmra.mxu0 %v534
    %v628 = vpop.f32.mrf.mxu0
    %v629 = vadd.f32 %v506, %v628
    %v630 = vpop.f32.mrf.mxu0
    %631 = vmatprep.mubr.f32.mxu0 0.0
    %632 = vmatmul.mubr.f32.gmra.mxu0 %v537
    %v633 = vpop.f32.mrf.mxu0
    %v634 = vadd.f32 %v511, %v633
    %v635 = vpop.f32.mrf.mxu0
    %636 = vmatprep.mubr.f32.mxu0 0.0
    %637 = vmatmul.mubr.f32.gmra.mxu0 %v540
    %v638 = vpop.f32.mrf.mxu0
    %v639 = vadd.f32 %v516, %v638
    %v640 = vpop.f32.mrf.mxu0
    %641 = vmatprep.mubr.f32.mxu0 0.0
    %642 = vmatmul.mubr.f32.gmra.mxu0 %v543
    %v643 = vpop.f32.mrf.mxu0
    %v644 = vadd.f32 %v521, %v643
    %v645 = vpop.f32.mrf.mxu0
    %646 = vdwg.mxu0
    %s647 = scalar_lea.vmem %s1, 112
    %v648 = vld [vmem:[%s647] sm:$0xff]
    %v649 = vld [vmem:[%s647 + $0x8] sm:$0xff]
    %v650 = vld [vmem:[%s647 + $0x10] sm:$0xff]
    %v651 = vld [vmem:[%s647 + $0x18] sm:$0xff]
    %v652 = vld [vmem:[%s647 + $0x20] sm:$0xff]
    %v653 = vld [vmem:[%s647 + $0x28] sm:$0xff]
    %v654 = vld [vmem:[%s647 + $0x30] sm:$0x3]
    %655 = vrot.lane.b32.xlu0 %v217, 64
    %v656 = vpop.permute.xlu0 %655
    %657 = vrot.lane.b32.xlu0 %v223, 64
    %v658 = vpop.permute.xlu0 %657
    %659 = vrot.lane.b32.xlu0 %v229, 64
    %v660 = vpop.permute.xlu0 %659
    %661 = vrot.lane.b32.xlu0 %v235, 64
    %v662 = vpop.permute.xlu0 %661
    %663 = vrot.lane.b32.xlu0 %v241, 64
    %v664 = vpop.permute.xlu0 %663
    %665 = vrot.lane.b32.xlu0 %v247, 64
    %v666 = vpop.permute.xlu0 %665
    %667 = vrot.lane.b32.xlu0 %v253, 64
    %v668 = vpop.permute.xlu0 %667
    %v676 = vsel %vm399, %v648, 0
    %v679 = vsel %vm399, %v649, 0
    %v682 = vsel %vm399, %v650, 0
    %v685 = vsel %vm399, %v651, 0
    %v688 = vsel %vm399, %v652, 0
    %v691 = vsel %vm399, %v653, 0
    %v694 = vsel %vm399, %v654, 0
    %v696 = vsel %vm421, %v668, 0
    %698 = vmatprep.subr.mxu0 0.0
    %699 = vmatpush1.msra.mxu0 0.0
    %700 = vmatprep.subr.mxu0 0.0
    %701 = vmatpush1.msra.mxu0 0.0
    %702 = vmatprep.subr.mxu0 0.0
    %703 = vmatpush1.msra.mxu0 0.0
    %704 = vmatprep.subr.mxu0 0.0
    %705 = vmatpush1.msra.mxu0 0.0
    %706 = vmatprep.subr.mxu0 0.0
    %707 = vmatpush1.msra.mxu0 0.0
    %708 = vmatprep.subr.mxu0 0.0
    %709 = vmatpush1.msra.mxu0 0.0
    %710 = vmatprep.subr.mxu0 0.0
    %711 = vmatpush1.msra.mxu0 0.0
    %712 = vmatprep.subr.mxu0 0.0
    %713 = vmatpush1.msra.mxu0 0.0
    %714 = vmatprep.subr.mxu0 0.0
    %715 = vmatpush1.msra.mxu0 0.0
    %716 = vmatprep.subr.mxu0 0.0
    %717 = vmatpush1.msra.mxu0 %v696
    %718 = vmatprep.subr.mxu0 0.0
    %719 = vmatpush1.msra.mxu0 %v666
    %720 = vmatprep.subr.mxu0 0.0
    %721 = vmatpush1.msra.mxu0 %v664
    %722 = vmatprep.subr.mxu0 0.0
    %723 = vmatpush1.msra.mxu0 %v662
    %724 = vmatprep.subr.mxu0 0.0
    %725 = vmatpush1.msra.mxu0 %v660
    %726 = vmatprep.subr.mxu0 0.0
    %727 = vmatpush1.msra.mxu0 %v658
    %728 = vmatprep.subr.mxu0 0.0
    %729 = vmatpush1.msra.mxu0 %v656
    %730 = vmatprep.subr.mxu0 0.0
    %731 = vmatpush2.msra.mxu0 0.0
    %732 = vmatprep.subr.mxu0 0.0
    %733 = vmatpush2.msra.mxu0 0.0
    %734 = vmatprep.subr.mxu0 0.0
    %735 = vmatpush2.msra.mxu0 0.0
    %736 = vmatprep.subr.mxu0 0.0
    %737 = vmatpush2.msra.mxu0 0.0
    %738 = vmatprep.subr.mxu0 0.0
    %739 = vmatpush2.msra.mxu0 0.0
    %740 = vmatprep.subr.mxu0 0.0
    %741 = vmatpush2.msra.mxu0 0.0
    %742 = vmatprep.subr.mxu0 0.0
    %743 = vmatpush2.msra.mxu0 0.0
    %744 = vmatprep.subr.mxu0 0.0
    %745 = vmatpush2.msra.mxu0 0.0
    %746 = vmatprep.subr.mxu0 0.0
    %747 = vmatpush2.msra.mxu0 0.0
    %748 = vmatprep.subr.mxu0 0.0
    %749 = vmatpush2.msra.mxu0 0.0
    %750 = vmatprep.subr.mxu0 0.0
    %751 = vmatpush2.msra.mxu0 0.0
    %752 = vmatprep.subr.mxu0 0.0
    %753 = vmatpush2.msra.mxu0 0.0
    %754 = vmatprep.subr.mxu0 0.0
    %755 = vmatpush2.msra.mxu0 0.0
    %756 = vmatprep.subr.mxu0 0.0
    %757 = vmatpush2.msra.mxu0 0.0
    %758 = vmatprep.subr.mxu0 0.0
    %759 = vmatpush2.msra.mxu0 0.0
    %760 = vmatprep.subr.mxu0 0.0
    %761 = vmatpush2.msra.mxu0 0.0
    %762 = vmatprep.mubr.f32.mxu0 0.0
    %763 = vmatmul.mubr.f32.gmra.mxu0 %v676
    %v764 = vpop.f32.mrf.mxu0
    %v765 = vadd.f32 0.0, %v764
    %v766 = vpop.f32.mrf.mxu0
    %767 = vmatprep.mubr.f32.mxu0 0.0
    %768 = vmatmul.mubr.f32.gmra.mxu0 %v679
    %v769 = vpop.f32.mrf.mxu0
    %v770 = vadd.f32 0.0, %v769
    %v771 = vpop.f32.mrf.mxu0
    %772 = vmatprep.mubr.f32.mxu0 0.0
    %773 = vmatmul.mubr.f32.gmra.mxu0 %v682
    %v774 = vpop.f32.mrf.mxu0
    %v775 = vadd.f32 0.0, %v774
    %v776 = vpop.f32.mrf.mxu0
    %777 = vmatprep.mubr.f32.mxu0 0.0
    %778 = vmatmul.mubr.f32.gmra.mxu0 %v685
    %v779 = vpop.f32.mrf.mxu0
    %v780 = vadd.f32 0.0, %v779
    %v781 = vpop.f32.mrf.mxu0
    %782 = vmatprep.mubr.f32.mxu0 0.0
    %783 = vmatmul.mubr.f32.gmra.mxu0 %v688
    %v784 = vpop.f32.mrf.mxu0
    %v785 = vadd.f32 0.0, %v784
    %v786 = vpop.f32.mrf.mxu0
    %787 = vmatprep.mubr.f32.mxu0 0.0
    %788 = vmatmul.mubr.f32.gmra.mxu0 %v691
    %v789 = vpop.f32.mrf.mxu0
    %v790 = vadd.f32 0.0, %v789
    %v791 = vpop.f32.mrf.mxu0
    %792 = vmatprep.mubr.f32.mxu0 0.0
    %793 = vmatmul.mubr.f32.gmra.mxu0 %v694
    %v794 = vpop.f32.mrf.mxu0
    %v795 = vadd.f32 0.0, %v794
    %v796 = vpop.f32.mrf.mxu0
    %797 = vdwg.mxu0
    %v798 = vadd.f32 %v614, %v765
    %v799 = vadd.f32 %v619, %v770
    %v800 = vadd.f32 %v624, %v775
    %v801 = vadd.f32 %v629, %v780
    %v802 = vadd.f32 %v634, %v785
    %v803 = vadd.f32 %v639, %v790
    %v804 = vadd.f32 %v644, %v795
    %s805 = scalar_lea.vmem %s1, 168
    %v806 = vld [vmem:[%s805] sm:$0xff]
    %v807 = vld [vmem:[%s805 + $0x8] sm:$0xff]
    %v808 = vld [vmem:[%s805 + $0x10] sm:$0xff]
    %v809 = vld [vmem:[%s805 + $0x18] sm:$0xff]
    %v810 = vld [vmem:[%s805 + $0x20] sm:$0xff]
    %v811 = vld [vmem:[%s805 + $0x28] sm:$0xff]
    %v812 = vld [vmem:[%s805 + $0x30] sm:$0x3]
    %813 = vrot.lane.b32.xlu0 %v217, 32
    %v814 = vpop.permute.xlu0 %813
    %815 = vrot.lane.b32.xlu0 %v223, 32
    %v816 = vpop.permute.xlu0 %815
    %817 = vrot.lane.b32.xlu0 %v229, 32
    %v818 = vpop.permute.xlu0 %817
    %819 = vrot.lane.b32.xlu0 %v235, 32
    %v820 = vpop.permute.xlu0 %819
    %821 = vrot.lane.b32.xlu0 %v241, 32
    %v822 = vpop.permute.xlu0 %821
    %823 = vrot.lane.b32.xlu0 %v247, 32
    %v824 = vpop.permute.xlu0 %823
    %825 = vrot.lane.b32.xlu0 %v253, 32
    %v826 = vpop.permute.xlu0 %825
    %v834 = vsel %vm399, %v806, 0
    %v837 = vsel %vm399, %v807, 0
    %v840 = vsel %vm399, %v808, 0
    %v843 = vsel %vm399, %v809, 0
    %v846 = vsel %vm399, %v810, 0
    %v849 = vsel %vm399, %v811, 0
    %v852 = vsel %vm399, %v812, 0
    %v854 = vsel %vm421, %v826, 0
    %856 = vmatprep.subr.mxu0 0.0
    %857 = vmatpush1.msra.mxu0 0.0
    %858 = vmatprep.subr.mxu0 0.0
    %859 = vmatpush1.msra.mxu0 0.0
    %860 = vmatprep.subr.mxu0 0.0
    %861 = vmatpush1.msra.mxu0 0.0
    %862 = vmatprep.subr.mxu0 0.0
    %863 = vmatpush1.msra.mxu0 0.0
    %864 = vmatprep.subr.mxu0 0.0
    %865 = vmatpush1.msra.mxu0 0.0
    %866 = vmatprep.subr.mxu0 0.0
    %867 = vmatpush1.msra.mxu0 0.0
    %868 = vmatprep.subr.mxu0 0.0
    %869 = vmatpush1.msra.mxu0 0.0
    %870 = vmatprep.subr.mxu0 0.0
    %871 = vmatpush1.msra.mxu0 0.0
    %872 = vmatprep.subr.mxu0 0.0
    %873 = vmatpush1.msra.mxu0 0.0
    %874 = vmatprep.subr.mxu0 0.0
    %875 = vmatpush1.msra.mxu0 %v854
    %876 = vmatprep.subr.mxu0 0.0
    %877 = vmatpush1.msra.mxu0 %v824
    %878 = vmatprep.subr.mxu0 0.0
    %879 = vmatpush1.msra.mxu0 %v822
    %880 = vmatprep.subr.mxu0 0.0
    %881 = vmatpush1.msra.mxu0 %v820
    %882 = vmatprep.subr.mxu0 0.0
    %883 = vmatpush1.msra.mxu0 %v818
    %884 = vmatprep.subr.mxu0 0.0
    %885 = vmatpush1.msra.mxu0 %v816
    %886 = vmatprep.subr.mxu0 0.0
    %887 = vmatpush1.msra.mxu0 %v814
    %888 = vmatprep.subr.mxu0 0.0
    %889 = vmatpush2.msra.mxu0 0.0
    %890 = vmatprep.subr.mxu0 0.0
    %891 = vmatpush2.msra.mxu0 0.0
    %892 = vmatprep.subr.mxu0 0.0
    %893 = vmatpush2.msra.mxu0 0.0
    %894 = vmatprep.subr.mxu0 0.0
    %895 = vmatpush2.msra.mxu0 0.0
    %896 = vmatprep.subr.mxu0 0.0
    %897 = vmatpush2.msra.mxu0 0.0
    %898 = vmatprep.subr.mxu0 0.0
    %899 = vmatpush2.msra.mxu0 0.0
    %900 = vmatprep.subr.mxu0 0.0
    %901 = vmatpush2.msra.mxu0 0.0
    %902 = vmatprep.subr.mxu0 0.0
    %903 = vmatpush2.msra.mxu0 0.0
    %904 = vmatprep.subr.mxu0 0.0
    %905 = vmatpush2.msra.mxu0 0.0
    %906 = vmatprep.subr.mxu0 0.0
    %907 = vmatpush2.msra.mxu0 0.0
    %908 = vmatprep.subr.mxu0 0.0
    %909 = vmatpush2.msra.mxu0 0.0
    %910 = vmatprep.subr.mxu0 0.0
    %911 = vmatpush2.msra.mxu0 0.0
    %912 = vmatprep.subr.mxu0 0.0
    %913 = vmatpush2.msra.mxu0 0.0
    %914 = vmatprep.subr.mxu0 0.0
    %915 = vmatpush2.msra.mxu0 0.0
    %916 = vmatprep.subr.mxu0 0.0
    %917 = vmatpush2.msra.mxu0 0.0
    %918 = vmatprep.subr.mxu0 0.0
    %919 = vmatpush2.msra.mxu0 0.0
    %920 = vmatprep.mubr.f32.mxu0 0.0
    %921 = vmatmul.mubr.f32.gmra.mxu0 %v834
    %v922 = vpop.f32.mrf.mxu0
    %v923 = vadd.f32 0.0, %v922
    %v924 = vpop.f32.mrf.mxu0
    %925 = vmatprep.mubr.f32.mxu0 0.0
    %926 = vmatmul.mubr.f32.gmra.mxu0 %v837
    %v927 = vpop.f32.mrf.mxu0
    %v928 = vadd.f32 0.0, %v927
    %v929 = vpop.f32.mrf.mxu0
    %930 = vmatprep.mubr.f32.mxu0 0.0
    %931 = vmatmul.mubr.f32.gmra.mxu0 %v840
    %v932 = vpop.f32.mrf.mxu0
    %v933 = vadd.f32 0.0, %v932
    %v934 = vpop.f32.mrf.mxu0
    %935 = vmatprep.mubr.f32.mxu0 0.0
    %936 = vmatmul.mubr.f32.gmra.mxu0 %v843
    %v937 = vpop.f32.mrf.mxu0
    %v938 = vadd.f32 0.0, %v937
    %v939 = vpop.f32.mrf.mxu0
    %940 = vmatprep.mubr.f32.mxu0 0.0
    %941 = vmatmul.mubr.f32.gmra.mxu0 %v846
    %v942 = vpop.f32.mrf.mxu0
    %v943 = vadd.f32 0.0, %v942
    %v944 = vpop.f32.mrf.mxu0
    %945 = vmatprep.mubr.f32.mxu0 0.0
    %946 = vmatmul.mubr.f32.gmra.mxu0 %v849
    %v947 = vpop.f32.mrf.mxu0
    %v948 = vadd.f32 0.0, %v947
    %v949 = vpop.f32.mrf.mxu0
    %950 = vmatprep.mubr.f32.mxu0 0.0
    %951 = vmatmul.mubr.f32.gmra.mxu0 %v852
    %v952 = vpop.f32.mrf.mxu0
    %v953 = vadd.f32 0.0, %v952
    %v954 = vpop.f32.mrf.mxu0
    %955 = vdwg.mxu0
    %v956 = vadd.f32 %v798, %v923
    %v957 = vadd.f32 %v799, %v928
    %v958 = vadd.f32 %v800, %v933
    %v959 = vadd.f32 %v801, %v938
    %v960 = vadd.f32 %v802, %v943
    %v961 = vadd.f32 %v803, %v948
    %v962 = vadd.f32 %v804, %v953
    %s963 = scalar_lea.vmem %s1, 224
    %v964 = vld [vmem:[%s963] sm:$0xff]
    %v965 = vld [vmem:[%s963 + $0x8] sm:$0xff]
    %v966 = vld [vmem:[%s963 + $0x10] sm:$0xff]
    %v967 = vld [vmem:[%s963 + $0x18] sm:$0xff]
    %v968 = vld [vmem:[%s963 + $0x20] sm:$0xff]
    %v969 = vld [vmem:[%s963 + $0x28] sm:$0xff]
    %v970 = vld [vmem:[%s963 + $0x30] sm:$0x3]
    %v972 = vsel %vm399, %v964, 0
    %v975 = vsel %vm399, %v965, 0
    %v978 = vsel %vm399, %v966, 0
    %v981 = vsel %vm399, %v967, 0
    %v984 = vsel %vm399, %v968, 0
    %v987 = vsel %vm399, %v969, 0
    %v990 = vsel %vm399, %v970, 0
    %v993 = vsel %vm421, %v255, 0
    %995 = vmatprep.subr.mxu0 0.0
    %996 = vmatpush1.msra.mxu0 0.0
    %997 = vmatprep.subr.mxu0 0.0
    %998 = vmatpush1.msra.mxu0 0.0
    %999 = vmatprep.subr.mxu0 0.0
    %1000 = vmatpush1.msra.mxu0 0.0
    %1001 = vmatprep.subr.mxu0 0.0
    %1002 = vmatpush1.msra.mxu0 0.0
    %1003 = vmatprep.subr.mxu0 0.0
    %1004 = vmatpush1.msra.mxu0 0.0
    %1005 = vmatprep.subr.mxu0 0.0
    %1006 = vmatpush1.msra.mxu0 0.0
    %1007 = vmatprep.subr.mxu0 0.0
    %1008 = vmatpush1.msra.mxu0 0.0
    %1009 = vmatprep.subr.mxu0 0.0
    %1010 = vmatpush1.msra.mxu0 0.0
    %1011 = vmatprep.subr.mxu0 0.0
    %1012 = vmatpush1.msra.mxu0 0.0
    %1013 = vmatprep.subr.mxu0 0.0
    %1014 = vmatpush1.msra.mxu0 %v993
    %1015 = vmatprep.subr.mxu0 0.0
    %1016 = vmatpush1.msra.mxu0 %v249
    %1017 = vmatprep.subr.mxu0 0.0
    %1018 = vmatpush1.msra.mxu0 %v243
    %1019 = vmatprep.subr.mxu0 0.0
    %1020 = vmatpush1.msra.mxu0 %v237
    %1021 = vmatprep.subr.mxu0 0.0
    %1022 = vmatpush1.msra.mxu0 %v231
    %1023 = vmatprep.subr.mxu0 0.0
    %1024 = vmatpush1.msra.mxu0 %v225
    %1025 = vmatprep.subr.mxu0 0.0
    %1026 = vmatpush1.msra.mxu0 %v219
    %1027 = vmatprep.subr.mxu0 0.0
    %1028 = vmatpush2.msra.mxu0 0.0
    %1029 = vmatprep.subr.mxu0 0.0
    %1030 = vmatpush2.msra.mxu0 0.0
    %1031 = vmatprep.subr.mxu0 0.0
    %1032 = vmatpush2.msra.mxu0 0.0
    %1033 = vmatprep.subr.mxu0 0.0
    %1034 = vmatpush2.msra.mxu0 0.0
    %1035 = vmatprep.subr.mxu0 0.0
    %1036 = vmatpush2.msra.mxu0 0.0
    %1037 = vmatprep.subr.mxu0 0.0
    %1038 = vmatpush2.msra.mxu0 0.0
    %1039 = vmatprep.subr.mxu0 0.0
    %1040 = vmatpush2.msra.mxu0 0.0
    %1041 = vmatprep.subr.mxu0 0.0
    %1042 = vmatpush2.msra.mxu0 0.0
    %1043 = vmatprep.subr.mxu0 0.0
    %1044 = vmatpush2.msra.mxu0 0.0
    %1045 = vmatprep.subr.mxu0 0.0
    %1046 = vmatpush2.msra.mxu0 0.0
    %1047 = vmatprep.subr.mxu0 0.0
    %1048 = vmatpush2.msra.mxu0 0.0
    %1049 = vmatprep.subr.mxu0 0.0
    %1050 = vmatpush2.msra.mxu0 0.0
    %1051 = vmatprep.subr.mxu0 0.0
    %1052 = vmatpush2.msra.mxu0 0.0
    %1053 = vmatprep.subr.mxu0 0.0
    %1054 = vmatpush2.msra.mxu0 0.0
    %1055 = vmatprep.subr.mxu0 0.0
    %1056 = vmatpush2.msra.mxu0 0.0
    %1057 = vmatprep.subr.mxu0 0.0
    %1058 = vmatpush2.msra.mxu0 0.0
    %1059 = vmatprep.mubr.f32.mxu0 0.0
    %1060 = vmatmul.mubr.f32.gmra.mxu0 %v972
    %v1061 = vpop.f32.mrf.mxu0
    %v1062 = vadd.f32 0.0, %v1061
    %v1063 = vpop.f32.mrf.mxu0
    %1064 = vmatprep.mubr.f32.mxu0 0.0
    %1065 = vmatmul.mubr.f32.gmra.mxu0 %v975
    %v1066 = vpop.f32.mrf.mxu0
    %v1067 = vadd.f32 0.0, %v1066
    %v1068 = vpop.f32.mrf.mxu0
    %1069 = vmatprep.mubr.f32.mxu0 0.0
    %1070 = vmatmul.mubr.f32.gmra.mxu0 %v978
    %v1071 = vpop.f32.mrf.mxu0
    %v1072 = vadd.f32 0.0, %v1071
    %v1073 = vpop.f32.mrf.mxu0
    %1074 = vmatprep.mubr.f32.mxu0 0.0
    %1075 = vmatmul.mubr.f32.gmra.mxu0 %v981
    %v1076 = vpop.f32.mrf.mxu0
    %v1077 = vadd.f32 0.0, %v1076
    %v1078 = vpop.f32.mrf.mxu0
    %1079 = vmatprep.mubr.f32.mxu0 0.0
    %1080 = vmatmul.mubr.f32.gmra.mxu0 %v984
    %v1081 = vpop.f32.mrf.mxu0
    %v1082 = vadd.f32 0.0, %v1081
    %v1083 = vpop.f32.mrf.mxu0
    %1084 = vmatprep.mubr.f32.mxu0 0.0
    %1085 = vmatmul.mubr.f32.gmra.mxu0 %v987
    %v1086 = vpop.f32.mrf.mxu0
    %v1087 = vadd.f32 0.0, %v1086
    %v1088 = vpop.f32.mrf.mxu0
    %1089 = vmatprep.mubr.f32.mxu0 0.0
    %1090 = vmatmul.mubr.f32.gmra.mxu0 %v990
    %v1091 = vpop.f32.mrf.mxu0
    %v1092 = vadd.f32 0.0, %v1091
    %v1093 = vpop.f32.mrf.mxu0
    %1094 = vdwg.mxu0
    %v1095 = vadd.f32 %v956, %v1062
    %v1096 = vadd.f32 %v957, %v1067
    %v1097 = vadd.f32 %v958, %v1072
    %v1098 = vadd.f32 %v959, %v1077
    %v1099 = vadd.f32 %v960, %v1082
    %v1100 = vadd.f32 %v961, %v1087
    %v1101 = vadd.f32 %v962, %v1092
    %s1102 = scalar_lea.vmem %s1, 280
    %v1103 = vld [vmem:[%s1102] sm:$0xff]
    %v1104 = vld [vmem:[%s1102 + $0x8] sm:$0xff]
    %v1105 = vld [vmem:[%s1102 + $0x10] sm:$0xff]
    %v1106 = vld [vmem:[%s1102 + $0x18] sm:$0xff]
    %v1107 = vld [vmem:[%s1102 + $0x20] sm:$0xff]
    %v1108 = vld [vmem:[%s1102 + $0x28] sm:$0xff]
    %v1109 = vld [vmem:[%s1102 + $0x30] sm:$0x3]
    %1116 = vrot.lane.b32.xlu0 %v219, 96
    %v1117 = vpop.permute.xlu0 %1116
    %1118 = vrot.lane.b32.xlu0 %v225, 96
    %v1119 = vpop.permute.xlu0 %1118
    %1120 = vrot.lane.b32.xlu0 %v231, 96
    %v1121 = vpop.permute.xlu0 %1120
    %1122 = vrot.lane.b32.xlu0 %v237, 96
    %v1123 = vpop.permute.xlu0 %1122
    %1124 = vrot.lane.b32.xlu0 %v243, 96
    %v1125 = vpop.permute.xlu0 %1124
    %1126 = vrot.lane.b32.xlu0 %v249, 96
    %v1127 = vpop.permute.xlu0 %1126
    %1128 = vrot.lane.b32.xlu0 %v255, 96
    %v1129 = vpop.permute.xlu0 %1128
    %v1137 = vsel %vm399, %v1103, 0
    %v1140 = vsel %vm399, %v1104, 0
    %v1143 = vsel %vm399, %v1105, 0
    %v1146 = vsel %vm399, %v1106, 0
    %v1149 = vsel %vm399, %v1107, 0
    %v1152 = vsel %vm399, %v1108, 0
    %v1155 = vsel %vm399, %v1109, 0
    %v1157 = vsel %vm421, %v1129, 0
    %1159 = vmatprep.subr.mxu0 0.0
    %1160 = vmatpush1.msra.mxu0 0.0
    %1161 = vmatprep.subr.mxu0 0.0
    %1162 = vmatpush1.msra.mxu0 0.0
    %1163 = vmatprep.subr.mxu0 0.0
    %1164 = vmatpush1.msra.mxu0 0.0
    %1165 = vmatprep.subr.mxu0 0.0
    %1166 = vmatpush1.msra.mxu0 0.0
    %1167 = vmatprep.subr.mxu0 0.0
    %1168 = vmatpush1.msra.mxu0 0.0
    %1169 = vmatprep.subr.mxu0 0.0
    %1170 = vmatpush1.msra.mxu0 0.0
    %1171 = vmatprep.subr.mxu0 0.0
    %1172 = vmatpush1.msra.mxu0 0.0
    %1173 = vmatprep.subr.mxu0 0.0
    %1174 = vmatpush1.msra.mxu0 0.0
    %1175 = vmatprep.subr.mxu0 0.0
    %1176 = vmatpush1.msra.mxu0 0.0
    %1177 = vmatprep.subr.mxu0 0.0
    %1178 = vmatpush1.msra.mxu0 %v1157
    %1179 = vmatprep.subr.mxu0 0.0
    %1180 = vmatpush1.msra.mxu0 %v1127
    %1181 = vmatprep.subr.mxu0 0.0
    %1182 = vmatpush1.msra.mxu0 %v1125
    %1183 = vmatprep.subr.mxu0 0.0
    %1184 = vmatpush1.msra.mxu0 %v1123
    %1185 = vmatprep.subr.mxu0 0.0
    %1186 = vmatpush1.msra.mxu0 %v1121
    %1187 = vmatprep.subr.mxu0 0.0
    %1188 = vmatpush1.msra.mxu0 %v1119
    %1189 = vmatprep.subr.mxu0 0.0
    %1190 = vmatpush1.msra.mxu0 %v1117
    %1191 = vmatprep.subr.mxu0 0.0
    %1192 = vmatpush2.msra.mxu0 0.0
    %1193 = vmatprep.subr.mxu0 0.0
    %1194 = vmatpush2.msra.mxu0 0.0
    %1195 = vmatprep.subr.mxu0 0.0
    %1196 = vmatpush2.msra.mxu0 0.0
    %1197 = vmatprep.subr.mxu0 0.0
    %1198 = vmatpush2.msra.mxu0 0.0
    %1199 = vmatprep.subr.mxu0 0.0
    %1200 = vmatpush2.msra.mxu0 0.0
    %1201 = vmatprep.subr.mxu0 0.0
    %1202 = vmatpush2.msra.mxu0 0.0
    %1203 = vmatprep.subr.mxu0 0.0
    %1204 = vmatpush2.msra.mxu0 0.0
    %1205 = vmatprep.subr.mxu0 0.0
    %1206 = vmatpush2.msra.mxu0 0.0
    %1207 = vmatprep.subr.mxu0 0.0
    %1208 = vmatpush2.msra.mxu0 0.0
    %1209 = vmatprep.subr.mxu0 0.0
    %1210 = vmatpush2.msra.mxu0 0.0
    %1211 = vmatprep.subr.mxu0 0.0
    %1212 = vmatpush2.msra.mxu0 0.0
    %1213 = vmatprep.subr.mxu0 0.0
    %1214 = vmatpush2.msra.mxu0 0.0
    %1215 = vmatprep.subr.mxu0 0.0
    %1216 = vmatpush2.msra.mxu0 0.0
    %1217 = vmatprep.subr.mxu0 0.0
    %1218 = vmatpush2.msra.mxu0 0.0
    %1219 = vmatprep.subr.mxu0 0.0
    %1220 = vmatpush2.msra.mxu0 0.0
    %1221 = vmatprep.subr.mxu0 0.0
    %1222 = vmatpush2.msra.mxu0 0.0
    %1223 = vmatprep.mubr.f32.mxu0 0.0
    %1224 = vmatmul.mubr.f32.gmra.mxu0 %v1137
    %v1225 = vpop.f32.mrf.mxu0
    %v1226 = vadd.f32 0.0, %v1225
    %v1227 = vpop.f32.mrf.mxu0
    %1228 = vmatprep.mubr.f32.mxu0 0.0
    %1229 = vmatmul.mubr.f32.gmra.mxu0 %v1140
    %v1230 = vpop.f32.mrf.mxu0
    %v1231 = vadd.f32 0.0, %v1230
    %v1232 = vpop.f32.mrf.mxu0
    %1233 = vmatprep.mubr.f32.mxu0 0.0
    %1234 = vmatmul.mubr.f32.gmra.mxu0 %v1143
    %v1235 = vpop.f32.mrf.mxu0
    %v1236 = vadd.f32 0.0, %v1235
    %v1237 = vpop.f32.mrf.mxu0
    %1238 = vmatprep.mubr.f32.mxu0 0.0
    %1239 = vmatmul.mubr.f32.gmra.mxu0 %v1146
    %v1240 = vpop.f32.mrf.mxu0
    %v1241 = vadd.f32 0.0, %v1240
    %v1242 = vpop.f32.mrf.mxu0
    %1243 = vmatprep.mubr.f32.mxu0 0.0
    %1244 = vmatmul.mubr.f32.gmra.mxu0 %v1149
    %v1245 = vpop.f32.mrf.mxu0
    %v1246 = vadd.f32 0.0, %v1245
    %v1247 = vpop.f32.mrf.mxu0
    %1248 = vmatprep.mubr.f32.mxu0 0.0
    %1249 = vmatmul.mubr.f32.gmra.mxu0 %v1152
    %v1250 = vpop.f32.mrf.mxu0
    %v1251 = vadd.f32 0.0, %v1250
    %v1252 = vpop.f32.mrf.mxu0
    %1253 = vmatprep.mubr.f32.mxu0 0.0
    %1254 = vmatmul.mubr.f32.gmra.mxu0 %v1155
    %v1255 = vpop.f32.mrf.mxu0
    %v1256 = vadd.f32 0.0, %v1255
    %v1257 = vpop.f32.mrf.mxu0
    %1258 = vdwg.mxu0
    %v1259 = vadd.f32 %v1095, %v1226
    %v1260 = vadd.f32 %v1096, %v1231
    %v1261 = vadd.f32 %v1097, %v1236
    %v1262 = vadd.f32 %v1098, %v1241
    %v1263 = vadd.f32 %v1099, %v1246
    %v1264 = vadd.f32 %v1100, %v1251
    %v1265 = vadd.f32 %v1101, %v1256
    %s1266 = scalar_lea.vmem %s1, 336
    %v1267 = vld [vmem:[%s1266] sm:$0xff]
    %v1268 = vld [vmem:[%s1266 + $0x8] sm:$0xff]
    %v1269 = vld [vmem:[%s1266 + $0x10] sm:$0xff]
    %v1270 = vld [vmem:[%s1266 + $0x18] sm:$0xff]
    %v1271 = vld [vmem:[%s1266 + $0x20] sm:$0xff]
    %v1272 = vld [vmem:[%s1266 + $0x28] sm:$0xff]
    %v1273 = vld [vmem:[%s1266 + $0x30] sm:$0x3]
    %1274 = vrot.lane.b32.xlu0 %v219, 64
    %v1275 = vpop.permute.xlu0 %1274
    %1276 = vrot.lane.b32.xlu0 %v225, 64
    %v1277 = vpop.permute.xlu0 %1276
    %1278 = vrot.lane.b32.xlu0 %v231, 64
    %v1279 = vpop.permute.xlu0 %1278
    %1280 = vrot.lane.b32.xlu0 %v237, 64
    %v1281 = vpop.permute.xlu0 %1280
    %1282 = vrot.lane.b32.xlu0 %v243, 64
    %v1283 = vpop.permute.xlu0 %1282
    %1284 = vrot.lane.b32.xlu0 %v249, 64
    %v1285 = vpop.permute.xlu0 %1284
    %1286 = vrot.lane.b32.xlu0 %v255, 64
    %v1287 = vpop.permute.xlu0 %1286
    %v1295 = vsel %vm399, %v1267, 0
    %v1298 = vsel %vm399, %v1268, 0
    %v1301 = vsel %vm399, %v1269, 0
    %v1304 = vsel %vm399, %v1270, 0
    %v1307 = vsel %vm399, %v1271, 0
    %v1310 = vsel %vm399, %v1272, 0
    %v1313 = vsel %vm399, %v1273, 0
    %v1315 = vsel %vm421, %v1287, 0
    %1317 = vmatprep.subr.mxu0 0.0
    %1318 = vmatpush1.msra.mxu0 0.0
    %1319 = vmatprep.subr.mxu0 0.0
    %1320 = vmatpush1.msra.mxu0 0.0
    %1321 = vmatprep.subr.mxu0 0.0
    %1322 = vmatpush1.msra.mxu0 0.0
    %1323 = vmatprep.subr.mxu0 0.0
    %1324 = vmatpush1.msra.mxu0 0.0
    %1325 = vmatprep.subr.mxu0 0.0
    %1326 = vmatpush1.msra.mxu0 0.0
    %1327 = vmatprep.subr.mxu0 0.0
    %1328 = vmatpush1.msra.mxu0 0.0
    %1329 = vmatprep.subr.mxu0 0.0
    %1330 = vmatpush1.msra.mxu0 0.0
    %1331 = vmatprep.subr.mxu0 0.0
    %1332 = vmatpush1.msra.mxu0 0.0
    %1333 = vmatprep.subr.mxu0 0.0
    %1334 = vmatpush1.msra.mxu0 0.0
    %1335 = vmatprep.subr.mxu0 0.0
    %1336 = vmatpush1.msra.mxu0 %v1315
    %1337 = vmatprep.subr.mxu0 0.0
    %1338 = vmatpush1.msra.mxu0 %v1285
    %1339 = vmatprep.subr.mxu0 0.0
    %1340 = vmatpush1.msra.mxu0 %v1283
    %1341 = vmatprep.subr.mxu0 0.0
    %1342 = vmatpush1.msra.mxu0 %v1281
    %1343 = vmatprep.subr.mxu0 0.0
    %1344 = vmatpush1.msra.mxu0 %v1279
    %1345 = vmatprep.subr.mxu0 0.0
    %1346 = vmatpush1.msra.mxu0 %v1277
    %1347 = vmatprep.subr.mxu0 0.0
    %1348 = vmatpush1.msra.mxu0 %v1275
    %1349 = vmatprep.subr.mxu0 0.0
    %1350 = vmatpush2.msra.mxu0 0.0
    %1351 = vmatprep.subr.mxu0 0.0
    %1352 = vmatpush2.msra.mxu0 0.0
    %1353 = vmatprep.subr.mxu0 0.0
    %1354 = vmatpush2.msra.mxu0 0.0
    %1355 = vmatprep.subr.mxu0 0.0
    %1356 = vmatpush2.msra.mxu0 0.0
    %1357 = vmatprep.subr.mxu0 0.0
    %1358 = vmatpush2.msra.mxu0 0.0
    %1359 = vmatprep.subr.mxu0 0.0
    %1360 = vmatpush2.msra.mxu0 0.0
    %1361 = vmatprep.subr.mxu0 0.0
    %1362 = vmatpush2.msra.mxu0 0.0
    %1363 = vmatprep.subr.mxu0 0.0
    %1364 = vmatpush2.msra.mxu0 0.0
    %1365 = vmatprep.subr.mxu0 0.0
    %1366 = vmatpush2.msra.mxu0 0.0
    %1367 = vmatprep.subr.mxu0 0.0
    %1368 = vmatpush2.msra.mxu0 0.0
    %1369 = vmatprep.subr.mxu0 0.0
    %1370 = vmatpush2.msra.mxu0 0.0
    %1371 = vmatprep.subr.mxu0 0.0
    %1372 = vmatpush2.msra.mxu0 0.0
    %1373 = vmatprep.subr.mxu0 0.0
    %1374 = vmatpush2.msra.mxu0 0.0
    %1375 = vmatprep.subr.mxu0 0.0
    %1376 = vmatpush2.msra.mxu0 0.0
    %1377 = vmatprep.subr.mxu0 0.0
    %1378 = vmatpush2.msra.mxu0 0.0
    %1379 = vmatprep.subr.mxu0 0.0
    %1380 = vmatpush2.msra.mxu0 0.0
    %1381 = vmatprep.mubr.f32.mxu0 0.0
    %1382 = vmatmul.mubr.f32.gmra.mxu0 %v1295
    %v1383 = vpop.f32.mrf.mxu0
    %v1384 = vadd.f32 0.0, %v1383
    %v1385 = vpop.f32.mrf.mxu0
    %1386 = vmatprep.mubr.f32.mxu0 0.0
    %1387 = vmatmul.mubr.f32.gmra.mxu0 %v1298
    %v1388 = vpop.f32.mrf.mxu0
    %v1389 = vadd.f32 0.0, %v1388
    %v1390 = vpop.f32.mrf.mxu0
    %1391 = vmatprep.mubr.f32.mxu0 0.0
    %1392 = vmatmul.mubr.f32.gmra.mxu0 %v1301
    %v1393 = vpop.f32.mrf.mxu0
    %v1394 = vadd.f32 0.0, %v1393
    %v1395 = vpop.f32.mrf.mxu0
    %1396 = vmatprep.mubr.f32.mxu0 0.0
    %1397 = vmatmul.mubr.f32.gmra.mxu0 %v1304
    %v1398 = vpop.f32.mrf.mxu0
    %v1399 = vadd.f32 0.0, %v1398
    %v1400 = vpop.f32.mrf.mxu0
    %1401 = vmatprep.mubr.f32.mxu0 0.0
    %1402 = vmatmul.mubr.f32.gmra.mxu0 %v1307
    %v1403 = vpop.f32.mrf.mxu0
    %v1404 = vadd.f32 0.0, %v1403
    %v1405 = vpop.f32.mrf.mxu0
    %1406 = vmatprep.mubr.f32.mxu0 0.0
    %1407 = vmatmul.mubr.f32.gmra.mxu0 %v1310
    %v1408 = vpop.f32.mrf.mxu0
    %v1409 = vadd.f32 0.0, %v1408
    %v1410 = vpop.f32.mrf.mxu0
    %1411 = vmatprep.mubr.f32.mxu0 0.0
    %1412 = vmatmul.mubr.f32.gmra.mxu0 %v1313
    %v1413 = vpop.f32.mrf.mxu0
    %v1414 = vadd.f32 0.0, %v1413
    %v1415 = vpop.f32.mrf.mxu0
    %1416 = vdwg.mxu0
    %v1417 = vadd.f32 %v1259, %v1384
    %v1418 = vadd.f32 %v1260, %v1389
    %v1419 = vadd.f32 %v1261, %v1394
    %v1420 = vadd.f32 %v1262, %v1399
    %v1421 = vadd.f32 %v1263, %v1404
    %v1422 = vadd.f32 %v1264, %v1409
    %v1423 = vadd.f32 %v1265, %v1414
    %s1424 = scalar_lea.vmem %s1, 392
    %v1425 = vld [vmem:[%s1424] sm:$0xff]
    %v1426 = vld [vmem:[%s1424 + $0x8] sm:$0xff]
    %v1427 = vld [vmem:[%s1424 + $0x10] sm:$0xff]
    %v1428 = vld [vmem:[%s1424 + $0x18] sm:$0xff]
    %v1429 = vld [vmem:[%s1424 + $0x20] sm:$0xff]
    %v1430 = vld [vmem:[%s1424 + $0x28] sm:$0xff]
    %v1431 = vld [vmem:[%s1424 + $0x30] sm:$0x3]
    %1432 = vrot.lane.b32.xlu0 %v219, 32
    %v1433 = vpop.permute.xlu0 %1432
    %1434 = vrot.lane.b32.xlu0 %v225, 32
    %v1435 = vpop.permute.xlu0 %1434
    %1436 = vrot.lane.b32.xlu0 %v231, 32
    %v1437 = vpop.permute.xlu0 %1436
    %1438 = vrot.lane.b32.xlu0 %v237, 32
    %v1439 = vpop.permute.xlu0 %1438
    %1440 = vrot.lane.b32.xlu0 %v243, 32
    %v1441 = vpop.permute.xlu0 %1440
    %1442 = vrot.lane.b32.xlu0 %v249, 32
    %v1443 = vpop.permute.xlu0 %1442
    %1444 = vrot.lane.b32.xlu0 %v255, 32
    %v1445 = vpop.permute.xlu0 %1444
    %v1453 = vsel %vm399, %v1425, 0
    %v1456 = vsel %vm399, %v1426, 0
    %v1459 = vsel %vm399, %v1427, 0
    %v1462 = vsel %vm399, %v1428, 0
    %v1465 = vsel %vm399, %v1429, 0
    %v1468 = vsel %vm399, %v1430, 0
    %v1471 = vsel %vm399, %v1431, 0
    %v1473 = vsel %vm421, %v1445, 0
    %1475 = vmatprep.subr.mxu0 0.0
    %1476 = vmatpush1.msra.mxu0 0.0
    %1477 = vmatprep.subr.mxu0 0.0
    %1478 = vmatpush1.msra.mxu0 0.0
    %1479 = vmatprep.subr.mxu0 0.0
    %1480 = vmatpush1.msra.mxu0 0.0
    %1481 = vmatprep.subr.mxu0 0.0
    %1482 = vmatpush1.msra.mxu0 0.0
    %1483 = vmatprep.subr.mxu0 0.0
    %1484 = vmatpush1.msra.mxu0 0.0
    %1485 = vmatprep.subr.mxu0 0.0
    %1486 = vmatpush1.msra.mxu0 0.0
    %1487 = vmatprep.subr.mxu0 0.0
    %1488 = vmatpush1.msra.mxu0 0.0
    %1489 = vmatprep.subr.mxu0 0.0
    %1490 = vmatpush1.msra.mxu0 0.0
    %1491 = vmatprep.subr.mxu0 0.0
    %1492 = vmatpush1.msra.mxu0 0.0
    %1493 = vmatprep.subr.mxu0 0.0
    %1494 = vmatpush1.msra.mxu0 %v1473
    %1495 = vmatprep.subr.mxu0 0.0
    %1496 = vmatpush1.msra.mxu0 %v1443
    %1497 = vmatprep.subr.mxu0 0.0
    %1498 = vmatpush1.msra.mxu0 %v1441
    %1499 = vmatprep.subr.mxu0 0.0
    %1500 = vmatpush1.msra.mxu0 %v1439
    %1501 = vmatprep.subr.mxu0 0.0
    %1502 = vmatpush1.msra.mxu0 %v1437
    %1503 = vmatprep.subr.mxu0 0.0
    %1504 = vmatpush1.msra.mxu0 %v1435
    %1505 = vmatprep.subr.mxu0 0.0
    %1506 = vmatpush1.msra.mxu0 %v1433
    %1507 = vmatprep.subr.mxu0 0.0
    %1508 = vmatpush2.msra.mxu0 0.0
    %1509 = vmatprep.subr.mxu0 0.0
    %1510 = vmatpush2.msra.mxu0 0.0
    %1511 = vmatprep.subr.mxu0 0.0
    %1512 = vmatpush2.msra.mxu0 0.0
    %1513 = vmatprep.subr.mxu0 0.0
    %1514 = vmatpush2.msra.mxu0 0.0
    %1515 = vmatprep.subr.mxu0 0.0
    %1516 = vmatpush2.msra.mxu0 0.0
    %1517 = vmatprep.subr.mxu0 0.0
    %1518 = vmatpush2.msra.mxu0 0.0
    %1519 = vmatprep.subr.mxu0 0.0
    %1520 = vmatpush2.msra.mxu0 0.0
    %1521 = vmatprep.subr.mxu0 0.0
    %1522 = vmatpush2.msra.mxu0 0.0
    %1523 = vmatprep.subr.mxu0 0.0
    %1524 = vmatpush2.msra.mxu0 0.0
    %1525 = vmatprep.subr.mxu0 0.0
    %1526 = vmatpush2.msra.mxu0 0.0
    %1527 = vmatprep.subr.mxu0 0.0
    %1528 = vmatpush2.msra.mxu0 0.0
    %1529 = vmatprep.subr.mxu0 0.0
    %1530 = vmatpush2.msra.mxu0 0.0
    %1531 = vmatprep.subr.mxu0 0.0
    %1532 = vmatpush2.msra.mxu0 0.0
    %1533 = vmatprep.subr.mxu0 0.0
    %1534 = vmatpush2.msra.mxu0 0.0
    %1535 = vmatprep.subr.mxu0 0.0
    %1536 = vmatpush2.msra.mxu0 0.0
    %1537 = vmatprep.subr.mxu0 0.0
    %1538 = vmatpush2.msra.mxu0 0.0
    %1539 = vmatprep.mubr.f32.mxu0 0.0
    %1540 = vmatmul.mubr.f32.gmra.mxu0 %v1453
    %v1541 = vpop.f32.mrf.mxu0
    %v1542 = vadd.f32 0.0, %v1541
    %v1543 = vpop.f32.mrf.mxu0
    %1544 = vmatprep.mubr.f32.mxu0 0.0
    %1545 = vmatmul.mubr.f32.gmra.mxu0 %v1456
    %v1546 = vpop.f32.mrf.mxu0
    %v1547 = vadd.f32 0.0, %v1546
    %v1548 = vpop.f32.mrf.mxu0
    %1549 = vmatprep.mubr.f32.mxu0 0.0
    %1550 = vmatmul.mubr.f32.gmra.mxu0 %v1459
    %v1551 = vpop.f32.mrf.mxu0
    %v1552 = vadd.f32 0.0, %v1551
    %v1553 = vpop.f32.mrf.mxu0
    %1554 = vmatprep.mubr.f32.mxu0 0.0
    %1555 = vmatmul.mubr.f32.gmra.mxu0 %v1462
    %v1556 = vpop.f32.mrf.mxu0
    %v1557 = vadd.f32 0.0, %v1556
    %v1558 = vpop.f32.mrf.mxu0
    %1559 = vmatprep.mubr.f32.mxu0 0.0
    %1560 = vmatmul.mubr.f32.gmra.mxu0 %v1465
    %v1561 = vpop.f32.mrf.mxu0
    %v1562 = vadd.f32 0.0, %v1561
    %v1563 = vpop.f32.mrf.mxu0
    %1564 = vmatprep.mubr.f32.mxu0 0.0
    %1565 = vmatmul.mubr.f32.gmra.mxu0 %v1468
    %v1566 = vpop.f32.mrf.mxu0
    %v1567 = vadd.f32 0.0, %v1566
    %v1568 = vpop.f32.mrf.mxu0
    %1569 = vmatprep.mubr.f32.mxu0 0.0
    %1570 = vmatmul.mubr.f32.gmra.mxu0 %v1471
    %v1571 = vpop.f32.mrf.mxu0
    %v1572 = vadd.f32 0.0, %v1571
    %v1573 = vpop.f32.mrf.mxu0
    %1574 = vdwg.mxu0
    %v1575 = vadd.f32 %v1417, %v1542
    %v1576 = vadd.f32 %v1418, %v1547
    %v1577 = vadd.f32 %v1419, %v1552
    %v1578 = vadd.f32 %v1420, %v1557
    %v1579 = vadd.f32 %v1421, %v1562
    %v1580 = vadd.f32 %v1422, %v1567
    %v1581 = vadd.f32 %v1423, %v1572
    %s1582 = scalar_lea.vmem %s1, 448
    %v1583 = vld [vmem:[%s1582] sm:$0xff]
    %v1584 = vld [vmem:[%s1582 + $0x8] sm:$0xff]
    %v1585 = vld [vmem:[%s1582 + $0x10] sm:$0xff]
    %v1586 = vld [vmem:[%s1582 + $0x18] sm:$0xff]
    %v1587 = vld [vmem:[%s1582 + $0x20] sm:$0xff]
    %v1588 = vld [vmem:[%s1582 + $0x28] sm:$0xff]
    %v1589 = vld [vmem:[%s1582 + $0x30] sm:$0x3]
    %v1591 = vsel %vm399, %v1583, 0
    %v1594 = vsel %vm399, %v1584, 0
    %v1597 = vsel %vm399, %v1585, 0
    %v1600 = vsel %vm399, %v1586, 0
    %v1603 = vsel %vm399, %v1587, 0
    %v1606 = vsel %vm399, %v1588, 0
    %v1609 = vsel %vm399, %v1589, 0
    %v1612 = vsel %vm421, %v354, 0
    %1614 = vmatprep.subr.mxu0 0.0
    %1615 = vmatpush1.msra.mxu0 0.0
    %1616 = vmatprep.subr.mxu0 0.0
    %1617 = vmatpush1.msra.mxu0 0.0
    %1618 = vmatprep.subr.mxu0 0.0
    %1619 = vmatpush1.msra.mxu0 0.0
    %1620 = vmatprep.subr.mxu0 0.0
    %1621 = vmatpush1.msra.mxu0 0.0
    %1622 = vmatprep.subr.mxu0 0.0
    %1623 = vmatpush1.msra.mxu0 0.0
    %1624 = vmatprep.subr.mxu0 0.0
    %1625 = vmatpush1.msra.mxu0 0.0
    %1626 = vmatprep.subr.mxu0 0.0
    %1627 = vmatpush1.msra.mxu0 0.0
    %1628 = vmatprep.subr.mxu0 0.0
    %1629 = vmatpush1.msra.mxu0 0.0
    %1630 = vmatprep.subr.mxu0 0.0
    %1631 = vmatpush1.msra.mxu0 0.0
    %1632 = vmatprep.subr.mxu0 0.0
    %1633 = vmatpush1.msra.mxu0 %v1612
    %1634 = vmatprep.subr.mxu0 0.0
    %1635 = vmatpush1.msra.mxu0 %v349
    %1636 = vmatprep.subr.mxu0 0.0
    %1637 = vmatpush1.msra.mxu0 %v344
    %1638 = vmatprep.subr.mxu0 0.0
    %1639 = vmatpush1.msra.mxu0 %v339
    %1640 = vmatprep.subr.mxu0 0.0
    %1641 = vmatpush1.msra.mxu0 %v334
    %1642 = vmatprep.subr.mxu0 0.0
    %1643 = vmatpush1.msra.mxu0 %v329
    %1644 = vmatprep.subr.mxu0 0.0
    %1645 = vmatpush1.msra.mxu0 %v324
    %1646 = vmatprep.subr.mxu0 0.0
    %1647 = vmatpush2.msra.mxu0 0.0
    %1648 = vmatprep.subr.mxu0 0.0
    %1649 = vmatpush2.msra.mxu0 0.0
    %1650 = vmatprep.subr.mxu0 0.0
    %1651 = vmatpush2.msra.mxu0 0.0
    %1652 = vmatprep.subr.mxu0 0.0
    %1653 = vmatpush2.msra.mxu0 0.0
    %1654 = vmatprep.subr.mxu0 0.0
    %1655 = vmatpush2.msra.mxu0 0.0
    %1656 = vmatprep.subr.mxu0 0.0
    %1657 = vmatpush2.msra.mxu0 0.0
    %1658 = vmatprep.subr.mxu0 0.0
    %1659 = vmatpush2.msra.mxu0 0.0
    %1660 = vmatprep.subr.mxu0 0.0
    %1661 = vmatpush2.msra.mxu0 0.0
    %1662 = vmatprep.subr.mxu0 0.0
    %1663 = vmatpush2.msra.mxu0 0.0
    %1664 = vmatprep.subr.mxu0 0.0
    %1665 = vmatpush2.msra.mxu0 0.0
    %1666 = vmatprep.subr.mxu0 0.0
    %1667 = vmatpush2.msra.mxu0 0.0
    %1668 = vmatprep.subr.mxu0 0.0
    %1669 = vmatpush2.msra.mxu0 0.0
    %1670 = vmatprep.subr.mxu0 0.0
    %1671 = vmatpush2.msra.mxu0 0.0
    %1672 = vmatprep.subr.mxu0 0.0
    %1673 = vmatpush2.msra.mxu0 0.0
    %1674 = vmatprep.subr.mxu0 0.0
    %1675 = vmatpush2.msra.mxu0 0.0
    %1676 = vmatprep.subr.mxu0 0.0
    %1677 = vmatpush2.msra.mxu0 0.0
    %1678 = vmatprep.mubr.f32.mxu0 0.0
    %1679 = vmatmul.mubr.f32.gmra.mxu0 %v1591
    %v1680 = vpop.f32.mrf.mxu0
    %v1681 = vadd.f32 0.0, %v1680
    %v1682 = vpop.f32.mrf.mxu0
    %1683 = vmatprep.mubr.f32.mxu0 0.0
    %1684 = vmatmul.mubr.f32.gmra.mxu0 %v1594
    %v1685 = vpop.f32.mrf.mxu0
    %v1686 = vadd.f32 0.0, %v1685
    %v1687 = vpop.f32.mrf.mxu0
    %1688 = vmatprep.mubr.f32.mxu0 0.0
    %1689 = vmatmul.mubr.f32.gmra.mxu0 %v1597
    %v1690 = vpop.f32.mrf.mxu0
    %v1691 = vadd.f32 0.0, %v1690
    %v1692 = vpop.f32.mrf.mxu0
    %1693 = vmatprep.mubr.f32.mxu0 0.0
    %1694 = vmatmul.mubr.f32.gmra.mxu0 %v1600
    %v1695 = vpop.f32.mrf.mxu0
    %v1696 = vadd.f32 0.0, %v1695
    %v1697 = vpop.f32.mrf.mxu0
    %1698 = vmatprep.mubr.f32.mxu0 0.0
    %1699 = vmatmul.mubr.f32.gmra.mxu0 %v1603
    %v1700 = vpop.f32.mrf.mxu0
    %v1701 = vadd.f32 0.0, %v1700
    %v1702 = vpop.f32.mrf.mxu0
    %1703 = vmatprep.mubr.f32.mxu0 0.0
    %1704 = vmatmul.mubr.f32.gmra.mxu0 %v1606
    %v1705 = vpop.f32.mrf.mxu0
    %v1706 = vadd.f32 0.0, %v1705
    %v1707 = vpop.f32.mrf.mxu0
    %1708 = vmatprep.mubr.f32.mxu0 0.0
    %1709 = vmatmul.mubr.f32.gmra.mxu0 %v1609
    %v1710 = vpop.f32.mrf.mxu0
    %v1711 = vadd.f32 0.0, %v1710
    %v1712 = vpop.f32.mrf.mxu0
    %1713 = vdwg.mxu0
    %v1714 = vadd.f32 %v1575, %v1681
    %v1715 = vadd.f32 %v1576, %v1686
    %v1716 = vadd.f32 %v1577, %v1691
    %v1717 = vadd.f32 %v1578, %v1696
    %v1718 = vadd.f32 %v1579, %v1701
    %v1719 = vadd.f32 %v1580, %v1706
    %v1720 = vadd.f32 %v1581, %v1711
    %v1721 = vld [vmem:[%s4] sm:$0x1]
    %v1723 = vlaneseq
    %v1724 = vshrl.u32 %v1723, 7
    %v1725 = vsub.s32 0, %v1724
    %v1726 = vrot.slane %v1721, %v1725
    %v1728 = vadd.f32 %v1714, %v1726
    %v1729 = vadd.f32 %v1715, %v1726
    %v1730 = vadd.f32 %v1716, %v1726
    %v1731 = vadd.f32 %v1717, %v1726
    %v1732 = vadd.f32 %v1718, %v1726
    %v1733 = vadd.f32 %v1719, %v1726
    %v1734 = vadd.f32 %v1720, %v1726
    %v1735 = vmax.f32 %v1728, 0.0
    %v1736 = vmax.f32 %v1729, 0.0
    %v1737 = vmax.f32 %v1730, 0.0
    %v1738 = vmax.f32 %v1731, 0.0
    %v1739 = vmax.f32 %v1732, 0.0
    %v1740 = vmax.f32 %v1733, 0.0
    %v1741 = vmax.f32 %v1734, 0.0
    %v1742 = vld [vmem:[#allocation2] sm:$0xff]
    %v1743 = vld [vmem:[#allocation2 + $0x8] sm:$0xff]
    %v1744 = vld [vmem:[#allocation2 + $0x10] sm:$0xff]
    %v1745 = vld [vmem:[#allocation2 + $0x18] sm:$0xff]
    %v1746 = vld [vmem:[#allocation2 + $0x20] sm:$0xff]
    %v1747 = vld [vmem:[#allocation2 + $0x28] sm:$0xff]
    %v1748 = vld [vmem:[#allocation2 + $0x30] sm:$0xff]
    %v1749 = vld [vmem:[#allocation2 + $0x38] sm:$0xff]
    %v1750 = vld [vmem:[#allocation2 + $0x40] sm:$0xff]
    %v1751 = vld [vmem:[#allocation2 + $0x48] sm:$0xff]
    %v1752 = vld [vmem:[#allocation2 + $0x50] sm:$0xff]
    %v1753 = vld [vmem:[#allocation2 + $0x58] sm:$0xff]
    %v1754 = vld [vmem:[#allocation2 + $0x60] sm:$0xff]
    %v1755 = vld [vmem:[#allocation2 + $0x68] sm:$0xff]
    %v1756 = vld [vmem:[#allocation2 + $0x70] sm:$0xff]
    %v1757 = vld [vmem:[#allocation2 + $0x78] sm:$0xff]
    %v1758 = vld [vmem:[#allocation2 + $0x80] sm:$0xff]
    %v1759 = vld [vmem:[#allocation2 + $0x88] sm:$0xff]
    %v1760 = vld [vmem:[#allocation2 + $0x90] sm:$0xff]
    %v1761 = vld [vmem:[#allocation2 + $0x98] sm:$0xff]
    %vm1762 = vcmask 261120
    %v1764 = vsel %vm1762, %v1735, 0
    %v1767 = vsel %vm1762, %v1736, 0
    %v1770 = vsel %vm1762, %v1737, 0
    %v1773 = vsel %vm1762, %v1738, 0
    %v1776 = vsel %vm1762, %v1739, 0
    %v1779 = vsel %vm1762, %v1740, 0
    %v1782 = vsel %vm1762, %v1741, 0
    %1784 = vmatprep.subr.mxu0 0.0
    %1785 = vmatpush1.msra.mxu0 0.0
    %1786 = vmatprep.subr.mxu0 0.0
    %1787 = vmatpush1.msra.mxu0 0.0
    %1788 = vmatprep.subr.mxu0 0.0
    %1789 = vmatpush1.msra.mxu0 0.0
    %1790 = vmatprep.subr.mxu0 0.0
    %1791 = vmatpush1.msra.mxu0 0.0
    %1792 = vmatprep.subr.mxu0 0.0
    %1793 = vmatpush1.msra.mxu0 0.0
    %1794 = vmatprep.subr.mxu0 0.0
    %1795 = vmatpush1.msra.mxu0 0.0
    %1796 = vmatprep.subr.mxu0 0.0
    %1797 = vmatpush1.msra.mxu0 0.0
    %1798 = vmatprep.subr.mxu0 0.0
    %1799 = vmatpush1.msra.mxu0 0.0
    %1800 = vmatprep.subr.mxu0 0.0
    %1801 = vmatpush1.msra.mxu0 0.0
    %1802 = vmatprep.subr.mxu0 0.0
    %1803 = vmatpush1.msra.mxu0 0.0
    %1804 = vmatprep.subr.mxu0 0.0
    %1805 = vmatpush1.msra.mxu0 0.0
    %1806 = vmatprep.subr.mxu0 0.0
    %1807 = vmatpush1.msra.mxu0 0.0
    %1808 = vmatprep.subr.mxu0 %v1758
    %1809 = vmatpush1.msra.mxu0 %v1757
    %1810 = vmatprep.subr.mxu0 %v1753
    %1811 = vmatpush1.msra.mxu0 %v1752
    %1812 = vmatprep.subr.mxu0 %v1748
    %1813 = vmatpush1.msra.mxu0 %v1747
    %1814 = vmatprep.subr.mxu0 %v1743
    %1815 = vmatpush1.msra.mxu0 %v1742
    %1816 = vmatprep.subr.mxu0 0.0
    %1817 = vmatpush2.msra.mxu0 0.0
    %1818 = vmatprep.subr.mxu0 0.0
    %1819 = vmatpush2.msra.mxu0 0.0
    %1820 = vmatprep.subr.mxu0 0.0
    %1821 = vmatpush2.msra.mxu0 0.0
    %1822 = vmatprep.subr.mxu0 0.0
    %1823 = vmatpush2.msra.mxu0 0.0
    %1824 = vmatprep.subr.mxu0 0.0
    %1825 = vmatpush2.msra.mxu0 0.0
    %1826 = vmatprep.subr.mxu0 0.0
    %1827 = vmatpush2.msra.mxu0 0.0
    %1828 = vmatprep.subr.mxu0 0.0
    %1829 = vmatpush2.msra.mxu0 0.0
    %1830 = vmatprep.subr.mxu0 0.0
    %1831 = vmatpush2.msra.mxu0 0.0
    %1832 = vmatprep.subr.mxu0 0.0
    %1833 = vmatpush2.msra.mxu0 0.0
    %1834 = vmatprep.subr.mxu0 0.0
    %1835 = vmatpush2.msra.mxu0 0.0
    %1836 = vmatprep.subr.mxu0 0.0
    %1837 = vmatpush2.msra.mxu0 0.0
    %1838 = vmatprep.subr.mxu0 0.0
    %1839 = vmatpush2.msra.mxu0 0.0
    %1840 = vmatprep.subr.mxu0 0.0
    %1841 = vmatpush2.msra.mxu0 0.0
    %1842 = vmatprep.subr.mxu0 0.0
    %1843 = vmatpush2.msra.mxu0 0.0
    %1844 = vmatprep.subr.mxu0 0.0
    %1845 = vmatpush2.msra.mxu0 0.0
    %1846 = vmatprep.subr.mxu0 0.0
    %1847 = vmatpush2.msra.mxu0 0.0
    %1848 = vmatprep.mubr.f32.mxu0 0.0
    %1849 = vmatmul.mubr.f32.gmra.mxu0 %v1764
    %v1850 = vpop.f32.mrf.mxu0
    %v1851 = vadd.f32 0.0, %v1850
    %v1852 = vpop.f32.mrf.mxu0
    %v1853 = vadd.f32 0.0, %v1852
    %1854 = vmatprep.mubr.f32.mxu0 0.0
    %1855 = vmatmul.mubr.f32.gmra.mxu0 %v1767
    %v1856 = vpop.f32.mrf.mxu0
    %v1857 = vadd.f32 0.0, %v1856
    %v1858 = vpop.f32.mrf.mxu0
    %v1859 = vadd.f32 0.0, %v1858
    %1860 = vmatprep.mubr.f32.mxu0 0.0
    %1861 = vmatmul.mubr.f32.gmra.mxu0 %v1770
    %v1862 = vpop.f32.mrf.mxu0
    %v1863 = vadd.f32 0.0, %v1862
    %v1864 = vpop.f32.mrf.mxu0
    %v1865 = vadd.f32 0.0, %v1864
    %1866 = vmatprep.mubr.f32.mxu0 0.0
    %1867 = vmatmul.mubr.f32.gmra.mxu0 %v1773
    %v1868 = vpop.f32.mrf.mxu0
    %v1869 = vadd.f32 0.0, %v1868
    %v1870 = vpop.f32.mrf.mxu0
    %v1871 = vadd.f32 0.0, %v1870
    %1872 = vmatprep.mubr.f32.mxu0 0.0
    %1873 = vmatmul.mubr.f32.gmra.mxu0 %v1776
    %v1874 = vpop.f32.mrf.mxu0
    %v1875 = vadd.f32 0.0, %v1874
    %v1876 = vpop.f32.mrf.mxu0
    %v1877 = vadd.f32 0.0, %v1876
    %1878 = vmatprep.mubr.f32.mxu0 0.0
    %1879 = vmatmul.mubr.f32.gmra.mxu0 %v1779
    %v1880 = vpop.f32.mrf.mxu0
    %v1881 = vadd.f32 0.0, %v1880
    %v1882 = vpop.f32.mrf.mxu0
    %v1883 = vadd.f32 0.0, %v1882
    %1884 = vmatprep.mubr.f32.mxu0 0.0
    %1885 = vmatmul.mubr.f32.gmra.mxu0 %v1782
    %v1886 = vpop.f32.mrf.mxu0
    %v1887 = vadd.f32 0.0, %v1886
    %v1888 = vpop.f32.mrf.mxu0
    %v1889 = vadd.f32 0.0, %v1888
    %1890 = vdwg.mxu0
    %1891 = vmatprep.subr.mxu0 0.0
    %1892 = vmatpush1.msra.mxu0 0.0
    %1893 = vmatprep.subr.mxu0 0.0
    %1894 = vmatpush1.msra.mxu0 0.0
    %1895 = vmatprep.subr.mxu0 0.0
    %1896 = vmatpush1.msra.mxu0 0.0
    %1897 = vmatprep.subr.mxu0 0.0
    %1898 = vmatpush1.msra.mxu0 0.0
    %1899 = vmatprep.subr.mxu0 0.0
    %1900 = vmatpush1.msra.mxu0 0.0
    %1901 = vmatprep.subr.mxu0 0.0
    %1902 = vmatpush1.msra.mxu0 0.0
    %1903 = vmatprep.subr.mxu0 0.0
    %1904 = vmatpush1.msra.mxu0 0.0
    %1905 = vmatprep.subr.mxu0 0.0
    %1906 = vmatpush1.msra.mxu0 0.0
    %1907 = vmatprep.subr.mxu0 0.0
    %1908 = vmatpush1.msra.mxu0 0.0
    %1909 = vmatprep.subr.mxu0 0.0
    %1910 = vmatpush1.msra.mxu0 0.0
    %1911 = vmatprep.subr.mxu0 0.0
    %1912 = vmatpush1.msra.mxu0 0.0
    %1913 = vmatprep.subr.mxu0 0.0
    %1914 = vmatpush1.msra.mxu0 0.0
    %1915 = vmatprep.subr.mxu0 %v1760
    %1916 = vmatpush1.msra.mxu0 %v1759
    %1917 = vmatprep.subr.mxu0 %v1755
    %1918 = vmatpush1.msra.mxu0 %v1754
    %1919 = vmatprep.subr.mxu0 %v1750
    %1920 = vmatpush1.msra.mxu0 %v1749
    %1921 = vmatprep.subr.mxu0 %v1745
    %1922 = vmatpush1.msra.mxu0 %v1744
    %1923 = vmatprep.subr.mxu0 0.0
    %1924 = vmatpush2.msra.mxu0 0.0
    %1925 = vmatprep.subr.mxu0 0.0
    %1926 = vmatpush2.msra.mxu0 0.0
    %1927 = vmatprep.subr.mxu0 0.0
    %1928 = vmatpush2.msra.mxu0 0.0
    %1929 = vmatprep.subr.mxu0 0.0
    %1930 = vmatpush2.msra.mxu0 0.0
    %1931 = vmatprep.subr.mxu0 0.0
    %1932 = vmatpush2.msra.mxu0 0.0
    %1933 = vmatprep.subr.mxu0 0.0
    %1934 = vmatpush2.msra.mxu0 0.0
    %1935 = vmatprep.subr.mxu0 0.0
    %1936 = vmatpush2.msra.mxu0 0.0
    %1937 = vmatprep.subr.mxu0 0.0
    %1938 = vmatpush2.msra.mxu0 0.0
    %1939 = vmatprep.subr.mxu0 0.0
    %1940 = vmatpush2.msra.mxu0 0.0
    %1941 = vmatprep.subr.mxu0 0.0
    %1942 = vmatpush2.msra.mxu0 0.0
    %1943 = vmatprep.subr.mxu0 0.0
    %1944 = vmatpush2.msra.mxu0 0.0
    %1945 = vmatprep.subr.mxu0 0.0
    %1946 = vmatpush2.msra.mxu0 0.0
    %1947 = vmatprep.subr.mxu0 0.0
    %1948 = vmatpush2.msra.mxu0 0.0
    %1949 = vmatprep.subr.mxu0 0.0
    %1950 = vmatpush2.msra.mxu0 0.0
    %1951 = vmatprep.subr.mxu0 0.0
    %1952 = vmatpush2.msra.mxu0 0.0
    %1953 = vmatprep.subr.mxu0 0.0
    %1954 = vmatpush2.msra.mxu0 0.0
    %1955 = vmatprep.mubr.f32.mxu0 0.0
    %1956 = vmatmul.mubr.f32.gmra.mxu0 %v1764
    %v1957 = vpop.f32.mrf.mxu0
    %v1958 = vadd.f32 0.0, %v1957
    %v1959 = vpop.f32.mrf.mxu0
    %v1960 = vadd.f32 0.0, %v1959
    %1961 = vmatprep.mubr.f32.mxu0 0.0
    %1962 = vmatmul.mubr.f32.gmra.mxu0 %v1767
    %v1963 = vpop.f32.mrf.mxu0
    %v1964 = vadd.f32 0.0, %v1963
    %v1965 = vpop.f32.mrf.mxu0
    %v1966 = vadd.f32 0.0, %v1965
    %1967 = vmatprep.mubr.f32.mxu0 0.0
    %1968 = vmatmul.mubr.f32.gmra.mxu0 %v1770
    %v1969 = vpop.f32.mrf.mxu0
    %v1970 = vadd.f32 0.0, %v1969
    %v1971 = vpop.f32.mrf.mxu0
    %v1972 = vadd.f32 0.0, %v1971
    %1973 = vmatprep.mubr.f32.mxu0 0.0
    %1974 = vmatmul.mubr.f32.gmra.mxu0 %v1773
    %v1975 = vpop.f32.mrf.mxu0
    %v1976 = vadd.f32 0.0, %v1975
    %v1977 = vpop.f32.mrf.mxu0
    %v1978 = vadd.f32 0.0, %v1977
    %1979 = vmatprep.mubr.f32.mxu0 0.0
    %1980 = vmatmul.mubr.f32.gmra.mxu0 %v1776
    %v1981 = vpop.f32.mrf.mxu0
    %v1982 = vadd.f32 0.0, %v1981
    %v1983 = vpop.f32.mrf.mxu0
    %v1984 = vadd.f32 0.0, %v1983
    %1985 = vmatprep.mubr.f32.mxu0 0.0
    %1986 = vmatmul.mubr.f32.gmra.mxu0 %v1779
    %v1987 = vpop.f32.mrf.mxu0
    %v1988 = vadd.f32 0.0, %v1987
    %v1989 = vpop.f32.mrf.mxu0
    %v1990 = vadd.f32 0.0, %v1989
    %1991 = vmatprep.mubr.f32.mxu0 0.0
    %1992 = vmatmul.mubr.f32.gmra.mxu0 %v1782
    %v1993 = vpop.f32.mrf.mxu0
    %v1994 = vadd.f32 0.0, %v1993
    %v1995 = vpop.f32.mrf.mxu0
    %v1996 = vadd.f32 0.0, %v1995
    %1997 = vdwg.mxu0
    %1998 = vmatprep.subr.mxu0 0.0
    %1999 = vmatpush1.msra.mxu0 0.0
    %2000 = vmatprep.subr.mxu0 0.0
    %2001 = vmatpush1.msra.mxu0 0.0
    %2002 = vmatprep.subr.mxu0 0.0
    %2003 = vmatpush1.msra.mxu0 0.0
    %2004 = vmatprep.subr.mxu0 0.0
    %2005 = vmatpush1.msra.mxu0 0.0
    %2006 = vmatprep.subr.mxu0 0.0
    %2007 = vmatpush1.msra.mxu0 0.0
    %2008 = vmatprep.subr.mxu0 0.0
    %2009 = vmatpush1.msra.mxu0 0.0
    %2010 = vmatprep.subr.mxu0 0.0
    %2011 = vmatpush1.msra.mxu0 0.0
    %2012 = vmatprep.subr.mxu0 0.0
    %2013 = vmatpush1.msra.mxu0 0.0
    %2014 = vmatprep.subr.mxu0 0.0
    %2015 = vmatpush1.msra.mxu0 0.0
    %2016 = vmatprep.subr.mxu0 0.0
    %2017 = vmatpush1.msra.mxu0 0.0
    %2018 = vmatprep.subr.mxu0 0.0
    %2019 = vmatpush1.msra.mxu0 0.0
    %2020 = vmatprep.subr.mxu0 0.0
    %2021 = vmatpush1.msra.mxu0 0.0
    %2022 = vmatprep.subr.mxu0 0.0
    %2023 = vmatpush1.msra.mxu0 %v1761
    %2024 = vmatprep.subr.mxu0 0.0
    %2025 = vmatpush1.msra.mxu0 %v1756
    %2026 = vmatprep.subr.mxu0 0.0
    %2027 = vmatpush1.msra.mxu0 %v1751
    %2028 = vmatprep.subr.mxu0 0.0
    %2029 = vmatpush1.msra.mxu0 %v1746
    %2030 = vmatprep.subr.mxu0 0.0
    %2031 = vmatpush2.msra.mxu0 0.0
    %2032 = vmatprep.subr.mxu0 0.0
    %2033 = vmatpush2.msra.mxu0 0.0
    %2034 = vmatprep.subr.mxu0 0.0
    %2035 = vmatpush2.msra.mxu0 0.0
    %2036 = vmatprep.subr.mxu0 0.0
    %2037 = vmatpush2.msra.mxu0 0.0
    %2038 = vmatprep.subr.mxu0 0.0
    %2039 = vmatpush2.msra.mxu0 0.0
    %2040 = vmatprep.subr.mxu0 0.0
    %2041 = vmatpush2.msra.mxu0 0.0
    %2042 = vmatprep.subr.mxu0 0.0
    %2043 = vmatpush2.msra.mxu0 0.0
    %2044 = vmatprep.subr.mxu0 0.0
    %2045 = vmatpush2.msra.mxu0 0.0
    %2046 = vmatprep.subr.mxu0 0.0
    %2047 = vmatpush2.msra.mxu0 0.0
    %2048 = vmatprep.subr.mxu0 0.0
    %2049 = vmatpush2.msra.mxu0 0.0
    %2050 = vmatprep.subr.mxu0 0.0
    %2051 = vmatpush2.msra.mxu0 0.0
    %2052 = vmatprep.subr.mxu0 0.0
    %2053 = vmatpush2.msra.mxu0 0.0
    %2054 = vmatprep.subr.mxu0 0.0
    %2055 = vmatpush2.msra.mxu0 0.0
    %2056 = vmatprep.subr.mxu0 0.0
    %2057 = vmatpush2.msra.mxu0 0.0
    %2058 = vmatprep.subr.mxu0 0.0
    %2059 = vmatpush2.msra.mxu0 0.0
    %2060 = vmatprep.subr.mxu0 0.0
    %2061 = vmatpush2.msra.mxu0 0.0
    %2062 = vmatprep.mubr.f32.mxu0 0.0
    %2063 = vmatmul.mubr.f32.gmra.mxu0 %v1764
    %v2064 = vpop.f32.mrf.mxu0
    %v2065 = vadd.f32 0.0, %v2064
    %v2066 = vpop.f32.mrf.mxu0
    %2067 = vmatprep.mubr.f32.mxu0 0.0
    %2068 = vmatmul.mubr.f32.gmra.mxu0 %v1767
    %v2069 = vpop.f32.mrf.mxu0
    %v2070 = vadd.f32 0.0, %v2069
    %v2071 = vpop.f32.mrf.mxu0
    %2072 = vmatprep.mubr.f32.mxu0 0.0
    %2073 = vmatmul.mubr.f32.gmra.mxu0 %v1770
    %v2074 = vpop.f32.mrf.mxu0
    %v2075 = vadd.f32 0.0, %v2074
    %v2076 = vpop.f32.mrf.mxu0
    %2077 = vmatprep.mubr.f32.mxu0 0.0
    %2078 = vmatmul.mubr.f32.gmra.mxu0 %v1773
    %v2079 = vpop.f32.mrf.mxu0
    %v2080 = vadd.f32 0.0, %v2079
    %v2081 = vpop.f32.mrf.mxu0
    %2082 = vmatprep.mubr.f32.mxu0 0.0
    %2083 = vmatmul.mubr.f32.gmra.mxu0 %v1776
    %v2084 = vpop.f32.mrf.mxu0
    %v2085 = vadd.f32 0.0, %v2084
    %v2086 = vpop.f32.mrf.mxu0
    %2087 = vmatprep.mubr.f32.mxu0 0.0
    %2088 = vmatmul.mubr.f32.gmra.mxu0 %v1779
    %v2089 = vpop.f32.mrf.mxu0
    %v2090 = vadd.f32 0.0, %v2089
    %v2091 = vpop.f32.mrf.mxu0
    %2092 = vmatprep.mubr.f32.mxu0 0.0
    %2093 = vmatmul.mubr.f32.gmra.mxu0 %v1782
    %v2094 = vpop.f32.mrf.mxu0
    %v2095 = vadd.f32 0.0, %v2094
    %v2096 = vpop.f32.mrf.mxu0
    %2097 = vdwg.mxu0
    %2105 = vrot.lane.b32.xlu0 %v1851, 64
    %v2106 = vpop.permute.xlu0 %2105
    %2107 = vrot.lane.b32.xlu0 %v1857, 64
    %v2108 = vpop.permute.xlu0 %2107
    %2109 = vrot.lane.b32.xlu0 %v1863, 64
    %v2110 = vpop.permute.xlu0 %2109
    %2111 = vrot.lane.b32.xlu0 %v1869, 64
    %v2112 = vpop.permute.xlu0 %2111
    %2113 = vrot.lane.b32.xlu0 %v1875, 64
    %v2114 = vpop.permute.xlu0 %2113
    %2115 = vrot.lane.b32.xlu0 %v1881, 64
    %v2116 = vpop.permute.xlu0 %2115
    %2117 = vrot.lane.b32.xlu0 %v1887, 64
    %v2118 = vpop.permute.xlu0 %2117
    %v2125 = vsel %vm421, %v2118, 0
    %2127 = vmatprep.subr.mxu0 0.0
    %2128 = vmatpush1.msra.mxu0 0.0
    %2129 = vmatprep.subr.mxu0 0.0
    %2130 = vmatpush1.msra.mxu0 0.0
    %2131 = vmatprep.subr.mxu0 0.0
    %2132 = vmatpush1.msra.mxu0 0.0
    %2133 = vmatprep.subr.mxu0 0.0
    %2134 = vmatpush1.msra.mxu0 0.0
    %2135 = vmatprep.subr.mxu0 0.0
    %2136 = vmatpush1.msra.mxu0 0.0
    %2137 = vmatprep.subr.mxu0 0.0
    %2138 = vmatpush1.msra.mxu0 0.0
    %2139 = vmatprep.subr.mxu0 0.0
    %2140 = vmatpush1.msra.mxu0 0.0
    %2141 = vmatprep.subr.mxu0 0.0
    %2142 = vmatpush1.msra.mxu0 0.0
    %2143 = vmatprep.subr.mxu0 0.0
    %2144 = vmatpush1.msra.mxu0 0.0
    %2145 = vmatprep.subr.mxu0 0.0
    %2146 = vmatpush1.msra.mxu0 %v2125
    %2147 = vmatprep.subr.mxu0 0.0
    %2148 = vmatpush1.msra.mxu0 %v2116
    %2149 = vmatprep.subr.mxu0 0.0
    %2150 = vmatpush1.msra.mxu0 %v2114
    %2151 = vmatprep.subr.mxu0 0.0
    %2152 = vmatpush1.msra.mxu0 %v2112
    %2153 = vmatprep.subr.mxu0 0.0
    %2154 = vmatpush1.msra.mxu0 %v2110
    %2155 = vmatprep.subr.mxu0 0.0
    %2156 = vmatpush1.msra.mxu0 %v2108
    %2157 = vmatprep.subr.mxu0 0.0
    %2158 = vmatpush1.msra.mxu0 %v2106
    %2159 = vmatprep.subr.mxu0 0.0
    %2160 = vmatpush2.msra.mxu0 0.0
    %2161 = vmatprep.subr.mxu0 0.0
    %2162 = vmatpush2.msra.mxu0 0.0
    %2163 = vmatprep.subr.mxu0 0.0
    %2164 = vmatpush2.msra.mxu0 0.0
    %2165 = vmatprep.subr.mxu0 0.0
    %2166 = vmatpush2.msra.mxu0 0.0
    %2167 = vmatprep.subr.mxu0 0.0
    %2168 = vmatpush2.msra.mxu0 0.0
    %2169 = vmatprep.subr.mxu0 0.0
    %2170 = vmatpush2.msra.mxu0 0.0
    %2171 = vmatprep.subr.mxu0 0.0
    %2172 = vmatpush2.msra.mxu0 0.0
    %2173 = vmatprep.subr.mxu0 0.0
    %2174 = vmatpush2.msra.mxu0 0.0
    %2175 = vmatprep.subr.mxu0 0.0
    %2176 = vmatpush2.msra.mxu0 0.0
    %2177 = vmatprep.subr.mxu0 0.0
    %2178 = vmatpush2.msra.mxu0 0.0
    %2179 = vmatprep.subr.mxu0 0.0
    %2180 = vmatpush2.msra.mxu0 0.0
    %2181 = vmatprep.subr.mxu0 0.0
    %2182 = vmatpush2.msra.mxu0 0.0
    %2183 = vmatprep.subr.mxu0 0.0
    %2184 = vmatpush2.msra.mxu0 0.0
    %2185 = vmatprep.subr.mxu0 0.0
    %2186 = vmatpush2.msra.mxu0 0.0
    %2187 = vmatprep.subr.mxu0 0.0
    %2188 = vmatpush2.msra.mxu0 0.0
    %2189 = vmatprep.subr.mxu0 0.0
    %2190 = vmatpush2.msra.mxu0 0.0
    %2191 = vmatprep.mubr.f32.mxu0 0.0
    %2192 = vmatmul.mubr.f32.gmra.mxu0 %v401
    %v2193 = vpop.f32.mrf.mxu0
    %v2194 = vadd.f32 0.0, %v2193
    %v2195 = vpop.f32.mrf.mxu0
    %2196 = vmatprep.mubr.f32.mxu0 0.0
    %2197 = vmatmul.mubr.f32.gmra.mxu0 %v404
    %v2198 = vpop.f32.mrf.mxu0
    %v2199 = vadd.f32 0.0, %v2198
    %v2200 = vpop.f32.mrf.mxu0
    %2201 = vmatprep.mubr.f32.mxu0 0.0
    %2202 = vmatmul.mubr.f32.gmra.mxu0 %v407
    %v2203 = vpop.f32.mrf.mxu0
    %v2204 = vadd.f32 0.0, %v2203
    %v2205 = vpop.f32.mrf.mxu0
    %2206 = vmatprep.mubr.f32.mxu0 0.0
    %2207 = vmatmul.mubr.f32.gmra.mxu0 %v410
    %v2208 = vpop.f32.mrf.mxu0
    %v2209 = vadd.f32 0.0, %v2208
    %v2210 = vpop.f32.mrf.mxu0
    %2211 = vmatprep.mubr.f32.mxu0 0.0
    %2212 = vmatmul.mubr.f32.gmra.mxu0 %v413
    %v2213 = vpop.f32.mrf.mxu0
    %v2214 = vadd.f32 0.0, %v2213
    %v2215 = vpop.f32.mrf.mxu0
    %2216 = vmatprep.mubr.f32.mxu0 0.0
    %2217 = vmatmul.mubr.f32.gmra.mxu0 %v416
    %v2218 = vpop.f32.mrf.mxu0
    %v2219 = vadd.f32 0.0, %v2218
    %v2220 = vpop.f32.mrf.mxu0
    %2221 = vmatprep.mubr.f32.mxu0 0.0
    %2222 = vmatmul.mubr.f32.gmra.mxu0 %v419
    %v2223 = vpop.f32.mrf.mxu0
    %v2224 = vadd.f32 0.0, %v2223
    %v2225 = vpop.f32.mrf.mxu0
    %2226 = vdwg.mxu0
    %v2227 = vsel %vm421, %v1887, 0
    %2229 = vmatprep.subr.mxu0 0.0
    %2230 = vmatpush1.msra.mxu0 0.0
    %2231 = vmatprep.subr.mxu0 0.0
    %2232 = vmatpush1.msra.mxu0 0.0
    %2233 = vmatprep.subr.mxu0 0.0
    %2234 = vmatpush1.msra.mxu0 0.0
    %2235 = vmatprep.subr.mxu0 0.0
    %2236 = vmatpush1.msra.mxu0 0.0
    %2237 = vmatprep.subr.mxu0 0.0
    %2238 = vmatpush1.msra.mxu0 0.0
    %2239 = vmatprep.subr.mxu0 0.0
    %2240 = vmatpush1.msra.mxu0 0.0
    %2241 = vmatprep.subr.mxu0 0.0
    %2242 = vmatpush1.msra.mxu0 0.0
    %2243 = vmatprep.subr.mxu0 0.0
    %2244 = vmatpush1.msra.mxu0 0.0
    %2245 = vmatprep.subr.mxu0 0.0
    %2246 = vmatpush1.msra.mxu0 0.0
    %2247 = vmatprep.subr.mxu0 0.0
    %2248 = vmatpush1.msra.mxu0 %v2227
    %2249 = vmatprep.subr.mxu0 0.0
    %2250 = vmatpush1.msra.mxu0 %v1881
    %2251 = vmatprep.subr.mxu0 0.0
    %2252 = vmatpush1.msra.mxu0 %v1875
    %2253 = vmatprep.subr.mxu0 0.0
    %2254 = vmatpush1.msra.mxu0 %v1869
    %2255 = vmatprep.subr.mxu0 0.0
    %2256 = vmatpush1.msra.mxu0 %v1863
    %2257 = vmatprep.subr.mxu0 0.0
    %2258 = vmatpush1.msra.mxu0 %v1857
    %2259 = vmatprep.subr.mxu0 0.0
    %2260 = vmatpush1.msra.mxu0 %v1851
    %2261 = vmatprep.subr.mxu0 0.0
    %2262 = vmatpush2.msra.mxu0 0.0
    %2263 = vmatprep.subr.mxu0 0.0
    %2264 = vmatpush2.msra.mxu0 0.0
    %2265 = vmatprep.subr.mxu0 0.0
    %2266 = vmatpush2.msra.mxu0 0.0
    %2267 = vmatprep.subr.mxu0 0.0
    %2268 = vmatpush2.msra.mxu0 0.0
    %2269 = vmatprep.subr.mxu0 0.0
    %2270 = vmatpush2.msra.mxu0 0.0
    %2271 = vmatprep.subr.mxu0 0.0
    %2272 = vmatpush2.msra.mxu0 0.0
    %2273 = vmatprep.subr.mxu0 0.0
    %2274 = vmatpush2.msra.mxu0 0.0
    %2275 = vmatprep.subr.mxu0 0.0
    %2276 = vmatpush2.msra.mxu0 0.0
    %2277 = vmatprep.subr.mxu0 0.0
    %2278 = vmatpush2.msra.mxu0 0.0
    %2279 = vmatprep.subr.mxu0 0.0
    %2280 = vmatpush2.msra.mxu0 0.0
    %2281 = vmatprep.subr.mxu0 0.0
    %2282 = vmatpush2.msra.mxu0 0.0
    %2283 = vmatprep.subr.mxu0 0.0
    %2284 = vmatpush2.msra.mxu0 0.0
    %2285 = vmatprep.subr.mxu0 0.0
    %2286 = vmatpush2.msra.mxu0 0.0
    %2287 = vmatprep.subr.mxu0 0.0
    %2288 = vmatpush2.msra.mxu0 0.0
    %2289 = vmatprep.subr.mxu0 0.0
    %2290 = vmatpush2.msra.mxu0 0.0
    %2291 = vmatprep.subr.mxu0 0.0
    %2292 = vmatpush2.msra.mxu0 0.0
    %2293 = vmatprep.mubr.f32.mxu0 0.0
    %2294 = vmatmul.mubr.f32.gmra.mxu0 %v525
    %v2295 = vpop.f32.mrf.mxu0
    %v2296 = vadd.f32 %v2194, %v2295
    %v2297 = vpop.f32.mrf.mxu0
    %2298 = vmatprep.mubr.f32.mxu0 0.0
    %2299 = vmatmul.mubr.f32.gmra.mxu0 %v528
    %v2300 = vpop.f32.mrf.mxu0
    %v2301 = vadd.f32 %v2199, %v2300
    %v2302 = vpop.f32.mrf.mxu0
    %2303 = vmatprep.mubr.f32.mxu0 0.0
    %2304 = vmatmul.mubr.f32.gmra.mxu0 %v531
    %v2305 = vpop.f32.mrf.mxu0
    %v2306 = vadd.f32 %v2204, %v2305
    %v2307 = vpop.f32.mrf.mxu0
    %2308 = vmatprep.mubr.f32.mxu0 0.0
    %2309 = vmatmul.mubr.f32.gmra.mxu0 %v534
    %v2310 = vpop.f32.mrf.mxu0
    %v2311 = vadd.f32 %v2209, %v2310
    %v2312 = vpop.f32.mrf.mxu0
    %2313 = vmatprep.mubr.f32.mxu0 0.0
    %2314 = vmatmul.mubr.f32.gmra.mxu0 %v537
    %v2315 = vpop.f32.mrf.mxu0
    %v2316 = vadd.f32 %v2214, %v2315
    %v2317 = vpop.f32.mrf.mxu0
    %2318 = vmatprep.mubr.f32.mxu0 0.0
    %2319 = vmatmul.mubr.f32.gmra.mxu0 %v540
    %v2320 = vpop.f32.mrf.mxu0
    %v2321 = vadd.f32 %v2219, %v2320
    %v2322 = vpop.f32.mrf.mxu0
    %2323 = vmatprep.mubr.f32.mxu0 0.0
    %2324 = vmatmul.mubr.f32.gmra.mxu0 %v543
    %v2325 = vpop.f32.mrf.mxu0
    %v2326 = vadd.f32 %v2224, %v2325
    %v2327 = vpop.f32.mrf.mxu0
    %2328 = vdwg.mxu0
    %v2330 = vsel %vm421, %v1889, 0
    %2332 = vmatprep.subr.mxu0 0.0
    %2333 = vmatpush1.msra.mxu0 0.0
    %2334 = vmatprep.subr.mxu0 0.0
    %2335 = vmatpush1.msra.mxu0 0.0
    %2336 = vmatprep.subr.mxu0 0.0
    %2337 = vmatpush1.msra.mxu0 0.0
    %2338 = vmatprep.subr.mxu0 0.0
    %2339 = vmatpush1.msra.mxu0 0.0
    %2340 = vmatprep.subr.mxu0 0.0
    %2341 = vmatpush1.msra.mxu0 0.0
    %2342 = vmatprep.subr.mxu0 0.0
    %2343 = vmatpush1.msra.mxu0 0.0
    %2344 = vmatprep.subr.mxu0 0.0
    %2345 = vmatpush1.msra.mxu0 0.0
    %2346 = vmatprep.subr.mxu0 0.0
    %2347 = vmatpush1.msra.mxu0 0.0
    %2348 = vmatprep.subr.mxu0 0.0
    %2349 = vmatpush1.msra.mxu0 0.0
    %2350 = vmatprep.subr.mxu0 0.0
    %2351 = vmatpush1.msra.mxu0 %v2330
    %2352 = vmatprep.subr.mxu0 0.0
    %2353 = vmatpush1.msra.mxu0 %v1883
    %2354 = vmatprep.subr.mxu0 0.0
    %2355 = vmatpush1.msra.mxu0 %v1877
    %2356 = vmatprep.subr.mxu0 0.0
    %2357 = vmatpush1.msra.mxu0 %v1871
    %2358 = vmatprep.subr.mxu0 0.0
    %2359 = vmatpush1.msra.mxu0 %v1865
    %2360 = vmatprep.subr.mxu0 0.0
    %2361 = vmatpush1.msra.mxu0 %v1859
    %2362 = vmatprep.subr.mxu0 0.0
    %2363 = vmatpush1.msra.mxu0 %v1853
    %2364 = vmatprep.subr.mxu0 0.0
    %2365 = vmatpush2.msra.mxu0 0.0
    %2366 = vmatprep.subr.mxu0 0.0
    %2367 = vmatpush2.msra.mxu0 0.0
    %2368 = vmatprep.subr.mxu0 0.0
    %2369 = vmatpush2.msra.mxu0 0.0
    %2370 = vmatprep.subr.mxu0 0.0
    %2371 = vmatpush2.msra.mxu0 0.0
    %2372 = vmatprep.subr.mxu0 0.0
    %2373 = vmatpush2.msra.mxu0 0.0
    %2374 = vmatprep.subr.mxu0 0.0
    %2375 = vmatpush2.msra.mxu0 0.0
    %2376 = vmatprep.subr.mxu0 0.0
    %2377 = vmatpush2.msra.mxu0 0.0
    %2378 = vmatprep.subr.mxu0 0.0
    %2379 = vmatpush2.msra.mxu0 0.0
    %2380 = vmatprep.subr.mxu0 0.0
    %2381 = vmatpush2.msra.mxu0 0.0
    %2382 = vmatprep.subr.mxu0 0.0
    %2383 = vmatpush2.msra.mxu0 0.0
    %2384 = vmatprep.subr.mxu0 0.0
    %2385 = vmatpush2.msra.mxu0 0.0
    %2386 = vmatprep.subr.mxu0 0.0
    %2387 = vmatpush2.msra.mxu0 0.0
    %2388 = vmatprep.subr.mxu0 0.0
    %2389 = vmatpush2.msra.mxu0 0.0
    %2390 = vmatprep.subr.mxu0 0.0
    %2391 = vmatpush2.msra.mxu0 0.0
    %2392 = vmatprep.subr.mxu0 0.0
    %2393 = vmatpush2.msra.mxu0 0.0
    %2394 = vmatprep.subr.mxu0 0.0
    %2395 = vmatpush2.msra.mxu0 0.0
    %2396 = vmatprep.mubr.f32.mxu0 0.0
    %2397 = vmatmul.mubr.f32.gmra.mxu0 %v676
    %v2398 = vpop.f32.mrf.mxu0
    %v2399 = vadd.f32 0.0, %v2398
    %v2400 = vpop.f32.mrf.mxu0
    %2401 = vmatprep.mubr.f32.mxu0 0.0
    %2402 = vmatmul.mubr.f32.gmra.mxu0 %v679
    %v2403 = vpop.f32.mrf.mxu0
    %v2404 = vadd.f32 0.0, %v2403
    %v2405 = vpop.f32.mrf.mxu0
    %2406 = vmatprep.mubr.f32.mxu0 0.0
    %2407 = vmatmul.mubr.f32.gmra.mxu0 %v682
    %v2408 = vpop.f32.mrf.mxu0
    %v2409 = vadd.f32 0.0, %v2408
    %v2410 = vpop.f32.mrf.mxu0
    %2411 = vmatprep.mubr.f32.mxu0 0.0
    %2412 = vmatmul.mubr.f32.gmra.mxu0 %v685
    %v2413 = vpop.f32.mrf.mxu0
    %v2414 = vadd.f32 0.0, %v2413
    %v2415 = vpop.f32.mrf.mxu0
    %2416 = vmatprep.mubr.f32.mxu0 0.0
    %2417 = vmatmul.mubr.f32.gmra.mxu0 %v688
    %v2418 = vpop.f32.mrf.mxu0
    %v2419 = vadd.f32 0.0, %v2418
    %v2420 = vpop.f32.mrf.mxu0
    %2421 = vmatprep.mubr.f32.mxu0 0.0
    %2422 = vmatmul.mubr.f32.gmra.mxu0 %v691
    %v2423 = vpop.f32.mrf.mxu0
    %v2424 = vadd.f32 0.0, %v2423
    %v2425 = vpop.f32.mrf.mxu0
    %2426 = vmatprep.mubr.f32.mxu0 0.0
    %2427 = vmatmul.mubr.f32.gmra.mxu0 %v694
    %v2428 = vpop.f32.mrf.mxu0
    %v2429 = vadd.f32 0.0, %v2428
    %v2430 = vpop.f32.mrf.mxu0
    %2431 = vdwg.mxu0
    %v2432 = vadd.f32 %v2296, %v2399
    %v2433 = vadd.f32 %v2301, %v2404
    %v2434 = vadd.f32 %v2306, %v2409
    %v2435 = vadd.f32 %v2311, %v2414
    %v2436 = vadd.f32 %v2316, %v2419
    %v2437 = vadd.f32 %v2321, %v2424
    %v2438 = vadd.f32 %v2326, %v2429
    %2445 = vrot.lane.b32.xlu0 %v1853, 64
    %v2446 = vpop.permute.xlu0 %2445
    %2447 = vrot.lane.b32.xlu0 %v1859, 64
    %v2448 = vpop.permute.xlu0 %2447
    %2449 = vrot.lane.b32.xlu0 %v1865, 64
    %v2450 = vpop.permute.xlu0 %2449
    %2451 = vrot.lane.b32.xlu0 %v1871, 64
    %v2452 = vpop.permute.xlu0 %2451
    %2453 = vrot.lane.b32.xlu0 %v1877, 64
    %v2454 = vpop.permute.xlu0 %2453
    %2455 = vrot.lane.b32.xlu0 %v1883, 64
    %v2456 = vpop.permute.xlu0 %2455
    %2457 = vrot.lane.b32.xlu0 %v1889, 64
    %v2458 = vpop.permute.xlu0 %2457
    %v2465 = vsel %vm421, %v2458, 0
    %2467 = vmatprep.subr.mxu0 0.0
    %2468 = vmatpush1.msra.mxu0 0.0
    %2469 = vmatprep.subr.mxu0 0.0
    %2470 = vmatpush1.msra.mxu0 0.0
    %2471 = vmatprep.subr.mxu0 0.0
    %2472 = vmatpush1.msra.mxu0 0.0
    %2473 = vmatprep.subr.mxu0 0.0
    %2474 = vmatpush1.msra.mxu0 0.0
    %2475 = vmatprep.subr.mxu0 0.0
    %2476 = vmatpush1.msra.mxu0 0.0
    %2477 = vmatprep.subr.mxu0 0.0
    %2478 = vmatpush1.msra.mxu0 0.0
    %2479 = vmatprep.subr.mxu0 0.0
    %2480 = vmatpush1.msra.mxu0 0.0
    %2481 = vmatprep.subr.mxu0 0.0
    %2482 = vmatpush1.msra.mxu0 0.0
    %2483 = vmatprep.subr.mxu0 0.0
    %2484 = vmatpush1.msra.mxu0 0.0
    %2485 = vmatprep.subr.mxu0 0.0
    %2486 = vmatpush1.msra.mxu0 %v2465
    %2487 = vmatprep.subr.mxu0 0.0
    %2488 = vmatpush1.msra.mxu0 %v2456
    %2489 = vmatprep.subr.mxu0 0.0
    %2490 = vmatpush1.msra.mxu0 %v2454
    %2491 = vmatprep.subr.mxu0 0.0
    %2492 = vmatpush1.msra.mxu0 %v2452
    %2493 = vmatprep.subr.mxu0 0.0
    %2494 = vmatpush1.msra.mxu0 %v2450
    %2495 = vmatprep.subr.mxu0 0.0
    %2496 = vmatpush1.msra.mxu0 %v2448
    %2497 = vmatprep.subr.mxu0 0.0
    %2498 = vmatpush1.msra.mxu0 %v2446
    %2499 = vmatprep.subr.mxu0 0.0
    %2500 = vmatpush2.msra.mxu0 0.0
    %2501 = vmatprep.subr.mxu0 0.0
    %2502 = vmatpush2.msra.mxu0 0.0
    %2503 = vmatprep.subr.mxu0 0.0
    %2504 = vmatpush2.msra.mxu0 0.0
    %2505 = vmatprep.subr.mxu0 0.0
    %2506 = vmatpush2.msra.mxu0 0.0
    %2507 = vmatprep.subr.mxu0 0.0
    %2508 = vmatpush2.msra.mxu0 0.0
    %2509 = vmatprep.subr.mxu0 0.0
    %2510 = vmatpush2.msra.mxu0 0.0
    %2511 = vmatprep.subr.mxu0 0.0
    %2512 = vmatpush2.msra.mxu0 0.0
    %2513 = vmatprep.subr.mxu0 0.0
    %2514 = vmatpush2.msra.mxu0 0.0
    %2515 = vmatprep.subr.mxu0 0.0
    %2516 = vmatpush2.msra.mxu0 0.0
    %2517 = vmatprep.subr.mxu0 0.0
    %2518 = vmatpush2.msra.mxu0 0.0
    %2519 = vmatprep.subr.mxu0 0.0
    %2520 = vmatpush2.msra.mxu0 0.0
    %2521 = vmatprep.subr.mxu0 0.0
    %2522 = vmatpush2.msra.mxu0 0.0
    %2523 = vmatprep.subr.mxu0 0.0
    %2524 = vmatpush2.msra.mxu0 0.0
    %2525 = vmatprep.subr.mxu0 0.0
    %2526 = vmatpush2.msra.mxu0 0.0
    %2527 = vmatprep.subr.mxu0 0.0
    %2528 = vmatpush2.msra.mxu0 0.0
    %2529 = vmatprep.subr.mxu0 0.0
    %2530 = vmatpush2.msra.mxu0 0.0
    %2531 = vmatprep.mubr.f32.mxu0 0.0
    %2532 = vmatmul.mubr.f32.gmra.mxu0 %v834
    %v2533 = vpop.f32.mrf.mxu0
    %v2534 = vadd.f32 0.0, %v2533
    %v2535 = vpop.f32.mrf.mxu0
    %2536 = vmatprep.mubr.f32.mxu0 0.0
    %2537 = vmatmul.mubr.f32.gmra.mxu0 %v837
    %v2538 = vpop.f32.mrf.mxu0
    %v2539 = vadd.f32 0.0, %v2538
    %v2540 = vpop.f32.mrf.mxu0
    %2541 = vmatprep.mubr.f32.mxu0 0.0
    %2542 = vmatmul.mubr.f32.gmra.mxu0 %v840
    %v2543 = vpop.f32.mrf.mxu0
    %v2544 = vadd.f32 0.0, %v2543
    %v2545 = vpop.f32.mrf.mxu0
    %2546 = vmatprep.mubr.f32.mxu0 0.0
    %2547 = vmatmul.mubr.f32.gmra.mxu0 %v843
    %v2548 = vpop.f32.mrf.mxu0
    %v2549 = vadd.f32 0.0, %v2548
    %v2550 = vpop.f32.mrf.mxu0
    %2551 = vmatprep.mubr.f32.mxu0 0.0
    %2552 = vmatmul.mubr.f32.gmra.mxu0 %v846
    %v2553 = vpop.f32.mrf.mxu0
    %v2554 = vadd.f32 0.0, %v2553
    %v2555 = vpop.f32.mrf.mxu0
    %2556 = vmatprep.mubr.f32.mxu0 0.0
    %2557 = vmatmul.mubr.f32.gmra.mxu0 %v849
    %v2558 = vpop.f32.mrf.mxu0
    %v2559 = vadd.f32 0.0, %v2558
    %v2560 = vpop.f32.mrf.mxu0
    %2561 = vmatprep.mubr.f32.mxu0 0.0
    %2562 = vmatmul.mubr.f32.gmra.mxu0 %v852
    %v2563 = vpop.f32.mrf.mxu0
    %v2564 = vadd.f32 0.0, %v2563
    %v2565 = vpop.f32.mrf.mxu0
    %2566 = vdwg.mxu0
    %v2567 = vadd.f32 %v2432, %v2534
    %v2568 = vadd.f32 %v2433, %v2539
    %v2569 = vadd.f32 %v2434, %v2544
    %v2570 = vadd.f32 %v2435, %v2549
    %v2571 = vadd.f32 %v2436, %v2554
    %v2572 = vadd.f32 %v2437, %v2559
    %v2573 = vadd.f32 %v2438, %v2564
    %v2575 = vsel %vm421, %v1994, 0
    %2577 = vmatprep.subr.mxu0 0.0
    %2578 = vmatpush1.msra.mxu0 0.0
    %2579 = vmatprep.subr.mxu0 0.0
    %2580 = vmatpush1.msra.mxu0 0.0
    %2581 = vmatprep.subr.mxu0 0.0
    %2582 = vmatpush1.msra.mxu0 0.0
    %2583 = vmatprep.subr.mxu0 0.0
    %2584 = vmatpush1.msra.mxu0 0.0
    %2585 = vmatprep.subr.mxu0 0.0
    %2586 = vmatpush1.msra.mxu0 0.0
    %2587 = vmatprep.subr.mxu0 0.0
    %2588 = vmatpush1.msra.mxu0 0.0
    %2589 = vmatprep.subr.mxu0 0.0
    %2590 = vmatpush1.msra.mxu0 0.0
    %2591 = vmatprep.subr.mxu0 0.0
    %2592 = vmatpush1.msra.mxu0 0.0
    %2593 = vmatprep.subr.mxu0 0.0
    %2594 = vmatpush1.msra.mxu0 0.0
    %2595 = vmatprep.subr.mxu0 0.0
    %2596 = vmatpush1.msra.mxu0 %v2575
    %2597 = vmatprep.subr.mxu0 0.0
    %2598 = vmatpush1.msra.mxu0 %v1988
    %2599 = vmatprep.subr.mxu0 0.0
    %2600 = vmatpush1.msra.mxu0 %v1982
    %2601 = vmatprep.subr.mxu0 0.0
    %2602 = vmatpush1.msra.mxu0 %v1976
    %2603 = vmatprep.subr.mxu0 0.0
    %2604 = vmatpush1.msra.mxu0 %v1970
    %2605 = vmatprep.subr.mxu0 0.0
    %2606 = vmatpush1.msra.mxu0 %v1964
    %2607 = vmatprep.subr.mxu0 0.0
    %2608 = vmatpush1.msra.mxu0 %v1958
    %2609 = vmatprep.subr.mxu0 0.0
    %2610 = vmatpush2.msra.mxu0 0.0
    %2611 = vmatprep.subr.mxu0 0.0
    %2612 = vmatpush2.msra.mxu0 0.0
    %2613 = vmatprep.subr.mxu0 0.0
    %2614 = vmatpush2.msra.mxu0 0.0
    %2615 = vmatprep.subr.mxu0 0.0
    %2616 = vmatpush2.msra.mxu0 0.0
    %2617 = vmatprep.subr.mxu0 0.0
    %2618 = vmatpush2.msra.mxu0 0.0
    %2619 = vmatprep.subr.mxu0 0.0
    %2620 = vmatpush2.msra.mxu0 0.0
    %2621 = vmatprep.subr.mxu0 0.0
    %2622 = vmatpush2.msra.mxu0 0.0
    %2623 = vmatprep.subr.mxu0 0.0
    %2624 = vmatpush2.msra.mxu0 0.0
    %2625 = vmatprep.subr.mxu0 0.0
    %2626 = vmatpush2.msra.mxu0 0.0
    %2627 = vmatprep.subr.mxu0 0.0
    %2628 = vmatpush2.msra.mxu0 0.0
    %2629 = vmatprep.subr.mxu0 0.0
    %2630 = vmatpush2.msra.mxu0 0.0
    %2631 = vmatprep.subr.mxu0 0.0
    %2632 = vmatpush2.msra.mxu0 0.0
    %2633 = vmatprep.subr.mxu0 0.0
    %2634 = vmatpush2.msra.mxu0 0.0
    %2635 = vmatprep.subr.mxu0 0.0
    %2636 = vmatpush2.msra.mxu0 0.0
    %2637 = vmatprep.subr.mxu0 0.0
    %2638 = vmatpush2.msra.mxu0 0.0
    %2639 = vmatprep.subr.mxu0 0.0
    %2640 = vmatpush2.msra.mxu0 0.0
    %2641 = vmatprep.mubr.f32.mxu0 0.0
    %2642 = vmatmul.mubr.f32.gmra.mxu0 %v972
    %v2643 = vpop.f32.mrf.mxu0
    %v2644 = vadd.f32 0.0, %v2643
    %v2645 = vpop.f32.mrf.mxu0
    %2646 = vmatprep.mubr.f32.mxu0 0.0
    %2647 = vmatmul.mubr.f32.gmra.mxu0 %v975
    %v2648 = vpop.f32.mrf.mxu0
    %v2649 = vadd.f32 0.0, %v2648
    %v2650 = vpop.f32.mrf.mxu0
    %2651 = vmatprep.mubr.f32.mxu0 0.0
    %2652 = vmatmul.mubr.f32.gmra.mxu0 %v978
    %v2653 = vpop.f32.mrf.mxu0
    %v2654 = vadd.f32 0.0, %v2653
    %v2655 = vpop.f32.mrf.mxu0
    %2656 = vmatprep.mubr.f32.mxu0 0.0
    %2657 = vmatmul.mubr.f32.gmra.mxu0 %v981
    %v2658 = vpop.f32.mrf.mxu0
    %v2659 = vadd.f32 0.0, %v2658
    %v2660 = vpop.f32.mrf.mxu0
    %2661 = vmatprep.mubr.f32.mxu0 0.0
    %2662 = vmatmul.mubr.f32.gmra.mxu0 %v984
    %v2663 = vpop.f32.mrf.mxu0
    %v2664 = vadd.f32 0.0, %v2663
    %v2665 = vpop.f32.mrf.mxu0
    %2666 = vmatprep.mubr.f32.mxu0 0.0
    %2667 = vmatmul.mubr.f32.gmra.mxu0 %v987
    %v2668 = vpop.f32.mrf.mxu0
    %v2669 = vadd.f32 0.0, %v2668
    %v2670 = vpop.f32.mrf.mxu0
    %2671 = vmatprep.mubr.f32.mxu0 0.0
    %2672 = vmatmul.mubr.f32.gmra.mxu0 %v990
    %v2673 = vpop.f32.mrf.mxu0
    %v2674 = vadd.f32 0.0, %v2673
    %v2675 = vpop.f32.mrf.mxu0
    %2676 = vdwg.mxu0
    %v2677 = vadd.f32 %v2567, %v2644
    %v2678 = vadd.f32 %v2568, %v2649
    %v2679 = vadd.f32 %v2569, %v2654
    %v2680 = vadd.f32 %v2570, %v2659
    %v2681 = vadd.f32 %v2571, %v2664
    %v2682 = vadd.f32 %v2572, %v2669
    %v2683 = vadd.f32 %v2573, %v2674
    %2690 = vrot.lane.b32.xlu0 %v1958, 64
    %v2691 = vpop.permute.xlu0 %2690
    %2692 = vrot.lane.b32.xlu0 %v1964, 64
    %v2693 = vpop.permute.xlu0 %2692
    %2694 = vrot.lane.b32.xlu0 %v1970, 64
    %v2695 = vpop.permute.xlu0 %2694
    %2696 = vrot.lane.b32.xlu0 %v1976, 64
    %v2697 = vpop.permute.xlu0 %2696
    %2698 = vrot.lane.b32.xlu0 %v1982, 64
    %v2699 = vpop.permute.xlu0 %2698
    %2700 = vrot.lane.b32.xlu0 %v1988, 64
    %v2701 = vpop.permute.xlu0 %2700
    %2702 = vrot.lane.b32.xlu0 %v1994, 64
    %v2703 = vpop.permute.xlu0 %2702
    %v2710 = vsel %vm421, %v2703, 0
    %2712 = vmatprep.subr.mxu0 0.0
    %2713 = vmatpush1.msra.mxu0 0.0
    %2714 = vmatprep.subr.mxu0 0.0
    %2715 = vmatpush1.msra.mxu0 0.0
    %2716 = vmatprep.subr.mxu0 0.0
    %2717 = vmatpush1.msra.mxu0 0.0
    %2718 = vmatprep.subr.mxu0 0.0
    %2719 = vmatpush1.msra.mxu0 0.0
    %2720 = vmatprep.subr.mxu0 0.0
    %2721 = vmatpush1.msra.mxu0 0.0
    %2722 = vmatprep.subr.mxu0 0.0
    %2723 = vmatpush1.msra.mxu0 0.0
    %2724 = vmatprep.subr.mxu0 0.0
    %2725 = vmatpush1.msra.mxu0 0.0
    %2726 = vmatprep.subr.mxu0 0.0
    %2727 = vmatpush1.msra.mxu0 0.0
    %2728 = vmatprep.subr.mxu0 0.0
    %2729 = vmatpush1.msra.mxu0 0.0
    %2730 = vmatprep.subr.mxu0 0.0
    %2731 = vmatpush1.msra.mxu0 %v2710
    %2732 = vmatprep.subr.mxu0 0.0
    %2733 = vmatpush1.msra.mxu0 %v2701
    %2734 = vmatprep.subr.mxu0 0.0
    %2735 = vmatpush1.msra.mxu0 %v2699
    %2736 = vmatprep.subr.mxu0 0.0
    %2737 = vmatpush1.msra.mxu0 %v2697
    %2738 = vmatprep.subr.mxu0 0.0
    %2739 = vmatpush1.msra.mxu0 %v2695
    %2740 = vmatprep.subr.mxu0 0.0
    %2741 = vmatpush1.msra.mxu0 %v2693
    %2742 = vmatprep.subr.mxu0 0.0
    %2743 = vmatpush1.msra.mxu0 %v2691
    %2744 = vmatprep.subr.mxu0 0.0
    %2745 = vmatpush2.msra.mxu0 0.0
    %2746 = vmatprep.subr.mxu0 0.0
    %2747 = vmatpush2.msra.mxu0 0.0
    %2748 = vmatprep.subr.mxu0 0.0
    %2749 = vmatpush2.msra.mxu0 0.0
    %2750 = vmatprep.subr.mxu0 0.0
    %2751 = vmatpush2.msra.mxu0 0.0
    %2752 = vmatprep.subr.mxu0 0.0
    %2753 = vmatpush2.msra.mxu0 0.0
    %2754 = vmatprep.subr.mxu0 0.0
    %2755 = vmatpush2.msra.mxu0 0.0
    %2756 = vmatprep.subr.mxu0 0.0
    %2757 = vmatpush2.msra.mxu0 0.0
    %2758 = vmatprep.subr.mxu0 0.0
    %2759 = vmatpush2.msra.mxu0 0.0
    %2760 = vmatprep.subr.mxu0 0.0
    %2761 = vmatpush2.msra.mxu0 0.0
    %2762 = vmatprep.subr.mxu0 0.0
    %2763 = vmatpush2.msra.mxu0 0.0
    %2764 = vmatprep.subr.mxu0 0.0
    %2765 = vmatpush2.msra.mxu0 0.0
    %2766 = vmatprep.subr.mxu0 0.0
    %2767 = vmatpush2.msra.mxu0 0.0
    %2768 = vmatprep.subr.mxu0 0.0
    %2769 = vmatpush2.msra.mxu0 0.0
    %2770 = vmatprep.subr.mxu0 0.0
    %2771 = vmatpush2.msra.mxu0 0.0
    %2772 = vmatprep.subr.mxu0 0.0
    %2773 = vmatpush2.msra.mxu0 0.0
    %2774 = vmatprep.subr.mxu0 0.0
    %2775 = vmatpush2.msra.mxu0 0.0
    %2776 = vmatprep.mubr.f32.mxu0 0.0
    %2777 = vmatmul.mubr.f32.gmra.mxu0 %v1137
    %v2778 = vpop.f32.mrf.mxu0
    %v2779 = vadd.f32 0.0, %v2778
    %v2780 = vpop.f32.mrf.mxu0
    %2781 = vmatprep.mubr.f32.mxu0 0.0
    %2782 = vmatmul.mubr.f32.gmra.mxu0 %v1140
    %v2783 = vpop.f32.mrf.mxu0
    %v2784 = vadd.f32 0.0, %v2783
    %v2785 = vpop.f32.mrf.mxu0
    %2786 = vmatprep.mubr.f32.mxu0 0.0
    %2787 = vmatmul.mubr.f32.gmra.mxu0 %v1143
    %v2788 = vpop.f32.mrf.mxu0
    %v2789 = vadd.f32 0.0, %v2788
    %v2790 = vpop.f32.mrf.mxu0
    %2791 = vmatprep.mubr.f32.mxu0 0.0
    %2792 = vmatmul.mubr.f32.gmra.mxu0 %v1146
    %v2793 = vpop.f32.mrf.mxu0
    %v2794 = vadd.f32 0.0, %v2793
    %v2795 = vpop.f32.mrf.mxu0
    %2796 = vmatprep.mubr.f32.mxu0 0.0
    %2797 = vmatmul.mubr.f32.gmra.mxu0 %v1149
    %v2798 = vpop.f32.mrf.mxu0
    %v2799 = vadd.f32 0.0, %v2798
    %v2800 = vpop.f32.mrf.mxu0
    %2801 = vmatprep.mubr.f32.mxu0 0.0
    %2802 = vmatmul.mubr.f32.gmra.mxu0 %v1152
    %v2803 = vpop.f32.mrf.mxu0
    %v2804 = vadd.f32 0.0, %v2803
    %v2805 = vpop.f32.mrf.mxu0
    %2806 = vmatprep.mubr.f32.mxu0 0.0
    %2807 = vmatmul.mubr.f32.gmra.mxu0 %v1155
    %v2808 = vpop.f32.mrf.mxu0
    %v2809 = vadd.f32 0.0, %v2808
    %v2810 = vpop.f32.mrf.mxu0
    %2811 = vdwg.mxu0
    %v2812 = vadd.f32 %v2677, %v2779
    %v2813 = vadd.f32 %v2678, %v2784
    %v2814 = vadd.f32 %v2679, %v2789
    %v2815 = vadd.f32 %v2680, %v2794
    %v2816 = vadd.f32 %v2681, %v2799
    %v2817 = vadd.f32 %v2682, %v2804
    %v2818 = vadd.f32 %v2683, %v2809
    %v2820 = vsel %vm421, %v1996, 0
    %2822 = vmatprep.subr.mxu0 0.0
    %2823 = vmatpush1.msra.mxu0 0.0
    %2824 = vmatprep.subr.mxu0 0.0
    %2825 = vmatpush1.msra.mxu0 0.0
    %2826 = vmatprep.subr.mxu0 0.0
    %2827 = vmatpush1.msra.mxu0 0.0
    %2828 = vmatprep.subr.mxu0 0.0
    %2829 = vmatpush1.msra.mxu0 0.0
    %2830 = vmatprep.subr.mxu0 0.0
    %2831 = vmatpush1.msra.mxu0 0.0
    %2832 = vmatprep.subr.mxu0 0.0
    %2833 = vmatpush1.msra.mxu0 0.0
    %2834 = vmatprep.subr.mxu0 0.0
    %2835 = vmatpush1.msra.mxu0 0.0
    %2836 = vmatprep.subr.mxu0 0.0
    %2837 = vmatpush1.msra.mxu0 0.0
    %2838 = vmatprep.subr.mxu0 0.0
    %2839 = vmatpush1.msra.mxu0 0.0
    %2840 = vmatprep.subr.mxu0 0.0
    %2841 = vmatpush1.msra.mxu0 %v2820
    %2842 = vmatprep.subr.mxu0 0.0
    %2843 = vmatpush1.msra.mxu0 %v1990
    %2844 = vmatprep.subr.mxu0 0.0
    %2845 = vmatpush1.msra.mxu0 %v1984
    %2846 = vmatprep.subr.mxu0 0.0
    %2847 = vmatpush1.msra.mxu0 %v1978
    %2848 = vmatprep.subr.mxu0 0.0
    %2849 = vmatpush1.msra.mxu0 %v1972
    %2850 = vmatprep.subr.mxu0 0.0
    %2851 = vmatpush1.msra.mxu0 %v1966
    %2852 = vmatprep.subr.mxu0 0.0
    %2853 = vmatpush1.msra.mxu0 %v1960
    %2854 = vmatprep.subr.mxu0 0.0
    %2855 = vmatpush2.msra.mxu0 0.0
    %2856 = vmatprep.subr.mxu0 0.0
    %2857 = vmatpush2.msra.mxu0 0.0
    %2858 = vmatprep.subr.mxu0 0.0
    %2859 = vmatpush2.msra.mxu0 0.0
    %2860 = vmatprep.subr.mxu0 0.0
    %2861 = vmatpush2.msra.mxu0 0.0
    %2862 = vmatprep.subr.mxu0 0.0
    %2863 = vmatpush2.msra.mxu0 0.0
    %2864 = vmatprep.subr.mxu0 0.0
    %2865 = vmatpush2.msra.mxu0 0.0
    %2866 = vmatprep.subr.mxu0 0.0
    %2867 = vmatpush2.msra.mxu0 0.0
    %2868 = vmatprep.subr.mxu0 0.0
    %2869 = vmatpush2.msra.mxu0 0.0
    %2870 = vmatprep.subr.mxu0 0.0
    %2871 = vmatpush2.msra.mxu0 0.0
    %2872 = vmatprep.subr.mxu0 0.0
    %2873 = vmatpush2.msra.mxu0 0.0
    %2874 = vmatprep.subr.mxu0 0.0
    %2875 = vmatpush2.msra.mxu0 0.0
    %2876 = vmatprep.subr.mxu0 0.0
    %2877 = vmatpush2.msra.mxu0 0.0
    %2878 = vmatprep.subr.mxu0 0.0
    %2879 = vmatpush2.msra.mxu0 0.0
    %2880 = vmatprep.subr.mxu0 0.0
    %2881 = vmatpush2.msra.mxu0 0.0
    %2882 = vmatprep.subr.mxu0 0.0
    %2883 = vmatpush2.msra.mxu0 0.0
    %2884 = vmatprep.subr.mxu0 0.0
    %2885 = vmatpush2.msra.mxu0 0.0
    %2886 = vmatprep.mubr.f32.mxu0 0.0
    %2887 = vmatmul.mubr.f32.gmra.mxu0 %v1295
    %v2888 = vpop.f32.mrf.mxu0
    %v2889 = vadd.f32 0.0, %v2888
    %v2890 = vpop.f32.mrf.mxu0
    %2891 = vmatprep.mubr.f32.mxu0 0.0
    %2892 = vmatmul.mubr.f32.gmra.mxu0 %v1298
    %v2893 = vpop.f32.mrf.mxu0
    %v2894 = vadd.f32 0.0, %v2893
    %v2895 = vpop.f32.mrf.mxu0
    %2896 = vmatprep.mubr.f32.mxu0 0.0
    %2897 = vmatmul.mubr.f32.gmra.mxu0 %v1301
    %v2898 = vpop.f32.mrf.mxu0
    %v2899 = vadd.f32 0.0, %v2898
    %v2900 = vpop.f32.mrf.mxu0
    %2901 = vmatprep.mubr.f32.mxu0 0.0
    %2902 = vmatmul.mubr.f32.gmra.mxu0 %v1304
    %v2903 = vpop.f32.mrf.mxu0
    %v2904 = vadd.f32 0.0, %v2903
    %v2905 = vpop.f32.mrf.mxu0
    %2906 = vmatprep.mubr.f32.mxu0 0.0
    %2907 = vmatmul.mubr.f32.gmra.mxu0 %v1307
    %v2908 = vpop.f32.mrf.mxu0
    %v2909 = vadd.f32 0.0, %v2908
    %v2910 = vpop.f32.mrf.mxu0
    %2911 = vmatprep.mubr.f32.mxu0 0.0
    %2912 = vmatmul.mubr.f32.gmra.mxu0 %v1310
    %v2913 = vpop.f32.mrf.mxu0
    %v2914 = vadd.f32 0.0, %v2913
    %v2915 = vpop.f32.mrf.mxu0
    %2916 = vmatprep.mubr.f32.mxu0 0.0
    %2917 = vmatmul.mubr.f32.gmra.mxu0 %v1313
    %v2918 = vpop.f32.mrf.mxu0
    %v2919 = vadd.f32 0.0, %v2918
    %v2920 = vpop.f32.mrf.mxu0
    %2921 = vdwg.mxu0
    %v2922 = vadd.f32 %v2812, %v2889
    %v2923 = vadd.f32 %v2813, %v2894
    %v2924 = vadd.f32 %v2814, %v2899
    %v2925 = vadd.f32 %v2815, %v2904
    %v2926 = vadd.f32 %v2816, %v2909
    %v2927 = vadd.f32 %v2817, %v2914
    %v2928 = vadd.f32 %v2818, %v2919
    %2935 = vrot.lane.b32.xlu0 %v1960, 64
    %v2936 = vpop.permute.xlu0 %2935
    %2937 = vrot.lane.b32.xlu0 %v1966, 64
    %v2938 = vpop.permute.xlu0 %2937
    %2939 = vrot.lane.b32.xlu0 %v1972, 64
    %v2940 = vpop.permute.xlu0 %2939
    %2941 = vrot.lane.b32.xlu0 %v1978, 64
    %v2942 = vpop.permute.xlu0 %2941
    %2943 = vrot.lane.b32.xlu0 %v1984, 64
    %v2944 = vpop.permute.xlu0 %2943
    %2945 = vrot.lane.b32.xlu0 %v1990, 64
    %v2946 = vpop.permute.xlu0 %2945
    %2947 = vrot.lane.b32.xlu0 %v1996, 64
    %v2948 = vpop.permute.xlu0 %2947
    %v2955 = vsel %vm421, %v2948, 0
    %2957 = vmatprep.subr.mxu0 0.0
    %2958 = vmatpush1.msra.mxu0 0.0
    %2959 = vmatprep.subr.mxu0 0.0
    %2960 = vmatpush1.msra.mxu0 0.0
    %2961 = vmatprep.subr.mxu0 0.0
    %2962 = vmatpush1.msra.mxu0 0.0
    %2963 = vmatprep.subr.mxu0 0.0
    %2964 = vmatpush1.msra.mxu0 0.0
    %2965 = vmatprep.subr.mxu0 0.0
    %2966 = vmatpush1.msra.mxu0 0.0
    %2967 = vmatprep.subr.mxu0 0.0
    %2968 = vmatpush1.msra.mxu0 0.0
    %2969 = vmatprep.subr.mxu0 0.0
    %2970 = vmatpush1.msra.mxu0 0.0
    %2971 = vmatprep.subr.mxu0 0.0
    %2972 = vmatpush1.msra.mxu0 0.0
    %2973 = vmatprep.subr.mxu0 0.0
    %2974 = vmatpush1.msra.mxu0 0.0
    %2975 = vmatprep.subr.mxu0 0.0
    %2976 = vmatpush1.msra.mxu0 %v2955
    %2977 = vmatprep.subr.mxu0 0.0
    %2978 = vmatpush1.msra.mxu0 %v2946
    %2979 = vmatprep.subr.mxu0 0.0
    %2980 = vmatpush1.msra.mxu0 %v2944
    %2981 = vmatprep.subr.mxu0 0.0
    %2982 = vmatpush1.msra.mxu0 %v2942
    %2983 = vmatprep.subr.mxu0 0.0
    %2984 = vmatpush1.msra.mxu0 %v2940
    %2985 = vmatprep.subr.mxu0 0.0
    %2986 = vmatpush1.msra.mxu0 %v2938
    %2987 = vmatprep.subr.mxu0 0.0
    %2988 = vmatpush1.msra.mxu0 %v2936
    %2989 = vmatprep.subr.mxu0 0.0
    %2990 = vmatpush2.msra.mxu0 0.0
    %2991 = vmatprep.subr.mxu0 0.0
    %2992 = vmatpush2.msra.mxu0 0.0
    %2993 = vmatprep.subr.mxu0 0.0
    %2994 = vmatpush2.msra.mxu0 0.0
    %2995 = vmatprep.subr.mxu0 0.0
    %2996 = vmatpush2.msra.mxu0 0.0
    %2997 = vmatprep.subr.mxu0 0.0
    %2998 = vmatpush2.msra.mxu0 0.0
    %2999 = vmatprep.subr.mxu0 0.0
    %3000 = vmatpush2.msra.mxu0 0.0
    %3001 = vmatprep.subr.mxu0 0.0
    %3002 = vmatpush2.msra.mxu0 0.0
    %3003 = vmatprep.subr.mxu0 0.0
    %3004 = vmatpush2.msra.mxu0 0.0
    %3005 = vmatprep.subr.mxu0 0.0
    %3006 = vmatpush2.msra.mxu0 0.0
    %3007 = vmatprep.subr.mxu0 0.0
    %3008 = vmatpush2.msra.mxu0 0.0
    %3009 = vmatprep.subr.mxu0 0.0
    %3010 = vmatpush2.msra.mxu0 0.0
    %3011 = vmatprep.subr.mxu0 0.0
    %3012 = vmatpush2.msra.mxu0 0.0
    %3013 = vmatprep.subr.mxu0 0.0
    %3014 = vmatpush2.msra.mxu0 0.0
    %3015 = vmatprep.subr.mxu0 0.0
    %3016 = vmatpush2.msra.mxu0 0.0
    %3017 = vmatprep.subr.mxu0 0.0
    %3018 = vmatpush2.msra.mxu0 0.0
    %3019 = vmatprep.subr.mxu0 0.0
    %3020 = vmatpush2.msra.mxu0 0.0
    %3021 = vmatprep.mubr.f32.mxu0 0.0
    %3022 = vmatmul.mubr.f32.gmra.mxu0 %v1453
    %v3023 = vpop.f32.mrf.mxu0
    %v3024 = vadd.f32 0.0, %v3023
    %v3025 = vpop.f32.mrf.mxu0
    %3026 = vmatprep.mubr.f32.mxu0 0.0
    %3027 = vmatmul.mubr.f32.gmra.mxu0 %v1456
    %v3028 = vpop.f32.mrf.mxu0
    %v3029 = vadd.f32 0.0, %v3028
    %v3030 = vpop.f32.mrf.mxu0
    %3031 = vmatprep.mubr.f32.mxu0 0.0
    %3032 = vmatmul.mubr.f32.gmra.mxu0 %v1459
    %v3033 = vpop.f32.mrf.mxu0
    %v3034 = vadd.f32 0.0, %v3033
    %v3035 = vpop.f32.mrf.mxu0
    %3036 = vmatprep.mubr.f32.mxu0 0.0
    %3037 = vmatmul.mubr.f32.gmra.mxu0 %v1462
    %v3038 = vpop.f32.mrf.mxu0
    %v3039 = vadd.f32 0.0, %v3038
    %v3040 = vpop.f32.mrf.mxu0
    %3041 = vmatprep.mubr.f32.mxu0 0.0
    %3042 = vmatmul.mubr.f32.gmra.mxu0 %v1465
    %v3043 = vpop.f32.mrf.mxu0
    %v3044 = vadd.f32 0.0, %v3043
    %v3045 = vpop.f32.mrf.mxu0
    %3046 = vmatprep.mubr.f32.mxu0 0.0
    %3047 = vmatmul.mubr.f32.gmra.mxu0 %v1468
    %v3048 = vpop.f32.mrf.mxu0
    %v3049 = vadd.f32 0.0, %v3048
    %v3050 = vpop.f32.mrf.mxu0
    %3051 = vmatprep.mubr.f32.mxu0 0.0
    %3052 = vmatmul.mubr.f32.gmra.mxu0 %v1471
    %v3053 = vpop.f32.mrf.mxu0
    %v3054 = vadd.f32 0.0, %v3053
    %v3055 = vpop.f32.mrf.mxu0
    %3056 = vdwg.mxu0
    %v3057 = vadd.f32 %v2922, %v3024
    %v3058 = vadd.f32 %v2923, %v3029
    %v3059 = vadd.f32 %v2924, %v3034
    %v3060 = vadd.f32 %v2925, %v3039
    %v3061 = vadd.f32 %v2926, %v3044
    %v3062 = vadd.f32 %v2927, %v3049
    %v3063 = vadd.f32 %v2928, %v3054
    %v3065 = vsel %vm421, %v2095, 0
    %3067 = vmatprep.subr.mxu0 0.0
    %3068 = vmatpush1.msra.mxu0 0.0
    %3069 = vmatprep.subr.mxu0 0.0
    %3070 = vmatpush1.msra.mxu0 0.0
    %3071 = vmatprep.subr.mxu0 0.0
    %3072 = vmatpush1.msra.mxu0 0.0
    %3073 = vmatprep.subr.mxu0 0.0
    %3074 = vmatpush1.msra.mxu0 0.0
    %3075 = vmatprep.subr.mxu0 0.0
    %3076 = vmatpush1.msra.mxu0 0.0
    %3077 = vmatprep.subr.mxu0 0.0
    %3078 = vmatpush1.msra.mxu0 0.0
    %3079 = vmatprep.subr.mxu0 0.0
    %3080 = vmatpush1.msra.mxu0 0.0
    %3081 = vmatprep.subr.mxu0 0.0
    %3082 = vmatpush1.msra.mxu0 0.0
    %3083 = vmatprep.subr.mxu0 0.0
    %3084 = vmatpush1.msra.mxu0 0.0
    %3085 = vmatprep.subr.mxu0 0.0
    %3086 = vmatpush1.msra.mxu0 %v3065
    %3087 = vmatprep.subr.mxu0 0.0
    %3088 = vmatpush1.msra.mxu0 %v2090
    %3089 = vmatprep.subr.mxu0 0.0
    %3090 = vmatpush1.msra.mxu0 %v2085
    %3091 = vmatprep.subr.mxu0 0.0
    %3092 = vmatpush1.msra.mxu0 %v2080
    %3093 = vmatprep.subr.mxu0 0.0
    %3094 = vmatpush1.msra.mxu0 %v2075
    %3095 = vmatprep.subr.mxu0 0.0
    %3096 = vmatpush1.msra.mxu0 %v2070
    %3097 = vmatprep.subr.mxu0 0.0
    %3098 = vmatpush1.msra.mxu0 %v2065
    %3099 = vmatprep.subr.mxu0 0.0
    %3100 = vmatpush2.msra.mxu0 0.0
    %3101 = vmatprep.subr.mxu0 0.0
    %3102 = vmatpush2.msra.mxu0 0.0
    %3103 = vmatprep.subr.mxu0 0.0
    %3104 = vmatpush2.msra.mxu0 0.0
    %3105 = vmatprep.subr.mxu0 0.0
    %3106 = vmatpush2.msra.mxu0 0.0
    %3107 = vmatprep.subr.mxu0 0.0
    %3108 = vmatpush2.msra.mxu0 0.0
    %3109 = vmatprep.subr.mxu0 0.0
    %3110 = vmatpush2.msra.mxu0 0.0
    %3111 = vmatprep.subr.mxu0 0.0
    %3112 = vmatpush2.msra.mxu0 0.0
    %3113 = vmatprep.subr.mxu0 0.0
    %3114 = vmatpush2.msra.mxu0 0.0
    %3115 = vmatprep.subr.mxu0 0.0
    %3116 = vmatpush2.msra.mxu0 0.0
    %3117 = vmatprep.subr.mxu0 0.0
    %3118 = vmatpush2.msra.mxu0 0.0
    %3119 = vmatprep.subr.mxu0 0.0
    %3120 = vmatpush2.msra.mxu0 0.0
    %3121 = vmatprep.subr.mxu0 0.0
    %3122 = vmatpush2.msra.mxu0 0.0
    %3123 = vmatprep.subr.mxu0 0.0
    %3124 = vmatpush2.msra.mxu0 0.0
    %3125 = vmatprep.subr.mxu0 0.0
    %3126 = vmatpush2.msra.mxu0 0.0
    %3127 = vmatprep.subr.mxu0 0.0
    %3128 = vmatpush2.msra.mxu0 0.0
    %3129 = vmatprep.subr.mxu0 0.0
    %3130 = vmatpush2.msra.mxu0 0.0
    %3131 = vmatprep.mubr.f32.mxu0 0.0
    %3132 = vmatmul.mubr.f32.gmra.mxu0 %v1591
    %v3133 = vpop.f32.mrf.mxu0
    %v3134 = vadd.f32 0.0, %v3133
    %v3135 = vpop.f32.mrf.mxu0
    %3136 = vmatprep.mubr.f32.mxu0 0.0
    %3137 = vmatmul.mubr.f32.gmra.mxu0 %v1594
    %v3138 = vpop.f32.mrf.mxu0
    %v3139 = vadd.f32 0.0, %v3138
    %v3140 = vpop.f32.mrf.mxu0
    %3141 = vmatprep.mubr.f32.mxu0 0.0
    %3142 = vmatmul.mubr.f32.gmra.mxu0 %v1597
    %v3143 = vpop.f32.mrf.mxu0
    %v3144 = vadd.f32 0.0, %v3143
    %v3145 = vpop.f32.mrf.mxu0
    %3146 = vmatprep.mubr.f32.mxu0 0.0
    %3147 = vmatmul.mubr.f32.gmra.mxu0 %v1600
    %v3148 = vpop.f32.mrf.mxu0
    %v3149 = vadd.f32 0.0, %v3148
    %v3150 = vpop.f32.mrf.mxu0
    %3151 = vmatprep.mubr.f32.mxu0 0.0
    %3152 = vmatmul.mubr.f32.gmra.mxu0 %v1603
    %v3153 = vpop.f32.mrf.mxu0
    %v3154 = vadd.f32 0.0, %v3153
    %v3155 = vpop.f32.mrf.mxu0
    %3156 = vmatprep.mubr.f32.mxu0 0.0
    %3157 = vmatmul.mubr.f32.gmra.mxu0 %v1606
    %v3158 = vpop.f32.mrf.mxu0
    %v3159 = vadd.f32 0.0, %v3158
    %v3160 = vpop.f32.mrf.mxu0
    %3161 = vmatprep.mubr.f32.mxu0 0.0
    %3162 = vmatmul.mubr.f32.gmra.mxu0 %v1609
    %v3163 = vpop.f32.mrf.mxu0
    %v3164 = vadd.f32 0.0, %v3163
    %v3165 = vpop.f32.mrf.mxu0
    %3166 = vdwg.mxu0
    %v3167 = vadd.f32 %v3057, %v3134
    %v3168 = vadd.f32 %v3058, %v3139
    %v3169 = vadd.f32 %v3059, %v3144
    %v3170 = vadd.f32 %v3060, %v3149
    %v3171 = vadd.f32 %v3061, %v3154
    %v3172 = vadd.f32 %v3062, %v3159
    %v3173 = vadd.f32 %v3063, %v3164
    %v3174 = vld [vmem:[%s6] sm:$0x1]
    %v3176 = vlaneseq
    %v3177 = vshrl.u32 %v3176, 7
    %v3178 = vsub.s32 0, %v3177
    %v3179 = vrot.slane %v3174, %v3178
    %v3181 = vadd.f32 %v3167, %v3179
    %v3182 = vadd.f32 %v3168, %v3179
    %v3183 = vadd.f32 %v3169, %v3179
    %v3184 = vadd.f32 %v3170, %v3179
    %v3185 = vadd.f32 %v3171, %v3179
    %v3186 = vadd.f32 %v3172, %v3179
    %v3187 = vadd.f32 %v3173, %v3179
    %v3188 = vmax.f32 %v3181, 0.0
    %v3189 = vmax.f32 %v3182, 0.0
    %v3190 = vmax.f32 %v3183, 0.0
    %v3191 = vmax.f32 %v3184, 0.0
    %v3192 = vmax.f32 %v3185, 0.0
    %v3193 = vmax.f32 %v3186, 0.0
    %v3194 = vmax.f32 %v3187, 0.0
    %v3195 = vld [vmem:[#allocation4] sm:$0xff]
    %v3196 = vld [vmem:[#allocation4 + $0x8] sm:$0xff]
    %v3197 = vld [vmem:[#allocation4 + $0x10] sm:$0xff]
    %v3198 = vld [vmem:[#allocation4 + $0x18] sm:$0xff]
    %v3199 = vld [vmem:[#allocation4 + $0x20] sm:$0xff]
    %v3200 = vld [vmem:[#allocation4 + $0x28] sm:$0xff]
    %v3201 = vld [vmem:[#allocation4 + $0x30] sm:$0xff]
    %v3202 = vld [vmem:[#allocation4 + $0x38] sm:$0xff]
    %v3203 = vld [vmem:[#allocation4 + $0x40] sm:$0xff]
    %v3204 = vld [vmem:[#allocation4 + $0x48] sm:$0xff]
    %v3205 = vld [vmem:[#allocation4 + $0x50] sm:$0xff]
    %v3206 = vld [vmem:[#allocation4 + $0x58] sm:$0xff]
    %v3207 = vld [vmem:[#allocation4 + $0x60] sm:$0xff]
    %v3208 = vld [vmem:[#allocation4 + $0x68] sm:$0xff]
    %v3209 = vld [vmem:[#allocation4 + $0x70] sm:$0xff]
    %v3210 = vld [vmem:[#allocation4 + $0x78] sm:$0xff]
    %v3211 = vld [vmem:[#allocation4 + $0x80] sm:$0xff]
    %v3212 = vld [vmem:[#allocation4 + $0x88] sm:$0xff]
    %v3213 = vld [vmem:[#allocation4 + $0x90] sm:$0xff]
    %v3214 = vld [vmem:[#allocation4 + $0x98] sm:$0xff]
    %v3215 = vld [vmem:[#allocation4 + $0xa0] sm:$0xff]
    %v3216 = vld [vmem:[#allocation4 + $0xa8] sm:$0xff]
    %v3217 = vld [vmem:[#allocation4 + $0xb0] sm:$0xff]
    %v3218 = vld [vmem:[#allocation4 + $0xb8] sm:$0xff]
    %v3219 = vld [vmem:[#allocation4 + $0xc0] sm:$0xff]
    %v3220 = vld [vmem:[#allocation4 + $0xc8] sm:$0xff]
    %v3221 = vld [vmem:[#allocation4 + $0xd0] sm:$0xff]
    %v3222 = vld [vmem:[#allocation4 + $0xd8] sm:$0xff]
    %v3223 = vld [vmem:[#allocation4 + $0xe0] sm:$0xff]
    %v3224 = vld [vmem:[#allocation4 + $0xe8] sm:$0xff]
    %v3225 = vld [vmem:[#allocation4 + $0xf0] sm:$0xff]
    %v3226 = vld [vmem:[#allocation4 + $0xf8] sm:$0xff]
    %v3227 = vld [vmem:[#allocation4 + $0x100] sm:$0xff]
    %v3228 = vld [vmem:[#allocation4 + $0x108] sm:$0xff]
    %v3229 = vld [vmem:[#allocation4 + $0x110] sm:$0xff]
    %v3230 = vld [vmem:[#allocation4 + $0x118] sm:$0xff]
    %v3231 = vld [vmem:[#allocation4 + $0x120] sm:$0xff]
    %v3232 = vld [vmem:[#allocation4 + $0x128] sm:$0xff]
    %v3233 = vld [vmem:[#allocation4 + $0x130] sm:$0xff]
    %v3234 = vld [vmem:[#allocation4 + $0x138] sm:$0xff]
    %vm3235 = vcmask 523264
    %v3237 = vsel %vm3235, %v3188, 0
    %v3240 = vsel %vm3235, %v3189, 0
    %v3243 = vsel %vm3235, %v3190, 0
    %v3246 = vsel %vm3235, %v3191, 0
    %v3249 = vsel %vm3235, %v3192, 0
    %v3252 = vsel %vm3235, %v3193, 0
    %v3255 = vsel %vm3235, %v3194, 0
    %3257 = vmatprep.subr.mxu0 0.0
    %3258 = vmatpush1.msra.mxu0 0.0
    %3259 = vmatprep.subr.mxu0 0.0
    %3260 = vmatpush1.msra.mxu0 0.0
    %3261 = vmatprep.subr.mxu0 0.0
    %3262 = vmatpush1.msra.mxu0 0.0
    %3263 = vmatprep.subr.mxu0 0.0
    %3264 = vmatpush1.msra.mxu0 0.0
    %3265 = vmatprep.subr.mxu0 0.0
    %3266 = vmatpush1.msra.mxu0 0.0
    %3267 = vmatprep.subr.mxu0 0.0
    %3268 = vmatpush1.msra.mxu0 0.0
    %3269 = vmatprep.subr.mxu0 0.0
    %3270 = vmatpush1.msra.mxu0 0.0
    %3271 = vmatprep.subr.mxu0 0.0
    %3272 = vmatpush1.msra.mxu0 0.0
    %3273 = vmatprep.subr.mxu0 %v3231
    %3274 = vmatpush1.msra.mxu0 %v3230
    %3275 = vmatprep.subr.mxu0 %v3226
    %3276 = vmatpush1.msra.mxu0 %v3225
    %3277 = vmatprep.subr.mxu0 %v3221
    %3278 = vmatpush1.msra.mxu0 %v3220
    %3279 = vmatprep.subr.mxu0 %v3216
    %3280 = vmatpush1.msra.mxu0 %v3215
    %3281 = vmatprep.subr.mxu0 %v3211
    %3282 = vmatpush1.msra.mxu0 %v3210
    %3283 = vmatprep.subr.mxu0 %v3206
    %3284 = vmatpush1.msra.mxu0 %v3205
    %3285 = vmatprep.subr.mxu0 %v3201
    %3286 = vmatpush1.msra.mxu0 %v3200
    %3287 = vmatprep.subr.mxu0 %v3196
    %3288 = vmatpush1.msra.mxu0 %v3195
    %3289 = vmatprep.subr.mxu0 0.0
    %3290 = vmatpush2.msra.mxu0 0.0
    %3291 = vmatprep.subr.mxu0 0.0
    %3292 = vmatpush2.msra.mxu0 0.0
    %3293 = vmatprep.subr.mxu0 0.0
    %3294 = vmatpush2.msra.mxu0 0.0
    %3295 = vmatprep.subr.mxu0 0.0
    %3296 = vmatpush2.msra.mxu0 0.0
    %3297 = vmatprep.subr.mxu0 0.0
    %3298 = vmatpush2.msra.mxu0 0.0
    %3299 = vmatprep.subr.mxu0 0.0
    %3300 = vmatpush2.msra.mxu0 0.0
    %3301 = vmatprep.subr.mxu0 0.0
    %3302 = vmatpush2.msra.mxu0 0.0
    %3303 = vmatprep.subr.mxu0 0.0
    %3304 = vmatpush2.msra.mxu0 0.0
    %3305 = vmatprep.subr.mxu0 0.0
    %3306 = vmatpush2.msra.mxu0 0.0
    %3307 = vmatprep.subr.mxu0 0.0
    %3308 = vmatpush2.msra.mxu0 0.0
    %3309 = vmatprep.subr.mxu0 0.0
    %3310 = vmatpush2.msra.mxu0 0.0
    %3311 = vmatprep.subr.mxu0 0.0
    %3312 = vmatpush2.msra.mxu0 0.0
    %3313 = vmatprep.subr.mxu0 0.0
    %3314 = vmatpush2.msra.mxu0 0.0
    %3315 = vmatprep.subr.mxu0 0.0
    %3316 = vmatpush2.msra.mxu0 0.0
    %3317 = vmatprep.subr.mxu0 0.0
    %3318 = vmatpush2.msra.mxu0 0.0
    %3319 = vmatprep.subr.mxu0 0.0
    %3320 = vmatpush2.msra.mxu0 0.0
    %3321 = vmatprep.mubr.f32.mxu0 0.0
    %3322 = vmatmul.mubr.f32.gmra.mxu0 %v3237
    %v3323 = vpop.f32.mrf.mxu0
    %v3324 = vadd.f32 0.0, %v3323
    %v3325 = vpop.f32.mrf.mxu0
    %v3326 = vadd.f32 0.0, %v3325
    %3327 = vmatprep.mubr.f32.mxu0 0.0
    %3328 = vmatmul.mubr.f32.gmra.mxu0 %v3240
    %v3329 = vpop.f32.mrf.mxu0
    %v3330 = vadd.f32 0.0, %v3329
    %v3331 = vpop.f32.mrf.mxu0
    %v3332 = vadd.f32 0.0, %v3331
    %3333 = vmatprep.mubr.f32.mxu0 0.0
    %3334 = vmatmul.mubr.f32.gmra.mxu0 %v3243
    %v3335 = vpop.f32.mrf.mxu0
    %v3336 = vadd.f32 0.0, %v3335
    %v3337 = vpop.f32.mrf.mxu0
    %v3338 = vadd.f32 0.0, %v3337
    %3339 = vmatprep.mubr.f32.mxu0 0.0
    %3340 = vmatmul.mubr.f32.gmra.mxu0 %v3246
    %v3341 = vpop.f32.mrf.mxu0
    %v3342 = vadd.f32 0.0, %v3341
    %v3343 = vpop.f32.mrf.mxu0
    %v3344 = vadd.f32 0.0, %v3343
    %3345 = vmatprep.mubr.f32.mxu0 0.0
    %3346 = vmatmul.mubr.f32.gmra.mxu0 %v3249
    %v3347 = vpop.f32.mrf.mxu0
    %v3348 = vadd.f32 0.0, %v3347
    %v3349 = vpop.f32.mrf.mxu0
    %v3350 = vadd.f32 0.0, %v3349
    %3351 = vmatprep.mubr.f32.mxu0 0.0
    %3352 = vmatmul.mubr.f32.gmra.mxu0 %v3252
    %v3353 = vpop.f32.mrf.mxu0
    %v3354 = vadd.f32 0.0, %v3353
    %v3355 = vpop.f32.mrf.mxu0
    %v3356 = vadd.f32 0.0, %v3355
    %3357 = vmatprep.mubr.f32.mxu0 0.0
    %3358 = vmatmul.mubr.f32.gmra.mxu0 %v3255
    %v3359 = vpop.f32.mrf.mxu0
    %v3360 = vadd.f32 0.0, %v3359
    %v3361 = vpop.f32.mrf.mxu0
    %v3362 = vadd.f32 0.0, %v3361
    %3363 = vdwg.mxu0
    %3364 = vmatprep.subr.mxu0 0.0
    %3365 = vmatpush1.msra.mxu0 0.0
    %3366 = vmatprep.subr.mxu0 0.0
    %3367 = vmatpush1.msra.mxu0 0.0
    %3368 = vmatprep.subr.mxu0 0.0
    %3369 = vmatpush1.msra.mxu0 0.0
    %3370 = vmatprep.subr.mxu0 0.0
    %3371 = vmatpush1.msra.mxu0 0.0
    %3372 = vmatprep.subr.mxu0 0.0
    %3373 = vmatpush1.msra.mxu0 0.0
    %3374 = vmatprep.subr.mxu0 0.0
    %3375 = vmatpush1.msra.mxu0 0.0
    %3376 = vmatprep.subr.mxu0 0.0
    %3377 = vmatpush1.msra.mxu0 0.0
    %3378 = vmatprep.subr.mxu0 0.0
    %3379 = vmatpush1.msra.mxu0 0.0
    %3380 = vmatprep.subr.mxu0 %v3233
    %3381 = vmatpush1.msra.mxu0 %v3232
    %3382 = vmatprep.subr.mxu0 %v3228
    %3383 = vmatpush1.msra.mxu0 %v3227
    %3384 = vmatprep.subr.mxu0 %v3223
    %3385 = vmatpush1.msra.mxu0 %v3222
    %3386 = vmatprep.subr.mxu0 %v3218
    %3387 = vmatpush1.msra.mxu0 %v3217
    %3388 = vmatprep.subr.mxu0 %v3213
    %3389 = vmatpush1.msra.mxu0 %v3212
    %3390 = vmatprep.subr.mxu0 %v3208
    %3391 = vmatpush1.msra.mxu0 %v3207
    %3392 = vmatprep.subr.mxu0 %v3203
    %3393 = vmatpush1.msra.mxu0 %v3202
    %3394 = vmatprep.subr.mxu0 %v3198
    %3395 = vmatpush1.msra.mxu0 %v3197
    %3396 = vmatprep.subr.mxu0 0.0
    %3397 = vmatpush2.msra.mxu0 0.0
    %3398 = vmatprep.subr.mxu0 0.0
    %3399 = vmatpush2.msra.mxu0 0.0
    %3400 = vmatprep.subr.mxu0 0.0
    %3401 = vmatpush2.msra.mxu0 0.0
    %3402 = vmatprep.subr.mxu0 0.0
    %3403 = vmatpush2.msra.mxu0 0.0
    %3404 = vmatprep.subr.mxu0 0.0
    %3405 = vmatpush2.msra.mxu0 0.0
    %3406 = vmatprep.subr.mxu0 0.0
    %3407 = vmatpush2.msra.mxu0 0.0
    %3408 = vmatprep.subr.mxu0 0.0
    %3409 = vmatpush2.msra.mxu0 0.0
    %3410 = vmatprep.subr.mxu0 0.0
    %3411 = vmatpush2.msra.mxu0 0.0
    %3412 = vmatprep.subr.mxu0 0.0
    %3413 = vmatpush2.msra.mxu0 0.0
    %3414 = vmatprep.subr.mxu0 0.0
    %3415 = vmatpush2.msra.mxu0 0.0
    %3416 = vmatprep.subr.mxu0 0.0
    %3417 = vmatpush2.msra.mxu0 0.0
    %3418 = vmatprep.subr.mxu0 0.0
    %3419 = vmatpush2.msra.mxu0 0.0
    %3420 = vmatprep.subr.mxu0 0.0
    %3421 = vmatpush2.msra.mxu0 0.0
    %3422 = vmatprep.subr.mxu0 0.0
    %3423 = vmatpush2.msra.mxu0 0.0
    %3424 = vmatprep.subr.mxu0 0.0
    %3425 = vmatpush2.msra.mxu0 0.0
    %3426 = vmatprep.subr.mxu0 0.0
    %3427 = vmatpush2.msra.mxu0 0.0
    %3428 = vmatprep.mubr.f32.mxu0 0.0
    %3429 = vmatmul.mubr.f32.gmra.mxu0 %v3237
    %v3430 = vpop.f32.mrf.mxu0
    %v3431 = vadd.f32 0.0, %v3430
    %v3432 = vpop.f32.mrf.mxu0
    %v3433 = vadd.f32 0.0, %v3432
    %3434 = vmatprep.mubr.f32.mxu0 0.0
    %3435 = vmatmul.mubr.f32.gmra.mxu0 %v3240
    %v3436 = vpop.f32.mrf.mxu0
    %v3437 = vadd.f32 0.0, %v3436
    %v3438 = vpop.f32.mrf.mxu0
    %v3439 = vadd.f32 0.0, %v3438
    %3440 = vmatprep.mubr.f32.mxu0 0.0
    %3441 = vmatmul.mubr.f32.gmra.mxu0 %v3243
    %v3442 = vpop.f32.mrf.mxu0
    %v3443 = vadd.f32 0.0, %v3442
    %v3444 = vpop.f32.mrf.mxu0
    %v3445 = vadd.f32 0.0, %v3444
    %3446 = vmatprep.mubr.f32.mxu0 0.0
    %3447 = vmatmul.mubr.f32.gmra.mxu0 %v3246
    %v3448 = vpop.f32.mrf.mxu0
    %v3449 = vadd.f32 0.0, %v3448
    %v3450 = vpop.f32.mrf.mxu0
    %v3451 = vadd.f32 0.0, %v3450
    %3452 = vmatprep.mubr.f32.mxu0 0.0
    %3453 = vmatmul.mubr.f32.gmra.mxu0 %v3249
    %v3454 = vpop.f32.mrf.mxu0
    %v3455 = vadd.f32 0.0, %v3454
    %v3456 = vpop.f32.mrf.mxu0
    %v3457 = vadd.f32 0.0, %v3456
    %3458 = vmatprep.mubr.f32.mxu0 0.0
    %3459 = vmatmul.mubr.f32.gmra.mxu0 %v3252
    %v3460 = vpop.f32.mrf.mxu0
    %v3461 = vadd.f32 0.0, %v3460
    %v3462 = vpop.f32.mrf.mxu0
    %v3463 = vadd.f32 0.0, %v3462
    %3464 = vmatprep.mubr.f32.mxu0 0.0
    %3465 = vmatmul.mubr.f32.gmra.mxu0 %v3255
    %v3466 = vpop.f32.mrf.mxu0
    %v3467 = vadd.f32 0.0, %v3466
    %v3468 = vpop.f32.mrf.mxu0
    %v3469 = vadd.f32 0.0, %v3468
    %3470 = vdwg.mxu0
    %3471 = vmatprep.subr.mxu0 0.0
    %3472 = vmatpush1.msra.mxu0 0.0
    %3473 = vmatprep.subr.mxu0 0.0
    %3474 = vmatpush1.msra.mxu0 0.0
    %3475 = vmatprep.subr.mxu0 0.0
    %3476 = vmatpush1.msra.mxu0 0.0
    %3477 = vmatprep.subr.mxu0 0.0
    %3478 = vmatpush1.msra.mxu0 0.0
    %3479 = vmatprep.subr.mxu0 0.0
    %3480 = vmatpush1.msra.mxu0 0.0
    %3481 = vmatprep.subr.mxu0 0.0
    %3482 = vmatpush1.msra.mxu0 0.0
    %3483 = vmatprep.subr.mxu0 0.0
    %3484 = vmatpush1.msra.mxu0 0.0
    %3485 = vmatprep.subr.mxu0 0.0
    %3486 = vmatpush1.msra.mxu0 0.0
    %3487 = vmatprep.subr.mxu0 0.0
    %3488 = vmatpush1.msra.mxu0 %v3234
    %3489 = vmatprep.subr.mxu0 0.0
    %3490 = vmatpush1.msra.mxu0 %v3229
    %3491 = vmatprep.subr.mxu0 0.0
    %3492 = vmatpush1.msra.mxu0 %v3224
    %3493 = vmatprep.subr.mxu0 0.0
    %3494 = vmatpush1.msra.mxu0 %v3219
    %3495 = vmatprep.subr.mxu0 0.0
    %3496 = vmatpush1.msra.mxu0 %v3214
    %3497 = vmatprep.subr.mxu0 0.0
    %3498 = vmatpush1.msra.mxu0 %v3209
    %3499 = vmatprep.subr.mxu0 0.0
    %3500 = vmatpush1.msra.mxu0 %v3204
    %3501 = vmatprep.subr.mxu0 0.0
    %3502 = vmatpush1.msra.mxu0 %v3199
    %3503 = vmatprep.subr.mxu0 0.0
    %3504 = vmatpush2.msra.mxu0 0.0
    %3505 = vmatprep.subr.mxu0 0.0
    %3506 = vmatpush2.msra.mxu0 0.0
    %3507 = vmatprep.subr.mxu0 0.0
    %3508 = vmatpush2.msra.mxu0 0.0
    %3509 = vmatprep.subr.mxu0 0.0
    %3510 = vmatpush2.msra.mxu0 0.0
    %3511 = vmatprep.subr.mxu0 0.0
    %3512 = vmatpush2.msra.mxu0 0.0
    %3513 = vmatprep.subr.mxu0 0.0
    %3514 = vmatpush2.msra.mxu0 0.0
    %3515 = vmatprep.subr.mxu0 0.0
    %3516 = vmatpush2.msra.mxu0 0.0
    %3517 = vmatprep.subr.mxu0 0.0
    %3518 = vmatpush2.msra.mxu0 0.0
    %3519 = vmatprep.subr.mxu0 0.0
    %3520 = vmatpush2.msra.mxu0 0.0
    %3521 = vmatprep.subr.mxu0 0.0
    %3522 = vmatpush2.msra.mxu0 0.0
    %3523 = vmatprep.subr.mxu0 0.0
    %3524 = vmatpush2.msra.mxu0 0.0
    %3525 = vmatprep.subr.mxu0 0.0
    %3526 = vmatpush2.msra.mxu0 0.0
    %3527 = vmatprep.subr.mxu0 0.0
    %3528 = vmatpush2.msra.mxu0 0.0
    %3529 = vmatprep.subr.mxu0 0.0
    %3530 = vmatpush2.msra.mxu0 0.0
    %3531 = vmatprep.subr.mxu0 0.0
    %3532 = vmatpush2.msra.mxu0 0.0
    %3533 = vmatprep.subr.mxu0 0.0
    %3534 = vmatpush2.msra.mxu0 0.0
    %3535 = vmatprep.mubr.f32.mxu0 0.0
    %3536 = vmatmul.mubr.f32.gmra.mxu0 %v3237
    %v3537 = vpop.f32.mrf.mxu0
    %v3538 = vadd.f32 0.0, %v3537
    %v3539 = vpop.f32.mrf.mxu0
    %3540 = vmatprep.mubr.f32.mxu0 0.0
    %3541 = vmatmul.mubr.f32.gmra.mxu0 %v3240
    %v3542 = vpop.f32.mrf.mxu0
    %v3543 = vadd.f32 0.0, %v3542
    %v3544 = vpop.f32.mrf.mxu0
    %3545 = vmatprep.mubr.f32.mxu0 0.0
    %3546 = vmatmul.mubr.f32.gmra.mxu0 %v3243
    %v3547 = vpop.f32.mrf.mxu0
    %v3548 = vadd.f32 0.0, %v3547
    %v3549 = vpop.f32.mrf.mxu0
    %3550 = vmatprep.mubr.f32.mxu0 0.0
    %3551 = vmatmul.mubr.f32.gmra.mxu0 %v3246
    %v3552 = vpop.f32.mrf.mxu0
    %v3553 = vadd.f32 0.0, %v3552
    %v3554 = vpop.f32.mrf.mxu0
    %3555 = vmatprep.mubr.f32.mxu0 0.0
    %3556 = vmatmul.mubr.f32.gmra.mxu0 %v3249
    %v3557 = vpop.f32.mrf.mxu0
    %v3558 = vadd.f32 0.0, %v3557
    %v3559 = vpop.f32.mrf.mxu0
    %3560 = vmatprep.mubr.f32.mxu0 0.0
    %3561 = vmatmul.mubr.f32.gmra.mxu0 %v3252
    %v3562 = vpop.f32.mrf.mxu0
    %v3563 = vadd.f32 0.0, %v3562
    %v3564 = vpop.f32.mrf.mxu0
    %3565 = vmatprep.mubr.f32.mxu0 0.0
    %3566 = vmatmul.mubr.f32.gmra.mxu0 %v3255
    %v3567 = vpop.f32.mrf.mxu0
    %v3568 = vadd.f32 0.0, %v3567
    %v3569 = vpop.f32.mrf.mxu0
    %3570 = vdwg.mxu0
    %3578 = vrot.lane.b32.xlu0 %v3324, 64
    %v3579 = vpop.permute.xlu0 %3578
    %3580 = vrot.lane.b32.xlu0 %v3330, 64
    %v3581 = vpop.permute.xlu0 %3580
    %3582 = vrot.lane.b32.xlu0 %v3336, 64
    %v3583 = vpop.permute.xlu0 %3582
    %3584 = vrot.lane.b32.xlu0 %v3342, 64
    %v3585 = vpop.permute.xlu0 %3584
    %3586 = vrot.lane.b32.xlu0 %v3348, 64
    %v3587 = vpop.permute.xlu0 %3586
    %3588 = vrot.lane.b32.xlu0 %v3354, 64
    %v3589 = vpop.permute.xlu0 %3588
    %3590 = vrot.lane.b32.xlu0 %v3360, 64
    %v3591 = vpop.permute.xlu0 %3590
    %v3598 = vsel %vm421, %v3591, 0
    %3600 = vmatprep.subr.mxu0 0.0
    %3601 = vmatpush1.msra.mxu0 0.0
    %3602 = vmatprep.subr.mxu0 0.0
    %3603 = vmatpush1.msra.mxu0 0.0
    %3604 = vmatprep.subr.mxu0 0.0
    %3605 = vmatpush1.msra.mxu0 0.0
    %3606 = vmatprep.subr.mxu0 0.0
    %3607 = vmatpush1.msra.mxu0 0.0
    %3608 = vmatprep.subr.mxu0 0.0
    %3609 = vmatpush1.msra.mxu0 0.0
    %3610 = vmatprep.subr.mxu0 0.0
    %3611 = vmatpush1.msra.mxu0 0.0
    %3612 = vmatprep.subr.mxu0 0.0
    %3613 = vmatpush1.msra.mxu0 0.0
    %3614 = vmatprep.subr.mxu0 0.0
    %3615 = vmatpush1.msra.mxu0 0.0
    %3616 = vmatprep.subr.mxu0 0.0
    %3617 = vmatpush1.msra.mxu0 0.0
    %3618 = vmatprep.subr.mxu0 0.0
    %3619 = vmatpush1.msra.mxu0 %v3598
    %3620 = vmatprep.subr.mxu0 0.0
    %3621 = vmatpush1.msra.mxu0 %v3589
    %3622 = vmatprep.subr.mxu0 0.0
    %3623 = vmatpush1.msra.mxu0 %v3587
    %3624 = vmatprep.subr.mxu0 0.0
    %3625 = vmatpush1.msra.mxu0 %v3585
    %3626 = vmatprep.subr.mxu0 0.0
    %3627 = vmatpush1.msra.mxu0 %v3583
    %3628 = vmatprep.subr.mxu0 0.0
    %3629 = vmatpush1.msra.mxu0 %v3581
    %3630 = vmatprep.subr.mxu0 0.0
    %3631 = vmatpush1.msra.mxu0 %v3579
    %3632 = vmatprep.subr.mxu0 0.0
    %3633 = vmatpush2.msra.mxu0 0.0
    %3634 = vmatprep.subr.mxu0 0.0
    %3635 = vmatpush2.msra.mxu0 0.0
    %3636 = vmatprep.subr.mxu0 0.0
    %3637 = vmatpush2.msra.mxu0 0.0
    %3638 = vmatprep.subr.mxu0 0.0
    %3639 = vmatpush2.msra.mxu0 0.0
    %3640 = vmatprep.subr.mxu0 0.0
    %3641 = vmatpush2.msra.mxu0 0.0
    %3642 = vmatprep.subr.mxu0 0.0
    %3643 = vmatpush2.msra.mxu0 0.0
    %3644 = vmatprep.subr.mxu0 0.0
    %3645 = vmatpush2.msra.mxu0 0.0
    %3646 = vmatprep.subr.mxu0 0.0
    %3647 = vmatpush2.msra.mxu0 0.0
    %3648 = vmatprep.subr.mxu0 0.0
    %3649 = vmatpush2.msra.mxu0 0.0
    %3650 = vmatprep.subr.mxu0 0.0
    %3651 = vmatpush2.msra.mxu0 0.0
    %3652 = vmatprep.subr.mxu0 0.0
    %3653 = vmatpush2.msra.mxu0 0.0
    %3654 = vmatprep.subr.mxu0 0.0
    %3655 = vmatpush2.msra.mxu0 0.0
    %3656 = vmatprep.subr.mxu0 0.0
    %3657 = vmatpush2.msra.mxu0 0.0
    %3658 = vmatprep.subr.mxu0 0.0
    %3659 = vmatpush2.msra.mxu0 0.0
    %3660 = vmatprep.subr.mxu0 0.0
    %3661 = vmatpush2.msra.mxu0 0.0
    %3662 = vmatprep.subr.mxu0 0.0
    %3663 = vmatpush2.msra.mxu0 0.0
    %3664 = vmatprep.mubr.f32.mxu0 0.0
    %3665 = vmatmul.mubr.f32.gmra.mxu0 %v401
    %v3666 = vpop.f32.mrf.mxu0
    %v3667 = vadd.f32 0.0, %v3666
    %v3668 = vpop.f32.mrf.mxu0
    %3669 = vmatprep.mubr.f32.mxu0 0.0
    %3670 = vmatmul.mubr.f32.gmra.mxu0 %v404
    %v3671 = vpop.f32.mrf.mxu0
    %v3672 = vadd.f32 0.0, %v3671
    %v3673 = vpop.f32.mrf.mxu0
    %3674 = vmatprep.mubr.f32.mxu0 0.0
    %3675 = vmatmul.mubr.f32.gmra.mxu0 %v407
    %v3676 = vpop.f32.mrf.mxu0
    %v3677 = vadd.f32 0.0, %v3676
    %v3678 = vpop.f32.mrf.mxu0
    %3679 = vmatprep.mubr.f32.mxu0 0.0
    %3680 = vmatmul.mubr.f32.gmra.mxu0 %v410
    %v3681 = vpop.f32.mrf.mxu0
    %v3682 = vadd.f32 0.0, %v3681
    %v3683 = vpop.f32.mrf.mxu0
    %3684 = vmatprep.mubr.f32.mxu0 0.0
    %3685 = vmatmul.mubr.f32.gmra.mxu0 %v413
    %v3686 = vpop.f32.mrf.mxu0
    %v3687 = vadd.f32 0.0, %v3686
    %v3688 = vpop.f32.mrf.mxu0
    %3689 = vmatprep.mubr.f32.mxu0 0.0
    %3690 = vmatmul.mubr.f32.gmra.mxu0 %v416
    %v3691 = vpop.f32.mrf.mxu0
    %v3692 = vadd.f32 0.0, %v3691
    %v3693 = vpop.f32.mrf.mxu0
    %3694 = vmatprep.mubr.f32.mxu0 0.0
    %3695 = vmatmul.mubr.f32.gmra.mxu0 %v419
    %v3696 = vpop.f32.mrf.mxu0
    %v3697 = vadd.f32 0.0, %v3696
    %v3698 = vpop.f32.mrf.mxu0
    %3699 = vdwg.mxu0
    %v3700 = vsel %vm421, %v3360, 0
    %3702 = vmatprep.subr.mxu0 0.0
    %3703 = vmatpush1.msra.mxu0 0.0
    %3704 = vmatprep.subr.mxu0 0.0
    %3705 = vmatpush1.msra.mxu0 0.0
    %3706 = vmatprep.subr.mxu0 0.0
    %3707 = vmatpush1.msra.mxu0 0.0
    %3708 = vmatprep.subr.mxu0 0.0
    %3709 = vmatpush1.msra.mxu0 0.0
    %3710 = vmatprep.subr.mxu0 0.0
    %3711 = vmatpush1.msra.mxu0 0.0
    %3712 = vmatprep.subr.mxu0 0.0
    %3713 = vmatpush1.msra.mxu0 0.0
    %3714 = vmatprep.subr.mxu0 0.0
    %3715 = vmatpush1.msra.mxu0 0.0
    %3716 = vmatprep.subr.mxu0 0.0
    %3717 = vmatpush1.msra.mxu0 0.0
    %3718 = vmatprep.subr.mxu0 0.0
    %3719 = vmatpush1.msra.mxu0 0.0
    %3720 = vmatprep.subr.mxu0 0.0
    %3721 = vmatpush1.msra.mxu0 %v3700
    %3722 = vmatprep.subr.mxu0 0.0
    %3723 = vmatpush1.msra.mxu0 %v3354
    %3724 = vmatprep.subr.mxu0 0.0
    %3725 = vmatpush1.msra.mxu0 %v3348
    %3726 = vmatprep.subr.mxu0 0.0
    %3727 = vmatpush1.msra.mxu0 %v3342
    %3728 = vmatprep.subr.mxu0 0.0
    %3729 = vmatpush1.msra.mxu0 %v3336
    %3730 = vmatprep.subr.mxu0 0.0
    %3731 = vmatpush1.msra.mxu0 %v3330
    %3732 = vmatprep.subr.mxu0 0.0
    %3733 = vmatpush1.msra.mxu0 %v3324
    %3734 = vmatprep.subr.mxu0 0.0
    %3735 = vmatpush2.msra.mxu0 0.0
    %3736 = vmatprep.subr.mxu0 0.0
    %3737 = vmatpush2.msra.mxu0 0.0
    %3738 = vmatprep.subr.mxu0 0.0
    %3739 = vmatpush2.msra.mxu0 0.0
    %3740 = vmatprep.subr.mxu0 0.0
    %3741 = vmatpush2.msra.mxu0 0.0
    %3742 = vmatprep.subr.mxu0 0.0
    %3743 = vmatpush2.msra.mxu0 0.0
    %3744 = vmatprep.subr.mxu0 0.0
    %3745 = vmatpush2.msra.mxu0 0.0
    %3746 = vmatprep.subr.mxu0 0.0
    %3747 = vmatpush2.msra.mxu0 0.0
    %3748 = vmatprep.subr.mxu0 0.0
    %3749 = vmatpush2.msra.mxu0 0.0
    %3750 = vmatprep.subr.mxu0 0.0
    %3751 = vmatpush2.msra.mxu0 0.0
    %3752 = vmatprep.subr.mxu0 0.0
    %3753 = vmatpush2.msra.mxu0 0.0
    %3754 = vmatprep.subr.mxu0 0.0
    %3755 = vmatpush2.msra.mxu0 0.0
    %3756 = vmatprep.subr.mxu0 0.0
    %3757 = vmatpush2.msra.mxu0 0.0
    %3758 = vmatprep.subr.mxu0 0.0
    %3759 = vmatpush2.msra.mxu0 0.0
    %3760 = vmatprep.subr.mxu0 0.0
    %3761 = vmatpush2.msra.mxu0 0.0
    %3762 = vmatprep.subr.mxu0 0.0
    %3763 = vmatpush2.msra.mxu0 0.0
    %3764 = vmatprep.subr.mxu0 0.0
    %3765 = vmatpush2.msra.mxu0 0.0
    %3766 = vmatprep.mubr.f32.mxu0 0.0
    %3767 = vmatmul.mubr.f32.gmra.mxu0 %v525
    %v3768 = vpop.f32.mrf.mxu0
    %v3769 = vadd.f32 %v3667, %v3768
    %v3770 = vpop.f32.mrf.mxu0
    %3771 = vmatprep.mubr.f32.mxu0 0.0
    %3772 = vmatmul.mubr.f32.gmra.mxu0 %v528
    %v3773 = vpop.f32.mrf.mxu0
    %v3774 = vadd.f32 %v3672, %v3773
    %v3775 = vpop.f32.mrf.mxu0
    %3776 = vmatprep.mubr.f32.mxu0 0.0
    %3777 = vmatmul.mubr.f32.gmra.mxu0 %v531
    %v3778 = vpop.f32.mrf.mxu0
    %v3779 = vadd.f32 %v3677, %v3778
    %v3780 = vpop.f32.mrf.mxu0
    %3781 = vmatprep.mubr.f32.mxu0 0.0
    %3782 = vmatmul.mubr.f32.gmra.mxu0 %v534
    %v3783 = vpop.f32.mrf.mxu0
    %v3784 = vadd.f32 %v3682, %v3783
    %v3785 = vpop.f32.mrf.mxu0
    %3786 = vmatprep.mubr.f32.mxu0 0.0
    %3787 = vmatmul.mubr.f32.gmra.mxu0 %v537
    %v3788 = vpop.f32.mrf.mxu0
    %v3789 = vadd.f32 %v3687, %v3788
    %v3790 = vpop.f32.mrf.mxu0
    %3791 = vmatprep.mubr.f32.mxu0 0.0
    %3792 = vmatmul.mubr.f32.gmra.mxu0 %v540
    %v3793 = vpop.f32.mrf.mxu0
    %v3794 = vadd.f32 %v3692, %v3793
    %v3795 = vpop.f32.mrf.mxu0
    %3796 = vmatprep.mubr.f32.mxu0 0.0
    %3797 = vmatmul.mubr.f32.gmra.mxu0 %v543
    %v3798 = vpop.f32.mrf.mxu0
    %v3799 = vadd.f32 %v3697, %v3798
    %v3800 = vpop.f32.mrf.mxu0
    %3801 = vdwg.mxu0
    %v3803 = vsel %vm421, %v3362, 0
    %3805 = vmatprep.subr.mxu0 0.0
    %3806 = vmatpush1.msra.mxu0 0.0
    %3807 = vmatprep.subr.mxu0 0.0
    %3808 = vmatpush1.msra.mxu0 0.0
    %3809 = vmatprep.subr.mxu0 0.0
    %3810 = vmatpush1.msra.mxu0 0.0
    %3811 = vmatprep.subr.mxu0 0.0
    %3812 = vmatpush1.msra.mxu0 0.0
    %3813 = vmatprep.subr.mxu0 0.0
    %3814 = vmatpush1.msra.mxu0 0.0
    %3815 = vmatprep.subr.mxu0 0.0
    %3816 = vmatpush1.msra.mxu0 0.0
    %3817 = vmatprep.subr.mxu0 0.0
    %3818 = vmatpush1.msra.mxu0 0.0
    %3819 = vmatprep.subr.mxu0 0.0
    %3820 = vmatpush1.msra.mxu0 0.0
    %3821 = vmatprep.subr.mxu0 0.0
    %3822 = vmatpush1.msra.mxu0 0.0
    %3823 = vmatprep.subr.mxu0 0.0
    %3824 = vmatpush1.msra.mxu0 %v3803
    %3825 = vmatprep.subr.mxu0 0.0
    %3826 = vmatpush1.msra.mxu0 %v3356
    %3827 = vmatprep.subr.mxu0 0.0
    %3828 = vmatpush1.msra.mxu0 %v3350
    %3829 = vmatprep.subr.mxu0 0.0
    %3830 = vmatpush1.msra.mxu0 %v3344
    %3831 = vmatprep.subr.mxu0 0.0
    %3832 = vmatpush1.msra.mxu0 %v3338
    %3833 = vmatprep.subr.mxu0 0.0
    %3834 = vmatpush1.msra.mxu0 %v3332
    %3835 = vmatprep.subr.mxu0 0.0
    %3836 = vmatpush1.msra.mxu0 %v3326
    %3837 = vmatprep.subr.mxu0 0.0
    %3838 = vmatpush2.msra.mxu0 0.0
    %3839 = vmatprep.subr.mxu0 0.0
    %3840 = vmatpush2.msra.mxu0 0.0
    %3841 = vmatprep.subr.mxu0 0.0
    %3842 = vmatpush2.msra.mxu0 0.0
    %3843 = vmatprep.subr.mxu0 0.0
    %3844 = vmatpush2.msra.mxu0 0.0
    %3845 = vmatprep.subr.mxu0 0.0
    %3846 = vmatpush2.msra.mxu0 0.0
    %3847 = vmatprep.subr.mxu0 0.0
    %3848 = vmatpush2.msra.mxu0 0.0
    %3849 = vmatprep.subr.mxu0 0.0
    %3850 = vmatpush2.msra.mxu0 0.0
    %3851 = vmatprep.subr.mxu0 0.0
    %3852 = vmatpush2.msra.mxu0 0.0
    %3853 = vmatprep.subr.mxu0 0.0
    %3854 = vmatpush2.msra.mxu0 0.0
    %3855 = vmatprep.subr.mxu0 0.0
    %3856 = vmatpush2.msra.mxu0 0.0
    %3857 = vmatprep.subr.mxu0 0.0
    %3858 = vmatpush2.msra.mxu0 0.0
    %3859 = vmatprep.subr.mxu0 0.0
    %3860 = vmatpush2.msra.mxu0 0.0
    %3861 = vmatprep.subr.mxu0 0.0
    %3862 = vmatpush2.msra.mxu0 0.0
    %3863 = vmatprep.subr.mxu0 0.0
    %3864 = vmatpush2.msra.mxu0 0.0
    %3865 = vmatprep.subr.mxu0 0.0
    %3866 = vmatpush2.msra.mxu0 0.0
    %3867 = vmatprep.subr.mxu0 0.0
    %3868 = vmatpush2.msra.mxu0 0.0
    %3869 = vmatprep.mubr.f32.mxu0 0.0
    %3870 = vmatmul.mubr.f32.gmra.mxu0 %v676
    %v3871 = vpop.f32.mrf.mxu0
    %v3872 = vadd.f32 0.0, %v3871
    %v3873 = vpop.f32.mrf.mxu0
    %3874 = vmatprep.mubr.f32.mxu0 0.0
    %3875 = vmatmul.mubr.f32.gmra.mxu0 %v679
    %v3876 = vpop.f32.mrf.mxu0
    %v3877 = vadd.f32 0.0, %v3876
    %v3878 = vpop.f32.mrf.mxu0
    %3879 = vmatprep.mubr.f32.mxu0 0.0
    %3880 = vmatmul.mubr.f32.gmra.mxu0 %v682
    %v3881 = vpop.f32.mrf.mxu0
    %v3882 = vadd.f32 0.0, %v3881
    %v3883 = vpop.f32.mrf.mxu0
    %3884 = vmatprep.mubr.f32.mxu0 0.0
    %3885 = vmatmul.mubr.f32.gmra.mxu0 %v685
    %v3886 = vpop.f32.mrf.mxu0
    %v3887 = vadd.f32 0.0, %v3886
    %v3888 = vpop.f32.mrf.mxu0
    %3889 = vmatprep.mubr.f32.mxu0 0.0
    %3890 = vmatmul.mubr.f32.gmra.mxu0 %v688
    %v3891 = vpop.f32.mrf.mxu0
    %v3892 = vadd.f32 0.0, %v3891
    %v3893 = vpop.f32.mrf.mxu0
    %3894 = vmatprep.mubr.f32.mxu0 0.0
    %3895 = vmatmul.mubr.f32.gmra.mxu0 %v691
    %v3896 = vpop.f32.mrf.mxu0
    %v3897 = vadd.f32 0.0, %v3896
    %v3898 = vpop.f32.mrf.mxu0
    %3899 = vmatprep.mubr.f32.mxu0 0.0
    %3900 = vmatmul.mubr.f32.gmra.mxu0 %v694
    %v3901 = vpop.f32.mrf.mxu0
    %v3902 = vadd.f32 0.0, %v3901
    %v3903 = vpop.f32.mrf.mxu0
    %3904 = vdwg.mxu0
    %v3905 = vadd.f32 %v3769, %v3872
    %v3906 = vadd.f32 %v3774, %v3877
    %v3907 = vadd.f32 %v3779, %v3882
    %v3908 = vadd.f32 %v3784, %v3887
    %v3909 = vadd.f32 %v3789, %v3892
    %v3910 = vadd.f32 %v3794, %v3897
    %v3911 = vadd.f32 %v3799, %v3902
    %3918 = vrot.lane.b32.xlu0 %v3326, 64
    %v3919 = vpop.permute.xlu0 %3918
    %3920 = vrot.lane.b32.xlu0 %v3332, 64
    %v3921 = vpop.permute.xlu0 %3920
    %3922 = vrot.lane.b32.xlu0 %v3338, 64
    %v3923 = vpop.permute.xlu0 %3922
    %3924 = vrot.lane.b32.xlu0 %v3344, 64
    %v3925 = vpop.permute.xlu0 %3924
    %3926 = vrot.lane.b32.xlu0 %v3350, 64
    %v3927 = vpop.permute.xlu0 %3926
    %3928 = vrot.lane.b32.xlu0 %v3356, 64
    %v3929 = vpop.permute.xlu0 %3928
    %3930 = vrot.lane.b32.xlu0 %v3362, 64
    %v3931 = vpop.permute.xlu0 %3930
    %v3938 = vsel %vm421, %v3931, 0
    %3940 = vmatprep.subr.mxu0 0.0
    %3941 = vmatpush1.msra.mxu0 0.0
    %3942 = vmatprep.subr.mxu0 0.0
    %3943 = vmatpush1.msra.mxu0 0.0
    %3944 = vmatprep.subr.mxu0 0.0
    %3945 = vmatpush1.msra.mxu0 0.0
    %3946 = vmatprep.subr.mxu0 0.0
    %3947 = vmatpush1.msra.mxu0 0.0
    %3948 = vmatprep.subr.mxu0 0.0
    %3949 = vmatpush1.msra.mxu0 0.0
    %3950 = vmatprep.subr.mxu0 0.0
    %3951 = vmatpush1.msra.mxu0 0.0
    %3952 = vmatprep.subr.mxu0 0.0
    %3953 = vmatpush1.msra.mxu0 0.0
    %3954 = vmatprep.subr.mxu0 0.0
    %3955 = vmatpush1.msra.mxu0 0.0
    %3956 = vmatprep.subr.mxu0 0.0
    %3957 = vmatpush1.msra.mxu0 0.0
    %3958 = vmatprep.subr.mxu0 0.0
    %3959 = vmatpush1.msra.mxu0 %v3938
    %3960 = vmatprep.subr.mxu0 0.0
    %3961 = vmatpush1.msra.mxu0 %v3929
    %3962 = vmatprep.subr.mxu0 0.0
    %3963 = vmatpush1.msra.mxu0 %v3927
    %3964 = vmatprep.subr.mxu0 0.0
    %3965 = vmatpush1.msra.mxu0 %v3925
    %3966 = vmatprep.subr.mxu0 0.0
    %3967 = vmatpush1.msra.mxu0 %v3923
    %3968 = vmatprep.subr.mxu0 0.0
    %3969 = vmatpush1.msra.mxu0 %v3921
    %3970 = vmatprep.subr.mxu0 0.0
    %3971 = vmatpush1.msra.mxu0 %v3919
    %3972 = vmatprep.subr.mxu0 0.0
    %3973 = vmatpush2.msra.mxu0 0.0
    %3974 = vmatprep.subr.mxu0 0.0
    %3975 = vmatpush2.msra.mxu0 0.0
    %3976 = vmatprep.subr.mxu0 0.0
    %3977 = vmatpush2.msra.mxu0 0.0
    %3978 = vmatprep.subr.mxu0 0.0
    %3979 = vmatpush2.msra.mxu0 0.0
    %3980 = vmatprep.subr.mxu0 0.0
    %3981 = vmatpush2.msra.mxu0 0.0
    %3982 = vmatprep.subr.mxu0 0.0
    %3983 = vmatpush2.msra.mxu0 0.0
    %3984 = vmatprep.subr.mxu0 0.0
    %3985 = vmatpush2.msra.mxu0 0.0
    %3986 = vmatprep.subr.mxu0 0.0
    %3987 = vmatpush2.msra.mxu0 0.0
    %3988 = vmatprep.subr.mxu0 0.0
    %3989 = vmatpush2.msra.mxu0 0.0
    %3990 = vmatprep.subr.mxu0 0.0
    %3991 = vmatpush2.msra.mxu0 0.0
    %3992 = vmatprep.subr.mxu0 0.0
    %3993 = vmatpush2.msra.mxu0 0.0
    %3994 = vmatprep.subr.mxu0 0.0
    %3995 = vmatpush2.msra.mxu0 0.0
    %3996 = vmatprep.subr.mxu0 0.0
    %3997 = vmatpush2.msra.mxu0 0.0
    %3998 = vmatprep.subr.mxu0 0.0
    %3999 = vmatpush2.msra.mxu0 0.0
    %4000 = vmatprep.subr.mxu0 0.0
    %4001 = vmatpush2.msra.mxu0 0.0
    %4002 = vmatprep.subr.mxu0 0.0
    %4003 = vmatpush2.msra.mxu0 0.0
    %4004 = vmatprep.mubr.f32.mxu0 0.0
    %4005 = vmatmul.mubr.f32.gmra.mxu0 %v834
    %v4006 = vpop.f32.mrf.mxu0
    %v4007 = vadd.f32 0.0, %v4006
    %v4008 = vpop.f32.mrf.mxu0
    %4009 = vmatprep.mubr.f32.mxu0 0.0
    %4010 = vmatmul.mubr.f32.gmra.mxu0 %v837
    %v4011 = vpop.f32.mrf.mxu0
    %v4012 = vadd.f32 0.0, %v4011
    %v4013 = vpop.f32.mrf.mxu0
    %4014 = vmatprep.mubr.f32.mxu0 0.0
    %4015 = vmatmul.mubr.f32.gmra.mxu0 %v840
    %v4016 = vpop.f32.mrf.mxu0
    %v4017 = vadd.f32 0.0, %v4016
    %v4018 = vpop.f32.mrf.mxu0
    %4019 = vmatprep.mubr.f32.mxu0 0.0
    %4020 = vmatmul.mubr.f32.gmra.mxu0 %v843
    %v4021 = vpop.f32.mrf.mxu0
    %v4022 = vadd.f32 0.0, %v4021
    %v4023 = vpop.f32.mrf.mxu0
    %4024 = vmatprep.mubr.f32.mxu0 0.0
    %4025 = vmatmul.mubr.f32.gmra.mxu0 %v846
    %v4026 = vpop.f32.mrf.mxu0
    %v4027 = vadd.f32 0.0, %v4026
    %v4028 = vpop.f32.mrf.mxu0
    %4029 = vmatprep.mubr.f32.mxu0 0.0
    %4030 = vmatmul.mubr.f32.gmra.mxu0 %v849
    %v4031 = vpop.f32.mrf.mxu0
    %v4032 = vadd.f32 0.0, %v4031
    %v4033 = vpop.f32.mrf.mxu0
    %4034 = vmatprep.mubr.f32.mxu0 0.0
    %4035 = vmatmul.mubr.f32.gmra.mxu0 %v852
    %v4036 = vpop.f32.mrf.mxu0
    %v4037 = vadd.f32 0.0, %v4036
    %v4038 = vpop.f32.mrf.mxu0
    %4039 = vdwg.mxu0
    %v4040 = vadd.f32 %v3905, %v4007
    %v4041 = vadd.f32 %v3906, %v4012
    %v4042 = vadd.f32 %v3907, %v4017
    %v4043 = vadd.f32 %v3908, %v4022
    %v4044 = vadd.f32 %v3909, %v4027
    %v4045 = vadd.f32 %v3910, %v4032
    %v4046 = vadd.f32 %v3911, %v4037
    %v4048 = vsel %vm421, %v3467, 0
    %4050 = vmatprep.subr.mxu0 0.0
    %4051 = vmatpush1.msra.mxu0 0.0
    %4052 = vmatprep.subr.mxu0 0.0
    %4053 = vmatpush1.msra.mxu0 0.0
    %4054 = vmatprep.subr.mxu0 0.0
    %4055 = vmatpush1.msra.mxu0 0.0
    %4056 = vmatprep.subr.mxu0 0.0
    %4057 = vmatpush1.msra.mxu0 0.0
    %4058 = vmatprep.subr.mxu0 0.0
    %4059 = vmatpush1.msra.mxu0 0.0
    %4060 = vmatprep.subr.mxu0 0.0
    %4061 = vmatpush1.msra.mxu0 0.0
    %4062 = vmatprep.subr.mxu0 0.0
    %4063 = vmatpush1.msra.mxu0 0.0
    %4064 = vmatprep.subr.mxu0 0.0
    %4065 = vmatpush1.msra.mxu0 0.0
    %4066 = vmatprep.subr.mxu0 0.0
    %4067 = vmatpush1.msra.mxu0 0.0
    %4068 = vmatprep.subr.mxu0 0.0
    %4069 = vmatpush1.msra.mxu0 %v4048
    %4070 = vmatprep.subr.mxu0 0.0
    %4071 = vmatpush1.msra.mxu0 %v3461
    %4072 = vmatprep.subr.mxu0 0.0
    %4073 = vmatpush1.msra.mxu0 %v3455
    %4074 = vmatprep.subr.mxu0 0.0
    %4075 = vmatpush1.msra.mxu0 %v3449
    %4076 = vmatprep.subr.mxu0 0.0
    %4077 = vmatpush1.msra.mxu0 %v3443
    %4078 = vmatprep.subr.mxu0 0.0
    %4079 = vmatpush1.msra.mxu0 %v3437
    %4080 = vmatprep.subr.mxu0 0.0
    %4081 = vmatpush1.msra.mxu0 %v3431
    %4082 = vmatprep.subr.mxu0 0.0
    %4083 = vmatpush2.msra.mxu0 0.0
    %4084 = vmatprep.subr.mxu0 0.0
    %4085 = vmatpush2.msra.mxu0 0.0
    %4086 = vmatprep.subr.mxu0 0.0
    %4087 = vmatpush2.msra.mxu0 0.0
    %4088 = vmatprep.subr.mxu0 0.0
    %4089 = vmatpush2.msra.mxu0 0.0
    %4090 = vmatprep.subr.mxu0 0.0
    %4091 = vmatpush2.msra.mxu0 0.0
    %4092 = vmatprep.subr.mxu0 0.0
    %4093 = vmatpush2.msra.mxu0 0.0
    %4094 = vmatprep.subr.mxu0 0.0
    %4095 = vmatpush2.msra.mxu0 0.0
    %4096 = vmatprep.subr.mxu0 0.0
    %4097 = vmatpush2.msra.mxu0 0.0
    %4098 = vmatprep.subr.mxu0 0.0
    %4099 = vmatpush2.msra.mxu0 0.0
    %4100 = vmatprep.subr.mxu0 0.0
    %4101 = vmatpush2.msra.mxu0 0.0
    %4102 = vmatprep.subr.mxu0 0.0
    %4103 = vmatpush2.msra.mxu0 0.0
    %4104 = vmatprep.subr.mxu0 0.0
    %4105 = vmatpush2.msra.mxu0 0.0
    %4106 = vmatprep.subr.mxu0 0.0
    %4107 = vmatpush2.msra.mxu0 0.0
    %4108 = vmatprep.subr.mxu0 0.0
    %4109 = vmatpush2.msra.mxu0 0.0
    %4110 = vmatprep.subr.mxu0 0.0
    %4111 = vmatpush2.msra.mxu0 0.0
    %4112 = vmatprep.subr.mxu0 0.0
    %4113 = vmatpush2.msra.mxu0 0.0
    %4114 = vmatprep.mubr.f32.mxu0 0.0
    %4115 = vmatmul.mubr.f32.gmra.mxu0 %v972
    %v4116 = vpop.f32.mrf.mxu0
    %v4117 = vadd.f32 0.0, %v4116
    %v4118 = vpop.f32.mrf.mxu0
    %4119 = vmatprep.mubr.f32.mxu0 0.0
    %4120 = vmatmul.mubr.f32.gmra.mxu0 %v975
    %v4121 = vpop.f32.mrf.mxu0
    %v4122 = vadd.f32 0.0, %v4121
    %v4123 = vpop.f32.mrf.mxu0
    %4124 = vmatprep.mubr.f32.mxu0 0.0
    %4125 = vmatmul.mubr.f32.gmra.mxu0 %v978
    %v4126 = vpop.f32.mrf.mxu0
    %v4127 = vadd.f32 0.0, %v4126
    %v4128 = vpop.f32.mrf.mxu0
    %4129 = vmatprep.mubr.f32.mxu0 0.0
    %4130 = vmatmul.mubr.f32.gmra.mxu0 %v981
    %v4131 = vpop.f32.mrf.mxu0
    %v4132 = vadd.f32 0.0, %v4131
    %v4133 = vpop.f32.mrf.mxu0
    %4134 = vmatprep.mubr.f32.mxu0 0.0
    %4135 = vmatmul.mubr.f32.gmra.mxu0 %v984
    %v4136 = vpop.f32.mrf.mxu0
    %v4137 = vadd.f32 0.0, %v4136
    %v4138 = vpop.f32.mrf.mxu0
    %4139 = vmatprep.mubr.f32.mxu0 0.0
    %4140 = vmatmul.mubr.f32.gmra.mxu0 %v987
    %v4141 = vpop.f32.mrf.mxu0
    %v4142 = vadd.f32 0.0, %v4141
    %v4143 = vpop.f32.mrf.mxu0
    %4144 = vmatprep.mubr.f32.mxu0 0.0
    %4145 = vmatmul.mubr.f32.gmra.mxu0 %v990
    %v4146 = vpop.f32.mrf.mxu0
    %v4147 = vadd.f32 0.0, %v4146
    %v4148 = vpop.f32.mrf.mxu0
    %4149 = vdwg.mxu0
    %v4150 = vadd.f32 %v4040, %v4117
    %v4151 = vadd.f32 %v4041, %v4122
    %v4152 = vadd.f32 %v4042, %v4127
    %v4153 = vadd.f32 %v4043, %v4132
    %v4154 = vadd.f32 %v4044, %v4137
    %v4155 = vadd.f32 %v4045, %v4142
    %v4156 = vadd.f32 %v4046, %v4147
    %4163 = vrot.lane.b32.xlu0 %v3431, 64
    %v4164 = vpop.permute.xlu0 %4163
    %4165 = vrot.lane.b32.xlu0 %v3437, 64
    %v4166 = vpop.permute.xlu0 %4165
    %4167 = vrot.lane.b32.xlu0 %v3443, 64
    %v4168 = vpop.permute.xlu0 %4167
    %4169 = vrot.lane.b32.xlu0 %v3449, 64
    %v4170 = vpop.permute.xlu0 %4169
    %4171 = vrot.lane.b32.xlu0 %v3455, 64
    %v4172 = vpop.permute.xlu0 %4171
    %4173 = vrot.lane.b32.xlu0 %v3461, 64
    %v4174 = vpop.permute.xlu0 %4173
    %4175 = vrot.lane.b32.xlu0 %v3467, 64
    %v4176 = vpop.permute.xlu0 %4175
    %v4183 = vsel %vm421, %v4176, 0
    %4185 = vmatprep.subr.mxu0 0.0
    %4186 = vmatpush1.msra.mxu0 0.0
    %4187 = vmatprep.subr.mxu0 0.0
    %4188 = vmatpush1.msra.mxu0 0.0
    %4189 = vmatprep.subr.mxu0 0.0
    %4190 = vmatpush1.msra.mxu0 0.0
    %4191 = vmatprep.subr.mxu0 0.0
    %4192 = vmatpush1.msra.mxu0 0.0
    %4193 = vmatprep.subr.mxu0 0.0
    %4194 = vmatpush1.msra.mxu0 0.0
    %4195 = vmatprep.subr.mxu0 0.0
    %4196 = vmatpush1.msra.mxu0 0.0
    %4197 = vmatprep.subr.mxu0 0.0
    %4198 = vmatpush1.msra.mxu0 0.0
    %4199 = vmatprep.subr.mxu0 0.0
    %4200 = vmatpush1.msra.mxu0 0.0
    %4201 = vmatprep.subr.mxu0 0.0
    %4202 = vmatpush1.msra.mxu0 0.0
    %4203 = vmatprep.subr.mxu0 0.0
    %4204 = vmatpush1.msra.mxu0 %v4183
    %4205 = vmatprep.subr.mxu0 0.0
    %4206 = vmatpush1.msra.mxu0 %v4174
    %4207 = vmatprep.subr.mxu0 0.0
    %4208 = vmatpush1.msra.mxu0 %v4172
    %4209 = vmatprep.subr.mxu0 0.0
    %4210 = vmatpush1.msra.mxu0 %v4170
    %4211 = vmatprep.subr.mxu0 0.0
    %4212 = vmatpush1.msra.mxu0 %v4168
    %4213 = vmatprep.subr.mxu0 0.0
    %4214 = vmatpush1.msra.mxu0 %v4166
    %4215 = vmatprep.subr.mxu0 0.0
    %4216 = vmatpush1.msra.mxu0 %v4164
    %4217 = vmatprep.subr.mxu0 0.0
    %4218 = vmatpush2.msra.mxu0 0.0
    %4219 = vmatprep.subr.mxu0 0.0
    %4220 = vmatpush2.msra.mxu0 0.0
    %4221 = vmatprep.subr.mxu0 0.0
    %4222 = vmatpush2.msra.mxu0 0.0
    %4223 = vmatprep.subr.mxu0 0.0
    %4224 = vmatpush2.msra.mxu0 0.0
    %4225 = vmatprep.subr.mxu0 0.0
    %4226 = vmatpush2.msra.mxu0 0.0
    %4227 = vmatprep.subr.mxu0 0.0
    %4228 = vmatpush2.msra.mxu0 0.0
    %4229 = vmatprep.subr.mxu0 0.0
    %4230 = vmatpush2.msra.mxu0 0.0
    %4231 = vmatprep.subr.mxu0 0.0
    %4232 = vmatpush2.msra.mxu0 0.0
    %4233 = vmatprep.subr.mxu0 0.0
    %4234 = vmatpush2.msra.mxu0 0.0
    %4235 = vmatprep.subr.mxu0 0.0
    %4236 = vmatpush2.msra.mxu0 0.0
    %4237 = vmatprep.subr.mxu0 0.0
    %4238 = vmatpush2.msra.mxu0 0.0
    %4239 = vmatprep.subr.mxu0 0.0
    %4240 = vmatpush2.msra.mxu0 0.0
    %4241 = vmatprep.subr.mxu0 0.0
    %4242 = vmatpush2.msra.mxu0 0.0
    %4243 = vmatprep.subr.mxu0 0.0
    %4244 = vmatpush2.msra.mxu0 0.0
    %4245 = vmatprep.subr.mxu0 0.0
    %4246 = vmatpush2.msra.mxu0 0.0
    %4247 = vmatprep.subr.mxu0 0.0
    %4248 = vmatpush2.msra.mxu0 0.0
    %4249 = vmatprep.mubr.f32.mxu0 0.0
    %4250 = vmatmul.mubr.f32.gmra.mxu0 %v1137
    %v4251 = vpop.f32.mrf.mxu0
    %v4252 = vadd.f32 0.0, %v4251
    %v4253 = vpop.f32.mrf.mxu0
    %4254 = vmatprep.mubr.f32.mxu0 0.0
    %4255 = vmatmul.mubr.f32.gmra.mxu0 %v1140
    %v4256 = vpop.f32.mrf.mxu0
    %v4257 = vadd.f32 0.0, %v4256
    %v4258 = vpop.f32.mrf.mxu0
    %4259 = vmatprep.mubr.f32.mxu0 0.0
    %4260 = vmatmul.mubr.f32.gmra.mxu0 %v1143
    %v4261 = vpop.f32.mrf.mxu0
    %v4262 = vadd.f32 0.0, %v4261
    %v4263 = vpop.f32.mrf.mxu0
    %4264 = vmatprep.mubr.f32.mxu0 0.0
    %4265 = vmatmul.mubr.f32.gmra.mxu0 %v1146
    %v4266 = vpop.f32.mrf.mxu0
    %v4267 = vadd.f32 0.0, %v4266
    %v4268 = vpop.f32.mrf.mxu0
    %4269 = vmatprep.mubr.f32.mxu0 0.0
    %4270 = vmatmul.mubr.f32.gmra.mxu0 %v1149
    %v4271 = vpop.f32.mrf.mxu0
    %v4272 = vadd.f32 0.0, %v4271
    %v4273 = vpop.f32.mrf.mxu0
    %4274 = vmatprep.mubr.f32.mxu0 0.0
    %4275 = vmatmul.mubr.f32.gmra.mxu0 %v1152
    %v4276 = vpop.f32.mrf.mxu0
    %v4277 = vadd.f32 0.0, %v4276
    %v4278 = vpop.f32.mrf.mxu0
    %4279 = vmatprep.mubr.f32.mxu0 0.0
    %4280 = vmatmul.mubr.f32.gmra.mxu0 %v1155
    %v4281 = vpop.f32.mrf.mxu0
    %v4282 = vadd.f32 0.0, %v4281
    %v4283 = vpop.f32.mrf.mxu0
    %4284 = vdwg.mxu0
    %v4285 = vadd.f32 %v4150, %v4252
    %v4286 = vadd.f32 %v4151, %v4257
    %v4287 = vadd.f32 %v4152, %v4262
    %v4288 = vadd.f32 %v4153, %v4267
    %v4289 = vadd.f32 %v4154, %v4272
    %v4290 = vadd.f32 %v4155, %v4277
    %v4291 = vadd.f32 %v4156, %v4282
    %v4293 = vsel %vm421, %v3469, 0
    %4295 = vmatprep.subr.mxu0 0.0
    %4296 = vmatpush1.msra.mxu0 0.0
    %4297 = vmatprep.subr.mxu0 0.0
    %4298 = vmatpush1.msra.mxu0 0.0
    %4299 = vmatprep.subr.mxu0 0.0
    %4300 = vmatpush1.msra.mxu0 0.0
    %4301 = vmatprep.subr.mxu0 0.0
    %4302 = vmatpush1.msra.mxu0 0.0
    %4303 = vmatprep.subr.mxu0 0.0
    %4304 = vmatpush1.msra.mxu0 0.0
    %4305 = vmatprep.subr.mxu0 0.0
    %4306 = vmatpush1.msra.mxu0 0.0
    %4307 = vmatprep.subr.mxu0 0.0
    %4308 = vmatpush1.msra.mxu0 0.0
    %4309 = vmatprep.subr.mxu0 0.0
    %4310 = vmatpush1.msra.mxu0 0.0
    %4311 = vmatprep.subr.mxu0 0.0
    %4312 = vmatpush1.msra.mxu0 0.0
    %4313 = vmatprep.subr.mxu0 0.0
    %4314 = vmatpush1.msra.mxu0 %v4293
    %4315 = vmatprep.subr.mxu0 0.0
    %4316 = vmatpush1.msra.mxu0 %v3463
    %4317 = vmatprep.subr.mxu0 0.0
    %4318 = vmatpush1.msra.mxu0 %v3457
    %4319 = vmatprep.subr.mxu0 0.0
    %4320 = vmatpush1.msra.mxu0 %v3451
    %4321 = vmatprep.subr.mxu0 0.0
    %4322 = vmatpush1.msra.mxu0 %v3445
    %4323 = vmatprep.subr.mxu0 0.0
    %4324 = vmatpush1.msra.mxu0 %v3439
    %4325 = vmatprep.subr.mxu0 0.0
    %4326 = vmatpush1.msra.mxu0 %v3433
    %4327 = vmatprep.subr.mxu0 0.0
    %4328 = vmatpush2.msra.mxu0 0.0
    %4329 = vmatprep.subr.mxu0 0.0
    %4330 = vmatpush2.msra.mxu0 0.0
    %4331 = vmatprep.subr.mxu0 0.0
    %4332 = vmatpush2.msra.mxu0 0.0
    %4333 = vmatprep.subr.mxu0 0.0
    %4334 = vmatpush2.msra.mxu0 0.0
    %4335 = vmatprep.subr.mxu0 0.0
    %4336 = vmatpush2.msra.mxu0 0.0
    %4337 = vmatprep.subr.mxu0 0.0
    %4338 = vmatpush2.msra.mxu0 0.0
    %4339 = vmatprep.subr.mxu0 0.0
    %4340 = vmatpush2.msra.mxu0 0.0
    %4341 = vmatprep.subr.mxu0 0.0
    %4342 = vmatpush2.msra.mxu0 0.0
    %4343 = vmatprep.subr.mxu0 0.0
    %4344 = vmatpush2.msra.mxu0 0.0
    %4345 = vmatprep.subr.mxu0 0.0
    %4346 = vmatpush2.msra.mxu0 0.0
    %4347 = vmatprep.subr.mxu0 0.0
    %4348 = vmatpush2.msra.mxu0 0.0
    %4349 = vmatprep.subr.mxu0 0.0
    %4350 = vmatpush2.msra.mxu0 0.0
    %4351 = vmatprep.subr.mxu0 0.0
    %4352 = vmatpush2.msra.mxu0 0.0
    %4353 = vmatprep.subr.mxu0 0.0
    %4354 = vmatpush2.msra.mxu0 0.0
    %4355 = vmatprep.subr.mxu0 0.0
    %4356 = vmatpush2.msra.mxu0 0.0
    %4357 = vmatprep.subr.mxu0 0.0
    %4358 = vmatpush2.msra.mxu0 0.0
    %4359 = vmatprep.mubr.f32.mxu0 0.0
    %4360 = vmatmul.mubr.f32.gmra.mxu0 %v1295
    %v4361 = vpop.f32.mrf.mxu0
    %v4362 = vadd.f32 0.0, %v4361
    %v4363 = vpop.f32.mrf.mxu0
    %4364 = vmatprep.mubr.f32.mxu0 0.0
    %4365 = vmatmul.mubr.f32.gmra.mxu0 %v1298
    %v4366 = vpop.f32.mrf.mxu0
    %v4367 = vadd.f32 0.0, %v4366
    %v4368 = vpop.f32.mrf.mxu0
    %4369 = vmatprep.mubr.f32.mxu0 0.0
    %4370 = vmatmul.mubr.f32.gmra.mxu0 %v1301
    %v4371 = vpop.f32.mrf.mxu0
    %v4372 = vadd.f32 0.0, %v4371
    %v4373 = vpop.f32.mrf.mxu0
    %4374 = vmatprep.mubr.f32.mxu0 0.0
    %4375 = vmatmul.mubr.f32.gmra.mxu0 %v1304
    %v4376 = vpop.f32.mrf.mxu0
    %v4377 = vadd.f32 0.0, %v4376
    %v4378 = vpop.f32.mrf.mxu0
    %4379 = vmatprep.mubr.f32.mxu0 0.0
    %4380 = vmatmul.mubr.f32.gmra.mxu0 %v1307
    %v4381 = vpop.f32.mrf.mxu0
    %v4382 = vadd.f32 0.0, %v4381
    %v4383 = vpop.f32.mrf.mxu0
    %4384 = vmatprep.mubr.f32.mxu0 0.0
    %4385 = vmatmul.mubr.f32.gmra.mxu0 %v1310
    %v4386 = vpop.f32.mrf.mxu0
    %v4387 = vadd.f32 0.0, %v4386
    %v4388 = vpop.f32.mrf.mxu0
    %4389 = vmatprep.mubr.f32.mxu0 0.0
    %4390 = vmatmul.mubr.f32.gmra.mxu0 %v1313
    %v4391 = vpop.f32.mrf.mxu0
    %v4392 = vadd.f32 0.0, %v4391
    %v4393 = vpop.f32.mrf.mxu0
    %4394 = vdwg.mxu0
    %v4395 = vadd.f32 %v4285, %v4362
    %v4396 = vadd.f32 %v4286, %v4367
    %v4397 = vadd.f32 %v4287, %v4372
    %v4398 = vadd.f32 %v4288, %v4377
    %v4399 = vadd.f32 %v4289, %v4382
    %v4400 = vadd.f32 %v4290, %v4387
    %v4401 = vadd.f32 %v4291, %v4392
    %4408 = vrot.lane.b32.xlu0 %v3433, 64
    %v4409 = vpop.permute.xlu0 %4408
    %4410 = vrot.lane.b32.xlu0 %v3439, 64
    %v4411 = vpop.permute.xlu0 %4410
    %4412 = vrot.lane.b32.xlu0 %v3445, 64
    %v4413 = vpop.permute.xlu0 %4412
    %4414 = vrot.lane.b32.xlu0 %v3451, 64
    %v4415 = vpop.permute.xlu0 %4414
    %4416 = vrot.lane.b32.xlu0 %v3457, 64
    %v4417 = vpop.permute.xlu0 %4416
    %4418 = vrot.lane.b32.xlu0 %v3463, 64
    %v4419 = vpop.permute.xlu0 %4418
    %4420 = vrot.lane.b32.xlu0 %v3469, 64
    %v4421 = vpop.permute.xlu0 %4420
    %v4428 = vsel %vm421, %v4421, 0
    %4430 = vmatprep.subr.mxu0 0.0
    %4431 = vmatpush1.msra.mxu0 0.0
    %4432 = vmatprep.subr.mxu0 0.0
    %4433 = vmatpush1.msra.mxu0 0.0
    %4434 = vmatprep.subr.mxu0 0.0
    %4435 = vmatpush1.msra.mxu0 0.0
    %4436 = vmatprep.subr.mxu0 0.0
    %4437 = vmatpush1.msra.mxu0 0.0
    %4438 = vmatprep.subr.mxu0 0.0
    %4439 = vmatpush1.msra.mxu0 0.0
    %4440 = vmatprep.subr.mxu0 0.0
    %4441 = vmatpush1.msra.mxu0 0.0
    %4442 = vmatprep.subr.mxu0 0.0
    %4443 = vmatpush1.msra.mxu0 0.0
    %4444 = vmatprep.subr.mxu0 0.0
    %4445 = vmatpush1.msra.mxu0 0.0
    %4446 = vmatprep.subr.mxu0 0.0
    %4447 = vmatpush1.msra.mxu0 0.0
    %4448 = vmatprep.subr.mxu0 0.0
    %4449 = vmatpush1.msra.mxu0 %v4428
    %4450 = vmatprep.subr.mxu0 0.0
    %4451 = vmatpush1.msra.mxu0 %v4419
    %4452 = vmatprep.subr.mxu0 0.0
    %4453 = vmatpush1.msra.mxu0 %v4417
    %4454 = vmatprep.subr.mxu0 0.0
    %4455 = vmatpush1.msra.mxu0 %v4415
    %4456 = vmatprep.subr.mxu0 0.0
    %4457 = vmatpush1.msra.mxu0 %v4413
    %4458 = vmatprep.subr.mxu0 0.0
    %4459 = vmatpush1.msra.mxu0 %v4411
    %4460 = vmatprep.subr.mxu0 0.0
    %4461 = vmatpush1.msra.mxu0 %v4409
    %4462 = vmatprep.subr.mxu0 0.0
    %4463 = vmatpush2.msra.mxu0 0.0
    %4464 = vmatprep.subr.mxu0 0.0
    %4465 = vmatpush2.msra.mxu0 0.0
    %4466 = vmatprep.subr.mxu0 0.0
    %4467 = vmatpush2.msra.mxu0 0.0
    %4468 = vmatprep.subr.mxu0 0.0
    %4469 = vmatpush2.msra.mxu0 0.0
    %4470 = vmatprep.subr.mxu0 0.0
    %4471 = vmatpush2.msra.mxu0 0.0
    %4472 = vmatprep.subr.mxu0 0.0
    %4473 = vmatpush2.msra.mxu0 0.0
    %4474 = vmatprep.subr.mxu0 0.0
    %4475 = vmatpush2.msra.mxu0 0.0
    %4476 = vmatprep.subr.mxu0 0.0
    %4477 = vmatpush2.msra.mxu0 0.0
    %4478 = vmatprep.subr.mxu0 0.0
    %4479 = vmatpush2.msra.mxu0 0.0
    %4480 = vmatprep.subr.mxu0 0.0
    %4481 = vmatpush2.msra.mxu0 0.0
    %4482 = vmatprep.subr.mxu0 0.0
    %4483 = vmatpush2.msra.mxu0 0.0
    %4484 = vmatprep.subr.mxu0 0.0
    %4485 = vmatpush2.msra.mxu0 0.0
    %4486 = vmatprep.subr.mxu0 0.0
    %4487 = vmatpush2.msra.mxu0 0.0
    %4488 = vmatprep.subr.mxu0 0.0
    %4489 = vmatpush2.msra.mxu0 0.0
    %4490 = vmatprep.subr.mxu0 0.0
    %4491 = vmatpush2.msra.mxu0 0.0
    %4492 = vmatprep.subr.mxu0 0.0
    %4493 = vmatpush2.msra.mxu0 0.0
    %4494 = vmatprep.mubr.f32.mxu0 0.0
    %4495 = vmatmul.mubr.f32.gmra.mxu0 %v1453
    %v4496 = vpop.f32.mrf.mxu0
    %v4497 = vadd.f32 0.0, %v4496
    %v4498 = vpop.f32.mrf.mxu0
    %4499 = vmatprep.mubr.f32.mxu0 0.0
    %4500 = vmatmul.mubr.f32.gmra.mxu0 %v1456
    %v4501 = vpop.f32.mrf.mxu0
    %v4502 = vadd.f32 0.0, %v4501
    %v4503 = vpop.f32.mrf.mxu0
    %4504 = vmatprep.mubr.f32.mxu0 0.0
    %4505 = vmatmul.mubr.f32.gmra.mxu0 %v1459
    %v4506 = vpop.f32.mrf.mxu0
    %v4507 = vadd.f32 0.0, %v4506
    %v4508 = vpop.f32.mrf.mxu0
    %4509 = vmatprep.mubr.f32.mxu0 0.0
    %4510 = vmatmul.mubr.f32.gmra.mxu0 %v1462
    %v4511 = vpop.f32.mrf.mxu0
    %v4512 = vadd.f32 0.0, %v4511
    %v4513 = vpop.f32.mrf.mxu0
    %4514 = vmatprep.mubr.f32.mxu0 0.0
    %4515 = vmatmul.mubr.f32.gmra.mxu0 %v1465
    %v4516 = vpop.f32.mrf.mxu0
    %v4517 = vadd.f32 0.0, %v4516
    %v4518 = vpop.f32.mrf.mxu0
    %4519 = vmatprep.mubr.f32.mxu0 0.0
    %4520 = vmatmul.mubr.f32.gmra.mxu0 %v1468
    %v4521 = vpop.f32.mrf.mxu0
    %v4522 = vadd.f32 0.0, %v4521
    %v4523 = vpop.f32.mrf.mxu0
    %4524 = vmatprep.mubr.f32.mxu0 0.0
    %4525 = vmatmul.mubr.f32.gmra.mxu0 %v1471
    %v4526 = vpop.f32.mrf.mxu0
    %v4527 = vadd.f32 0.0, %v4526
    %v4528 = vpop.f32.mrf.mxu0
    %4529 = vdwg.mxu0
    %v4530 = vadd.f32 %v4395, %v4497
    %v4531 = vadd.f32 %v4396, %v4502
    %v4532 = vadd.f32 %v4397, %v4507
    %v4533 = vadd.f32 %v4398, %v4512
    %v4534 = vadd.f32 %v4399, %v4517
    %v4535 = vadd.f32 %v4400, %v4522
    %v4536 = vadd.f32 %v4401, %v4527
    %v4538 = vsel %vm421, %v3568, 0
    %4540 = vmatprep.subr.mxu0 0.0
    %4541 = vmatpush1.msra.mxu0 0.0
    %4542 = vmatprep.subr.mxu0 0.0
    %4543 = vmatpush1.msra.mxu0 0.0
    %4544 = vmatprep.subr.mxu0 0.0
    %4545 = vmatpush1.msra.mxu0 0.0
    %4546 = vmatprep.subr.mxu0 0.0
    %4547 = vmatpush1.msra.mxu0 0.0
    %4548 = vmatprep.subr.mxu0 0.0
    %4549 = vmatpush1.msra.mxu0 0.0
    %4550 = vmatprep.subr.mxu0 0.0
    %4551 = vmatpush1.msra.mxu0 0.0
    %4552 = vmatprep.subr.mxu0 0.0
    %4553 = vmatpush1.msra.mxu0 0.0
    %4554 = vmatprep.subr.mxu0 0.0
    %4555 = vmatpush1.msra.mxu0 0.0
    %4556 = vmatprep.subr.mxu0 0.0
    %4557 = vmatpush1.msra.mxu0 0.0
    %4558 = vmatprep.subr.mxu0 0.0
    %4559 = vmatpush1.msra.mxu0 %v4538
    %4560 = vmatprep.subr.mxu0 0.0
    %4561 = vmatpush1.msra.mxu0 %v3563
    %4562 = vmatprep.subr.mxu0 0.0
    %4563 = vmatpush1.msra.mxu0 %v3558
    %4564 = vmatprep.subr.mxu0 0.0
    %4565 = vmatpush1.msra.mxu0 %v3553
    %4566 = vmatprep.subr.mxu0 0.0
    %4567 = vmatpush1.msra.mxu0 %v3548
    %4568 = vmatprep.subr.mxu0 0.0
    %4569 = vmatpush1.msra.mxu0 %v3543
    %4570 = vmatprep.subr.mxu0 0.0
    %4571 = vmatpush1.msra.mxu0 %v3538
    %4572 = vmatprep.subr.mxu0 0.0
    %4573 = vmatpush2.msra.mxu0 0.0
    %4574 = vmatprep.subr.mxu0 0.0
    %4575 = vmatpush2.msra.mxu0 0.0
    %4576 = vmatprep.subr.mxu0 0.0
    %4577 = vmatpush2.msra.mxu0 0.0
    %4578 = vmatprep.subr.mxu0 0.0
    %4579 = vmatpush2.msra.mxu0 0.0
    %4580 = vmatprep.subr.mxu0 0.0
    %4581 = vmatpush2.msra.mxu0 0.0
    %4582 = vmatprep.subr.mxu0 0.0
    %4583 = vmatpush2.msra.mxu0 0.0
    %4584 = vmatprep.subr.mxu0 0.0
    %4585 = vmatpush2.msra.mxu0 0.0
    %4586 = vmatprep.subr.mxu0 0.0
    %4587 = vmatpush2.msra.mxu0 0.0
    %4588 = vmatprep.subr.mxu0 0.0
    %4589 = vmatpush2.msra.mxu0 0.0
    %4590 = vmatprep.subr.mxu0 0.0
    %4591 = vmatpush2.msra.mxu0 0.0
    %4592 = vmatprep.subr.mxu0 0.0
    %4593 = vmatpush2.msra.mxu0 0.0
    %4594 = vmatprep.subr.mxu0 0.0
    %4595 = vmatpush2.msra.mxu0 0.0
    %4596 = vmatprep.subr.mxu0 0.0
    %4597 = vmatpush2.msra.mxu0 0.0
    %4598 = vmatprep.subr.mxu0 0.0
    %4599 = vmatpush2.msra.mxu0 0.0
    %4600 = vmatprep.subr.mxu0 0.0
    %4601 = vmatpush2.msra.mxu0 0.0
    %4602 = vmatprep.subr.mxu0 0.0
    %4603 = vmatpush2.msra.mxu0 0.0
    %4604 = vmatprep.mubr.f32.mxu0 0.0
    %4605 = vmatmul.mubr.f32.gmra.mxu0 %v1591
    %v4606 = vpop.f32.mrf.mxu0
    %v4607 = vadd.f32 0.0, %v4606
    %v4608 = vpop.f32.mrf.mxu0
    %4609 = vmatprep.mubr.f32.mxu0 0.0
    %4610 = vmatmul.mubr.f32.gmra.mxu0 %v1594
    %v4611 = vpop.f32.mrf.mxu0
    %v4612 = vadd.f32 0.0, %v4611
    %v4613 = vpop.f32.mrf.mxu0
    %4614 = vmatprep.mubr.f32.mxu0 0.0
    %4615 = vmatmul.mubr.f32.gmra.mxu0 %v1597
    %v4616 = vpop.f32.mrf.mxu0
    %v4617 = vadd.f32 0.0, %v4616
    %v4618 = vpop.f32.mrf.mxu0
    %4619 = vmatprep.mubr.f32.mxu0 0.0
    %4620 = vmatmul.mubr.f32.gmra.mxu0 %v1600
    %v4621 = vpop.f32.mrf.mxu0
    %v4622 = vadd.f32 0.0, %v4621
    %v4623 = vpop.f32.mrf.mxu0
    %4624 = vmatprep.mubr.f32.mxu0 0.0
    %4625 = vmatmul.mubr.f32.gmra.mxu0 %v1603
    %v4626 = vpop.f32.mrf.mxu0
    %v4627 = vadd.f32 0.0, %v4626
    %v4628 = vpop.f32.mrf.mxu0
    %4629 = vmatprep.mubr.f32.mxu0 0.0
    %4630 = vmatmul.mubr.f32.gmra.mxu0 %v1606
    %v4631 = vpop.f32.mrf.mxu0
    %v4632 = vadd.f32 0.0, %v4631
    %v4633 = vpop.f32.mrf.mxu0
    %4634 = vmatprep.mubr.f32.mxu0 0.0
    %4635 = vmatmul.mubr.f32.gmra.mxu0 %v1609
    %v4636 = vpop.f32.mrf.mxu0
    %v4637 = vadd.f32 0.0, %v4636
    %v4638 = vpop.f32.mrf.mxu0
    %4639 = vdwg.mxu0
    %v4640 = vadd.f32 %v4530, %v4607
    %v4641 = vadd.f32 %v4531, %v4612
    %v4642 = vadd.f32 %v4532, %v4617
    %v4643 = vadd.f32 %v4533, %v4622
    %v4644 = vadd.f32 %v4534, %v4627
    %v4645 = vadd.f32 %v4535, %v4632
    %v4646 = vadd.f32 %v4536, %v4637
    %v4647 = vld [vmem:[%s8] sm:$0x1]
    %v4649 = vlaneseq
    %v4650 = vshrl.u32 %v4649, 7
    %v4651 = vsub.s32 0, %v4650
    %v4652 = vrot.slane %v4647, %v4651
    %v4654 = vadd.f32 %v4640, %v4652
    %v4655 = vadd.f32 %v4641, %v4652
    %v4656 = vadd.f32 %v4642, %v4652
    %v4657 = vadd.f32 %v4643, %v4652
    %v4658 = vadd.f32 %v4644, %v4652
    %v4659 = vadd.f32 %v4645, %v4652
    %v4660 = vadd.f32 %v4646, %v4652
    %v4661 = vmax.f32 %v4654, 0.0
    %v4662 = vmax.f32 %v4655, 0.0
    %v4663 = vmax.f32 %v4656, 0.0
    %v4664 = vmax.f32 %v4657, 0.0
    %v4665 = vmax.f32 %v4658, 0.0
    %v4666 = vmax.f32 %v4659, 0.0
    %v4667 = vmax.f32 %v4660, 0.0
    %v4668 = vld [vmem:[%s2] sm:$0xff]
    %v4669 = vld [vmem:[%s2 + $0x8] sm:$0xff]
    %v4670 = vld [vmem:[%s2 + $0x10] sm:$0xff]
    %v4671 = vld [vmem:[%s2 + $0x18] sm:$0xff]
    %v4672 = vld [vmem:[%s2 + $0x20] sm:$0xff]
    %v4673 = vld [vmem:[%s2 + $0x28] sm:$0xff]
    %v4674 = vld [vmem:[%s2 + $0x30] sm:$0xff]
    %v4675 = vld [vmem:[%s2 + $0x38] sm:$0xff]
    %v4676 = vld [vmem:[%s2 + $0x40] sm:$0xff]
    %v4677 = vld [vmem:[%s2 + $0x48] sm:$0xff]
    %v4678 = vld [vmem:[%s2 + $0x50] sm:$0xff]
    %v4679 = vld [vmem:[%s2 + $0x58] sm:$0xff]
    %v4680 = vld [vmem:[%s2 + $0x60] sm:$0xff]
    %v4681 = vld [vmem:[%s2 + $0x68] sm:$0xff]
    %v4682 = vld [vmem:[%s2 + $0x70] sm:$0xff]
    %v4683 = vld [vmem:[%s2 + $0x78] sm:$0xff]
    %v4684 = vld [vmem:[%s2 + $0x80] sm:$0xff]
    %v4685 = vld [vmem:[%s2 + $0x88] sm:$0xff]
    %v4686 = vld [vmem:[%s2 + $0x90] sm:$0xff]
    %v4687 = vld [vmem:[%s2 + $0x98] sm:$0xff]
    %v4688 = vld [vmem:[%s2 + $0xa0] sm:$0xff]
    %v4689 = vld [vmem:[%s2 + $0xa8] sm:$0xff]
    %v4690 = vld [vmem:[%s2 + $0xb0] sm:$0xff]
    %v4691 = vld [vmem:[%s2 + $0xb8] sm:$0xff]
    %v4692 = vld [vmem:[%s2 + $0xc0] sm:$0xff]
    %v4694 = vsel %vm399, %v4668, 0
    %v4697 = vsel %vm399, %v4669, 0
    %v4700 = vsel %vm399, %v4670, 0
    %v4703 = vsel %vm399, %v4671, 0
    %v4706 = vsel %vm399, %v4672, 0
    %v4709 = vsel %vm399, %v4673, 0
    %v4712 = vsel %vm399, %v4674, 0
    %v4715 = vsel %vm399, %v4675, 0
    %v4718 = vsel %vm399, %v4676, 0
    %v4721 = vsel %vm399, %v4677, 0
    %v4724 = vsel %vm399, %v4678, 0
    %v4727 = vsel %vm399, %v4679, 0
    %v4730 = vsel %vm399, %v4680, 0
    %v4733 = vsel %vm399, %v4681, 0
    %v4736 = vsel %vm399, %v4682, 0
    %v4739 = vsel %vm399, %v4683, 0
    %v4742 = vsel %vm399, %v4684, 0
    %v4745 = vsel %vm399, %v4685, 0
    %v4748 = vsel %vm399, %v4686, 0
    %v4751 = vsel %vm399, %v4687, 0
    %v4754 = vsel %vm399, %v4688, 0
    %v4757 = vsel %vm399, %v4689, 0
    %v4760 = vsel %vm399, %v4690, 0
    %v4763 = vsel %vm399, %v4691, 0
    %v4766 = vsel %vm399, %v4692, 0
    %v4769 = vsel %vm421, %v4667, 0
    %4771 = vmatprep.subr.mxu0 0.0
    %4772 = vmatpush1.msra.mxu0 0.0
    %4773 = vmatprep.subr.mxu0 0.0
    %4774 = vmatpush1.msra.mxu0 0.0
    %4775 = vmatprep.subr.mxu0 0.0
    %4776 = vmatpush1.msra.mxu0 0.0
    %4777 = vmatprep.subr.mxu0 0.0
    %4778 = vmatpush1.msra.mxu0 0.0
    %4779 = vmatprep.subr.mxu0 0.0
    %4780 = vmatpush1.msra.mxu0 0.0
    %4781 = vmatprep.subr.mxu0 0.0
    %4782 = vmatpush1.msra.mxu0 0.0
    %4783 = vmatprep.subr.mxu0 0.0
    %4784 = vmatpush1.msra.mxu0 0.0
    %4785 = vmatprep.subr.mxu0 0.0
    %4786 = vmatpush1.msra.mxu0 0.0
    %4787 = vmatprep.subr.mxu0 0.0
    %4788 = vmatpush1.msra.mxu0 0.0
    %4789 = vmatprep.subr.mxu0 0.0
    %4790 = vmatpush1.msra.mxu0 %v4769
    %4791 = vmatprep.subr.mxu0 0.0
    %4792 = vmatpush1.msra.mxu0 %v4666
    %4793 = vmatprep.subr.mxu0 0.0
    %4794 = vmatpush1.msra.mxu0 %v4665
    %4795 = vmatprep.subr.mxu0 0.0
    %4796 = vmatpush1.msra.mxu0 %v4664
    %4797 = vmatprep.subr.mxu0 0.0
    %4798 = vmatpush1.msra.mxu0 %v4663
    %4799 = vmatprep.subr.mxu0 0.0
    %4800 = vmatpush1.msra.mxu0 %v4662
    %4801 = vmatprep.subr.mxu0 0.0
    %4802 = vmatpush1.msra.mxu0 %v4661
    %4803 = vmatprep.subr.mxu0 0.0
    %4804 = vmatpush2.msra.mxu0 0.0
    %4805 = vmatprep.subr.mxu0 0.0
    %4806 = vmatpush2.msra.mxu0 0.0
    %4807 = vmatprep.subr.mxu0 0.0
    %4808 = vmatpush2.msra.mxu0 0.0
    %4809 = vmatprep.subr.mxu0 0.0
    %4810 = vmatpush2.msra.mxu0 0.0
    %4811 = vmatprep.subr.mxu0 0.0
    %4812 = vmatpush2.msra.mxu0 0.0
    %4813 = vmatprep.subr.mxu0 0.0
    %4814 = vmatpush2.msra.mxu0 0.0
    %4815 = vmatprep.subr.mxu0 0.0
    %4816 = vmatpush2.msra.mxu0 0.0
    %4817 = vmatprep.subr.mxu0 0.0
    %4818 = vmatpush2.msra.mxu0 0.0
    %4819 = vmatprep.subr.mxu0 0.0
    %4820 = vmatpush2.msra.mxu0 0.0
    %4821 = vmatprep.subr.mxu0 0.0
    %4822 = vmatpush2.msra.mxu0 0.0
    %4823 = vmatprep.subr.mxu0 0.0
    %4824 = vmatpush2.msra.mxu0 0.0
    %4825 = vmatprep.subr.mxu0 0.0
    %4826 = vmatpush2.msra.mxu0 0.0
    %4827 = vmatprep.subr.mxu0 0.0
    %4828 = vmatpush2.msra.mxu0 0.0
    %4829 = vmatprep.subr.mxu0 0.0
    %4830 = vmatpush2.msra.mxu0 0.0
    %4831 = vmatprep.subr.mxu0 0.0
    %4832 = vmatpush2.msra.mxu0 0.0
    %4833 = vmatprep.subr.mxu0 0.0
    %4834 = vmatpush2.msra.mxu0 0.0
    %4835 = vmatprep.mubr.f32.mxu0 0.0
    %4836 = vmatmul.mubr.f32.gmra.mxu0 %v4694
    %v4837 = vpop.f32.mrf.mxu0
    %v4838 = vadd.f32 0.0, %v4837
    %v4839 = vpop.f32.mrf.mxu0
    %4840 = vmatprep.mubr.f32.mxu0 0.0
    %4841 = vmatmul.mubr.f32.gmra.mxu0 %v4697
    %v4842 = vpop.f32.mrf.mxu0
    %v4843 = vadd.f32 0.0, %v4842
    %v4844 = vpop.f32.mrf.mxu0
    %4845 = vmatprep.mubr.f32.mxu0 0.0
    %4846 = vmatmul.mubr.f32.gmra.mxu0 %v4700
    %v4847 = vpop.f32.mrf.mxu0
    %v4848 = vadd.f32 0.0, %v4847
    %v4849 = vpop.f32.mrf.mxu0
    %4850 = vmatprep.mubr.f32.mxu0 0.0
    %4851 = vmatmul.mubr.f32.gmra.mxu0 %v4703
    %v4852 = vpop.f32.mrf.mxu0
    %v4853 = vadd.f32 0.0, %v4852
    %v4854 = vpop.f32.mrf.mxu0
    %4855 = vmatprep.mubr.f32.mxu0 0.0
    %4856 = vmatmul.mubr.f32.gmra.mxu0 %v4706
    %v4857 = vpop.f32.mrf.mxu0
    %v4858 = vadd.f32 0.0, %v4857
    %v4859 = vpop.f32.mrf.mxu0
    %4860 = vmatprep.mubr.f32.mxu0 0.0
    %4861 = vmatmul.mubr.f32.gmra.mxu0 %v4709
    %v4862 = vpop.f32.mrf.mxu0
    %v4863 = vadd.f32 0.0, %v4862
    %v4864 = vpop.f32.mrf.mxu0
    %4865 = vmatprep.mubr.f32.mxu0 0.0
    %4866 = vmatmul.mubr.f32.gmra.mxu0 %v4712
    %v4867 = vpop.f32.mrf.mxu0
    %v4868 = vadd.f32 0.0, %v4867
    %v4869 = vpop.f32.mrf.mxu0
    %4870 = vmatprep.mubr.f32.mxu0 0.0
    %4871 = vmatmul.mubr.f32.gmra.mxu0 %v4715
    %v4872 = vpop.f32.mrf.mxu0
    %v4873 = vadd.f32 0.0, %v4872
    %v4874 = vpop.f32.mrf.mxu0
    %4875 = vmatprep.mubr.f32.mxu0 0.0
    %4876 = vmatmul.mubr.f32.gmra.mxu0 %v4718
    %v4877 = vpop.f32.mrf.mxu0
    %v4878 = vadd.f32 0.0, %v4877
    %v4879 = vpop.f32.mrf.mxu0
    %4880 = vmatprep.mubr.f32.mxu0 0.0
    %4881 = vmatmul.mubr.f32.gmra.mxu0 %v4721
    %v4882 = vpop.f32.mrf.mxu0
    %v4883 = vadd.f32 0.0, %v4882
    %v4884 = vpop.f32.mrf.mxu0
    %4885 = vmatprep.mubr.f32.mxu0 0.0
    %4886 = vmatmul.mubr.f32.gmra.mxu0 %v4724
    %v4887 = vpop.f32.mrf.mxu0
    %v4888 = vadd.f32 0.0, %v4887
    %v4889 = vpop.f32.mrf.mxu0
    %4890 = vmatprep.mubr.f32.mxu0 0.0
    %4891 = vmatmul.mubr.f32.gmra.mxu0 %v4727
    %v4892 = vpop.f32.mrf.mxu0
    %v4893 = vadd.f32 0.0, %v4892
    %v4894 = vpop.f32.mrf.mxu0
    %4895 = vmatprep.mubr.f32.mxu0 0.0
    %4896 = vmatmul.mubr.f32.gmra.mxu0 %v4730
    %v4897 = vpop.f32.mrf.mxu0
    %v4898 = vadd.f32 0.0, %v4897
    %v4899 = vpop.f32.mrf.mxu0
    %4900 = vmatprep.mubr.f32.mxu0 0.0
    %4901 = vmatmul.mubr.f32.gmra.mxu0 %v4733
    %v4902 = vpop.f32.mrf.mxu0
    %v4903 = vadd.f32 0.0, %v4902
    %v4904 = vpop.f32.mrf.mxu0
    %4905 = vmatprep.mubr.f32.mxu0 0.0
    %4906 = vmatmul.mubr.f32.gmra.mxu0 %v4736
    %v4907 = vpop.f32.mrf.mxu0
    %v4908 = vadd.f32 0.0, %v4907
    %v4909 = vpop.f32.mrf.mxu0
    %4910 = vmatprep.mubr.f32.mxu0 0.0
    %4911 = vmatmul.mubr.f32.gmra.mxu0 %v4739
    %v4912 = vpop.f32.mrf.mxu0
    %v4913 = vadd.f32 0.0, %v4912
    %v4914 = vpop.f32.mrf.mxu0
    %4915 = vmatprep.mubr.f32.mxu0 0.0
    %4916 = vmatmul.mubr.f32.gmra.mxu0 %v4742
    %v4917 = vpop.f32.mrf.mxu0
    %v4918 = vadd.f32 0.0, %v4917
    %v4919 = vpop.f32.mrf.mxu0
    %4920 = vmatprep.mubr.f32.mxu0 0.0
    %4921 = vmatmul.mubr.f32.gmra.mxu0 %v4745
    %v4922 = vpop.f32.mrf.mxu0
    %v4923 = vadd.f32 0.0, %v4922
    %v4924 = vpop.f32.mrf.mxu0
    %4925 = vmatprep.mubr.f32.mxu0 0.0
    %4926 = vmatmul.mubr.f32.gmra.mxu0 %v4748
    %v4927 = vpop.f32.mrf.mxu0
    %v4928 = vadd.f32 0.0, %v4927
    %v4929 = vpop.f32.mrf.mxu0
    %4930 = vmatprep.mubr.f32.mxu0 0.0
    %4931 = vmatmul.mubr.f32.gmra.mxu0 %v4751
    %v4932 = vpop.f32.mrf.mxu0
    %v4933 = vadd.f32 0.0, %v4932
    %v4934 = vpop.f32.mrf.mxu0
    %4935 = vmatprep.mubr.f32.mxu0 0.0
    %4936 = vmatmul.mubr.f32.gmra.mxu0 %v4754
    %v4937 = vpop.f32.mrf.mxu0
    %v4938 = vadd.f32 0.0, %v4937
    %v4939 = vpop.f32.mrf.mxu0
    %4940 = vmatprep.mubr.f32.mxu0 0.0
    %4941 = vmatmul.mubr.f32.gmra.mxu0 %v4757
    %v4942 = vpop.f32.mrf.mxu0
    %v4943 = vadd.f32 0.0, %v4942
    %v4944 = vpop.f32.mrf.mxu0
    %4945 = vmatprep.mubr.f32.mxu0 0.0
    %4946 = vmatmul.mubr.f32.gmra.mxu0 %v4760
    %v4947 = vpop.f32.mrf.mxu0
    %v4948 = vadd.f32 0.0, %v4947
    %v4949 = vpop.f32.mrf.mxu0
    %4950 = vmatprep.mubr.f32.mxu0 0.0
    %4951 = vmatmul.mubr.f32.gmra.mxu0 %v4763
    %v4952 = vpop.f32.mrf.mxu0
    %v4953 = vadd.f32 0.0, %v4952
    %v4954 = vpop.f32.mrf.mxu0
    %4955 = vmatprep.mubr.f32.mxu0 0.0
    %4956 = vmatmul.mubr.f32.gmra.mxu0 %v4766
    %v4957 = vpop.f32.mrf.mxu0
    %v4958 = vadd.f32 0.0, %v4957
    %v4959 = vpop.f32.mrf.mxu0
    %4960 = vdwg.mxu0
    %4962 = vrot.lane.b32.xlu0 %v4843, 64
    %v4963 = vpop.permute.xlu0 %4962
    %4966 = vrot.lane.b32.xlu0 %v4853, 64
    %v4967 = vpop.permute.xlu0 %4966
    %4970 = vrot.lane.b32.xlu0 %v4863, 64
    %v4971 = vpop.permute.xlu0 %4970
    %4974 = vrot.lane.b32.xlu0 %v4873, 64
    %v4975 = vpop.permute.xlu0 %4974
    %4978 = vrot.lane.b32.xlu0 %v4883, 64
    %v4979 = vpop.permute.xlu0 %4978
    %4982 = vrot.lane.b32.xlu0 %v4893, 64
    %v4983 = vpop.permute.xlu0 %4982
    %4986 = vrot.lane.b32.xlu0 %v4903, 64
    %v4987 = vpop.permute.xlu0 %4986
    %4990 = vrot.lane.b32.xlu0 %v4913, 64
    %v4991 = vpop.permute.xlu0 %4990
    %v4993 = vsel %vm3235, %v4838, %v4963
    %v4994 = vsel %vm3235, %v4848, %v4967
    %v4995 = vsel %vm3235, %v4858, %v4971
    %v4996 = vsel %vm3235, %v4868, %v4975
    %v4997 = vsel %vm3235, %v4878, %v4979
    %v4998 = vsel %vm3235, %v4888, %v4983
    %v4999 = vsel %vm3235, %v4898, %v4987
    %v5000 = vsel %vm3235, %v4908, %v4991
    %5002 = vrot.lane.b32.xlu0 %v4923, 64
    %v5003 = vpop.permute.xlu0 %5002
    %5006 = vrot.lane.b32.xlu0 %v4933, 64
    %v5007 = vpop.permute.xlu0 %5006
    %5010 = vrot.lane.b32.xlu0 %v4943, 64
    %v5011 = vpop.permute.xlu0 %5010
    %5014 = vrot.lane.b32.xlu0 %v4953, 64
    %v5015 = vpop.permute.xlu0 %5014
    %v5017 = vsel %vm3235, %v4918, %v5003
    %v5018 = vsel %vm3235, %v4928, %v5007
    %v5019 = vsel %vm3235, %v4938, %v5011
    %v5020 = vsel %vm3235, %v4948, %v5015
    %v5021 = vld [vmem:[#allocation6] sm:$0xff]
    %v5022 = vld [vmem:[#allocation6 + $0x8] sm:$0xff]
    %v5023 = vld [vmem:[#allocation6 + $0x10] sm:$0xff]
    %v5024 = vld [vmem:[#allocation6 + $0x18] sm:$0xff]
    %v5025 = vld [vmem:[#allocation6 + $0x20] sm:$0xff]
    %v5026 = vld [vmem:[#allocation6 + $0x28] sm:$0xff]
    %v5027 = vld [vmem:[#allocation6 + $0x30] sm:$0xff]
    %v5028 = vld [vmem:[#allocation6 + $0x38] sm:$0xff]
    %v5029 = vld [vmem:[#allocation6 + $0x40] sm:$0xff]
    %v5030 = vld [vmem:[#allocation6 + $0x48] sm:$0xff]
    %v5031 = vld [vmem:[#allocation6 + $0x50] sm:$0xff]
    %v5032 = vld [vmem:[#allocation6 + $0x58] sm:$0xff]
    %v5033 = vld [vmem:[#allocation6 + $0x60] sm:$0xff]
    %v5034 = vld [vmem:[#allocation6 + $0x68] sm:$0xff]
    %v5035 = vld [vmem:[#allocation6 + $0x70] sm:$0xff]
    %v5036 = vld [vmem:[#allocation6 + $0x78] sm:$0xff]
    %v5037 = vld [vmem:[#allocation6 + $0x80] sm:$0xff]
    %v5038 = vld [vmem:[#allocation6 + $0x88] sm:$0xff]
    %v5039 = vld [vmem:[#allocation6 + $0x90] sm:$0xff]
    %v5040 = vld [vmem:[#allocation6 + $0x98] sm:$0xff]
    %v5041 = vld [vmem:[#allocation6 + $0xa0] sm:$0xff]
    %v5042 = vld [vmem:[#allocation6 + $0xa8] sm:$0xff]
    %v5043 = vld [vmem:[#allocation6 + $0xb0] sm:$0xff]
    %v5044 = vld [vmem:[#allocation6 + $0xb8] sm:$0xff]
    %v5045 = vld [vmem:[#allocation6 + $0xc0] sm:$0xff]
    %v5046 = vld [vmem:[#allocation6 + $0xc8] sm:$0xff]
    %v5047 = vld [vmem:[#allocation6 + $0xd0] sm:$0xff]
    %v5048 = vld [vmem:[#allocation6 + $0xd8] sm:$0xff]
    %v5049 = vld [vmem:[#allocation6 + $0xe0] sm:$0xff]
    %v5050 = vld [vmem:[#allocation6 + $0xe8] sm:$0xff]
    %v5051 = vld [vmem:[#allocation6 + $0xf0] sm:$0xff]
    %v5052 = vld [vmem:[#allocation6 + $0xf8] sm:$0xff]
    %v5053 = vld [vmem:[#allocation6 + $0x100] sm:$0xff]
    %v5054 = vld [vmem:[#allocation6 + $0x108] sm:$0xff]
    %v5055 = vld [vmem:[#allocation6 + $0x110] sm:$0xff]
    %v5056 = vld [vmem:[#allocation6 + $0x118] sm:$0xff]
    %v5057 = vld [vmem:[#allocation6 + $0x120] sm:$0xff]
    %v5058 = vld [vmem:[#allocation6 + $0x128] sm:$0xff]
    %v5059 = vld [vmem:[#allocation6 + $0x130] sm:$0xff]
    %v5060 = vld [vmem:[#allocation6 + $0x138] sm:$0xff]
    %v5061 = vld [vmem:[#allocation6 + $0x140] sm:$0xff]
    %v5062 = vld [vmem:[#allocation6 + $0x148] sm:$0xff]
    %v5063 = vld [vmem:[#allocation6 + $0x150] sm:$0xff]
    %v5064 = vld [vmem:[#allocation6 + $0x158] sm:$0xff]
    %v5065 = vld [vmem:[#allocation6 + $0x160] sm:$0xff]
    %v5066 = vld [vmem:[#allocation6 + $0x168] sm:$0xff]
    %v5067 = vld [vmem:[#allocation6 + $0x170] sm:$0xff]
    %v5068 = vld [vmem:[#allocation6 + $0x178] sm:$0xff]
    %v5069 = vld [vmem:[#allocation6 + $0x180] sm:$0xff]
    %v5070 = vld [vmem:[#allocation6 + $0x188] sm:$0xff]
    %v5071 = vld [vmem:[#allocation6 + $0x190] sm:$0xff]
    %v5072 = vld [vmem:[#allocation6 + $0x198] sm:$0xff]
    %v5073 = vld [vmem:[#allocation6 + $0x1a0] sm:$0xff]
    %v5074 = vld [vmem:[#allocation6 + $0x1a8] sm:$0xff]
    %v5075 = vld [vmem:[#allocation6 + $0x1b0] sm:$0xff]
    %v5076 = vld [vmem:[#allocation6 + $0x1b8] sm:$0xff]
    %v5077 = vld [vmem:[#allocation6 + $0x1c0] sm:$0xff]
    %v5078 = vld [vmem:[#allocation6 + $0x1c8] sm:$0xff]
    %v5079 = vld [vmem:[#allocation6 + $0x1d0] sm:$0xff]
    %v5080 = vld [vmem:[#allocation6 + $0x1d8] sm:$0xff]
    %v5081 = vld [vmem:[#allocation6 + $0x1e0] sm:$0xff]
    %v5082 = vld [vmem:[#allocation6 + $0x1e8] sm:$0xff]
    %v5083 = vld [vmem:[#allocation6 + $0x1f0] sm:$0xff]
    %v5084 = vld [vmem:[#allocation6 + $0x1f8] sm:$0xff]
    %v5085 = vld [vmem:[#allocation6 + $0x200] sm:$0xff]
    %v5086 = vld [vmem:[#allocation6 + $0x208] sm:$0xff]
    %v5087 = vld [vmem:[#allocation6 + $0x210] sm:$0xff]
    %v5088 = vld [vmem:[#allocation6 + $0x218] sm:$0xff]
    %v5089 = vld [vmem:[#allocation6 + $0x220] sm:$0xff]
    %v5090 = vld [vmem:[#allocation6 + $0x228] sm:$0xff]
    %v5091 = vld [vmem:[#allocation6 + $0x230] sm:$0xff]
    %v5092 = vld [vmem:[#allocation6 + $0x238] sm:$0xff]
    %v5093 = vld [vmem:[#allocation6 + $0x240] sm:$0xff]
    %v5094 = vld [vmem:[#allocation6 + $0x248] sm:$0xff]
    %v5095 = vld [vmem:[#allocation6 + $0x250] sm:$0xff]
    %v5096 = vld [vmem:[#allocation6 + $0x258] sm:$0xff]
    %v5097 = vld [vmem:[#allocation6 + $0x260] sm:$0xff]
    %v5098 = vld [vmem:[#allocation6 + $0x268] sm:$0xff]
    %v5099 = vld [vmem:[#allocation6 + $0x270] sm:$0xff]
    %v5100 = vld [vmem:[#allocation6 + $0x278] sm:$0xff]
    %v5101 = vld [vmem:[#allocation6 + $0x280] sm:$0xff]
    %v5102 = vld [vmem:[#allocation6 + $0x288] sm:$0xff]
    %v5103 = vld [vmem:[#allocation6 + $0x290] sm:$0xff]
    %v5104 = vld [vmem:[#allocation6 + $0x298] sm:$0xff]
    %v5105 = vld [vmem:[#allocation6 + $0x2a0] sm:$0xff]
    %v5106 = vld [vmem:[#allocation6 + $0x2a8] sm:$0xff]
    %v5107 = vld [vmem:[#allocation6 + $0x2b0] sm:$0xff]
    %v5108 = vld [vmem:[#allocation6 + $0x2b8] sm:$0xff]
    %v5109 = vld [vmem:[#allocation6 + $0x2c0] sm:$0xff]
    %v5110 = vld [vmem:[#allocation6 + $0x2c8] sm:$0xff]
    %v5111 = vld [vmem:[#allocation6 + $0x2d0] sm:$0xff]
    %v5112 = vld [vmem:[#allocation6 + $0x2d8] sm:$0xff]
    %v5113 = vld [vmem:[#allocation6 + $0x2e0] sm:$0xff]
    %v5114 = vld [vmem:[#allocation6 + $0x2e8] sm:$0xff]
    %v5115 = vld [vmem:[#allocation6 + $0x2f0] sm:$0xff]
    %v5116 = vld [vmem:[#allocation6 + $0x2f8] sm:$0xff]
    %v5117 = vld [vmem:[#allocation6 + $0x300] sm:$0xff]
    %v5118 = vld [vmem:[#allocation6 + $0x308] sm:$0xff]
    %v5119 = vld [vmem:[#allocation6 + $0x310] sm:$0xff]
    %v5120 = vld [vmem:[#allocation6 + $0x318] sm:$0xff]
    %v5121 = vld [vmem:[#allocation6 + $0x320] sm:$0xff]
    %v5122 = vld [vmem:[#allocation6 + $0x328] sm:$0xff]
    %v5123 = vld [vmem:[#allocation6 + $0x330] sm:$0xff]
    %v5124 = vld [vmem:[#allocation6 + $0x338] sm:$0xff]
    %v5125 = vld [vmem:[#allocation6 + $0x340] sm:$0xff]
    %v5126 = vld [vmem:[#allocation6 + $0x348] sm:$0xff]
    %v5127 = vld [vmem:[#allocation6 + $0x350] sm:$0xff]
    %v5128 = vld [vmem:[#allocation6 + $0x358] sm:$0xff]
    %v5129 = vld [vmem:[#allocation6 + $0x360] sm:$0xff]
    %v5130 = vld [vmem:[#allocation6 + $0x368] sm:$0xff]
    %v5131 = vld [vmem:[#allocation6 + $0x370] sm:$0xff]
    %v5132 = vld [vmem:[#allocation6 + $0x378] sm:$0xff]
    %v5133 = vld [vmem:[#allocation6 + $0x380] sm:$0xff]
    %v5134 = vld [vmem:[#allocation6 + $0x388] sm:$0xff]
    %v5135 = vld [vmem:[#allocation6 + $0x390] sm:$0xff]
    %v5136 = vld [vmem:[#allocation6 + $0x398] sm:$0xff]
    %v5137 = vld [vmem:[#allocation6 + $0x3a0] sm:$0xff]
    %v5138 = vld [vmem:[#allocation6 + $0x3a8] sm:$0xff]
    %v5139 = vld [vmem:[#allocation6 + $0x3b0] sm:$0xff]
    %v5140 = vld [vmem:[#allocation6 + $0x3b8] sm:$0xff]
    %v5141 = vld [vmem:[#allocation6 + $0x3c0] sm:$0xff]
    %v5142 = vld [vmem:[#allocation6 + $0x3c8] sm:$0xff]
    %v5143 = vld [vmem:[#allocation6 + $0x3d0] sm:$0xff]
    %v5144 = vld [vmem:[#allocation6 + $0x3d8] sm:$0xff]
    %v5145 = vld [vmem:[#allocation6 + $0x3e0] sm:$0xff]
    %v5146 = vld [vmem:[#allocation6 + $0x3e8] sm:$0xff]
    %v5147 = vld [vmem:[#allocation6 + $0x3f0] sm:$0xff]
    %v5148 = vld [vmem:[#allocation6 + $0x3f8] sm:$0xff]
    %v5149 = vld [vmem:[#allocation6 + $0x400] sm:$0xff]
    %v5150 = vld [vmem:[#allocation6 + $0x408] sm:$0xff]
    %v5151 = vld [vmem:[#allocation6 + $0x410] sm:$0xff]
    %v5152 = vld [vmem:[#allocation6 + $0x418] sm:$0xff]
    %v5153 = vld [vmem:[#allocation6 + $0x420] sm:$0xff]
    %v5154 = vld [vmem:[#allocation6 + $0x428] sm:$0xff]
    %v5155 = vld [vmem:[#allocation6 + $0x430] sm:$0xff]
    %v5156 = vld [vmem:[#allocation6 + $0x438] sm:$0xff]
    %v5157 = vld [vmem:[#allocation6 + $0x440] sm:$0xff]
    %v5158 = vld [vmem:[#allocation6 + $0x448] sm:$0xff]
    %v5159 = vld [vmem:[#allocation6 + $0x450] sm:$0xff]
    %v5160 = vld [vmem:[#allocation6 + $0x458] sm:$0xff]
    %v5161 = vld [vmem:[#allocation6 + $0x460] sm:$0xff]
    %v5162 = vld [vmem:[#allocation6 + $0x468] sm:$0xff]
    %v5163 = vld [vmem:[#allocation6 + $0x470] sm:$0xff]
    %v5164 = vld [vmem:[#allocation6 + $0x478] sm:$0xff]
    %v5165 = vld [vmem:[#allocation6 + $0x480] sm:$0xff]
    %v5166 = vld [vmem:[#allocation6 + $0x488] sm:$0xff]
    %v5167 = vld [vmem:[#allocation6 + $0x490] sm:$0xff]
    %v5168 = vld [vmem:[#allocation6 + $0x498] sm:$0xff]
    %v5169 = vld [vmem:[#allocation6 + $0x4a0] sm:$0xff]
    %v5170 = vld [vmem:[#allocation6 + $0x4a8] sm:$0xff]
    %v5171 = vld [vmem:[#allocation6 + $0x4b0] sm:$0xff]
    %v5172 = vld [vmem:[#allocation6 + $0x4b8] sm:$0xff]
    %v5173 = vld [vmem:[#allocation6 + $0x4c0] sm:$0xff]
    %v5174 = vld [vmem:[#allocation6 + $0x4c8] sm:$0xff]
    %v5175 = vld [vmem:[#allocation6 + $0x4d0] sm:$0xff]
    %v5176 = vld [vmem:[#allocation6 + $0x4d8] sm:$0xff]
    %v5177 = vld [vmem:[#allocation6 + $0x4e0] sm:$0xff]
    %v5178 = vld [vmem:[#allocation6 + $0x4e8] sm:$0xff]
    %v5179 = vld [vmem:[#allocation6 + $0x4f0] sm:$0xff]
    %v5180 = vld [vmem:[#allocation6 + $0x4f8] sm:$0xff]
    %v5181 = vld [vmem:[#allocation6 + $0x500] sm:$0xff]
    %v5182 = vld [vmem:[#allocation6 + $0x508] sm:$0xff]
    %v5183 = vld [vmem:[#allocation6 + $0x510] sm:$0xff]
    %v5184 = vld [vmem:[#allocation6 + $0x518] sm:$0xff]
    %v5185 = vld [vmem:[#allocation6 + $0x520] sm:$0xff]
    %v5186 = vld [vmem:[#allocation6 + $0x528] sm:$0xff]
    %v5187 = vld [vmem:[#allocation6 + $0x530] sm:$0xff]
    %v5188 = vld [vmem:[#allocation6 + $0x538] sm:$0xff]
    %v5189 = vld [vmem:[#allocation6 + $0x540] sm:$0xff]
    %v5190 = vld [vmem:[#allocation6 + $0x548] sm:$0xff]
    %v5191 = vld [vmem:[#allocation6 + $0x550] sm:$0xff]
    %v5192 = vld [vmem:[#allocation6 + $0x558] sm:$0xff]
    %v5193 = vld [vmem:[#allocation6 + $0x560] sm:$0xff]
    %v5194 = vld [vmem:[#allocation6 + $0x568] sm:$0xff]
    %v5195 = vld [vmem:[#allocation6 + $0x570] sm:$0xff]
    %v5196 = vld [vmem:[#allocation6 + $0x578] sm:$0xff]
    %v5197 = vld [vmem:[#allocation6 + $0x580] sm:$0xff]
    %v5198 = vld [vmem:[#allocation6 + $0x588] sm:$0xff]
    %v5199 = vld [vmem:[#allocation6 + $0x590] sm:$0xff]
    %v5200 = vld [vmem:[#allocation6 + $0x598] sm:$0xff]
    %v5201 = vld [vmem:[#allocation6 + $0x5a0] sm:$0xff]
    %v5202 = vld [vmem:[#allocation6 + $0x5a8] sm:$0xff]
    %v5203 = vld [vmem:[#allocation6 + $0x5b0] sm:$0xff]
    %v5204 = vld [vmem:[#allocation6 + $0x5b8] sm:$0xff]
    %v5205 = vld [vmem:[#allocation6 + $0x5c0] sm:$0xff]
    %v5206 = vld [vmem:[#allocation6 + $0x5c8] sm:$0xff]
    %v5207 = vld [vmem:[#allocation6 + $0x5d0] sm:$0xff]
    %v5208 = vld [vmem:[#allocation6 + $0x5d8] sm:$0xff]
    %v5209 = vld [vmem:[#allocation6 + $0x5e0] sm:$0xff]
    %v5210 = vld [vmem:[#allocation6 + $0x5e8] sm:$0xff]
    %v5211 = vld [vmem:[#allocation6 + $0x5f0] sm:$0xff]
    %v5212 = vld [vmem:[#allocation6 + $0x5f8] sm:$0xff]
    %v5213 = vld [vmem:[#allocation6 + $0x600] sm:$0xff]
    %v5214 = vld [vmem:[#allocation6 + $0x608] sm:$0xff]
    %v5215 = vld [vmem:[#allocation6 + $0x610] sm:$0xff]
    %v5216 = vld [vmem:[#allocation6 + $0x618] sm:$0xff]
    %v5217 = vld [vmem:[#allocation6 + $0x620] sm:$0xff]
    %v5218 = vld [vmem:[#allocation6 + $0x628] sm:$0xff]
    %v5219 = vld [vmem:[#allocation6 + $0x630] sm:$0xff]
    %v5220 = vld [vmem:[#allocation6 + $0x638] sm:$0xff]
    %v5221 = vld [vmem:[%s10] sm:$0x1]
    %v5223 = vlaneseq
    %v5224 = vshrl.u32 %v5223, 7
    %v5225 = vsub.s32 0, %v5224
    %v5226 = vrot.slane %v5221, %v5225
    %v5229 = vsel %vm3235, %v4958, 0
    %5231 = vmatprep.subr.mxu0 0.0
    %5232 = vmatpush1.msra.mxu0 %v5036
    %5233 = vmatprep.subr.mxu0 0.0
    %5234 = vmatpush1.msra.mxu0 %v5035
    %5235 = vmatprep.subr.mxu0 0.0
    %5236 = vmatpush1.msra.mxu0 %v5034
    %5237 = vmatprep.subr.mxu0 0.0
    %5238 = vmatpush1.msra.mxu0 %v5033
    %5239 = vmatprep.subr.mxu0 0.0
    %5240 = vmatpush1.msra.mxu0 %v5032
    %5241 = vmatprep.subr.mxu0 0.0
    %5242 = vmatpush1.msra.mxu0 %v5031
    %5243 = vmatprep.subr.mxu0 0.0
    %5244 = vmatpush1.msra.mxu0 %v5030
    %5245 = vmatprep.subr.mxu0 0.0
    %5246 = vmatpush1.msra.mxu0 %v5029
    %5247 = vmatprep.subr.mxu0 0.0
    %5248 = vmatpush1.msra.mxu0 %v5028
    %5249 = vmatprep.subr.mxu0 0.0
    %5250 = vmatpush1.msra.mxu0 %v5027
    %5251 = vmatprep.subr.mxu0 0.0
    %5252 = vmatpush1.msra.mxu0 %v5026
    %5253 = vmatprep.subr.mxu0 0.0
    %5254 = vmatpush1.msra.mxu0 %v5025
    %5255 = vmatprep.subr.mxu0 0.0
    %5256 = vmatpush1.msra.mxu0 %v5024
    %5257 = vmatprep.subr.mxu0 0.0
    %5258 = vmatpush1.msra.mxu0 %v5023
    %5259 = vmatprep.subr.mxu0 0.0
    %5260 = vmatpush1.msra.mxu0 %v5022
    %5261 = vmatprep.subr.mxu0 0.0
    %5262 = vmatpush1.msra.mxu0 %v5021
    %5263 = vmatprep.subr.mxu0 0.0
    %5264 = vmatpush2.msra.mxu0 %v5052
    %5265 = vmatprep.subr.mxu0 0.0
    %5266 = vmatpush2.msra.mxu0 %v5051
    %5267 = vmatprep.subr.mxu0 0.0
    %5268 = vmatpush2.msra.mxu0 %v5050
    %5269 = vmatprep.subr.mxu0 0.0
    %5270 = vmatpush2.msra.mxu0 %v5049
    %5271 = vmatprep.subr.mxu0 0.0
    %5272 = vmatpush2.msra.mxu0 %v5048
    %5273 = vmatprep.subr.mxu0 0.0
    %5274 = vmatpush2.msra.mxu0 %v5047
    %5275 = vmatprep.subr.mxu0 0.0
    %5276 = vmatpush2.msra.mxu0 %v5046
    %5277 = vmatprep.subr.mxu0 0.0
    %5278 = vmatpush2.msra.mxu0 %v5045
    %5279 = vmatprep.subr.mxu0 0.0
    %5280 = vmatpush2.msra.mxu0 %v5044
    %5281 = vmatprep.subr.mxu0 0.0
    %5282 = vmatpush2.msra.mxu0 %v5043
    %5283 = vmatprep.subr.mxu0 0.0
    %5284 = vmatpush2.msra.mxu0 %v5042
    %5285 = vmatprep.subr.mxu0 0.0
    %5286 = vmatpush2.msra.mxu0 %v5041
    %5287 = vmatprep.subr.mxu0 0.0
    %5288 = vmatpush2.msra.mxu0 %v5040
    %5289 = vmatprep.subr.mxu0 0.0
    %5290 = vmatpush2.msra.mxu0 %v5039
    %5291 = vmatprep.subr.mxu0 0.0
    %5292 = vmatpush2.msra.mxu0 %v5038
    %5293 = vmatprep.subr.mxu0 0.0
    %5294 = vmatpush2.msra.mxu0 %v5037
    %5295 = vmatprep.mubr.f32.mxu0 %v4994
    %5296 = vmatmul.mubr.f32.gmra.mxu0 %v4993
    %v5297 = vpop.f32.mrf.mxu0
    %v5298 = vadd.f32 %v5226, %v5297
    %v5299 = vpop.f32.mrf.mxu0
    %5300 = vdwg.mxu0
    %5301 = vmatprep.subr.mxu0 0.0
    %5302 = vmatpush1.msra.mxu0 %v5068
    %5303 = vmatprep.subr.mxu0 0.0
    %5304 = vmatpush1.msra.mxu0 %v5067
    %5305 = vmatprep.subr.mxu0 0.0
    %5306 = vmatpush1.msra.mxu0 %v5066
    %5307 = vmatprep.subr.mxu0 0.0
    %5308 = vmatpush1.msra.mxu0 %v5065
    %5309 = vmatprep.subr.mxu0 0.0
    %5310 = vmatpush1.msra.mxu0 %v5064
    %5311 = vmatprep.subr.mxu0 0.0
    %5312 = vmatpush1.msra.mxu0 %v5063
    %5313 = vmatprep.subr.mxu0 0.0
    %5314 = vmatpush1.msra.mxu0 %v5062
    %5315 = vmatprep.subr.mxu0 0.0
    %5316 = vmatpush1.msra.mxu0 %v5061
    %5317 = vmatprep.subr.mxu0 0.0
    %5318 = vmatpush1.msra.mxu0 %v5060
    %5319 = vmatprep.subr.mxu0 0.0
    %5320 = vmatpush1.msra.mxu0 %v5059
    %5321 = vmatprep.subr.mxu0 0.0
    %5322 = vmatpush1.msra.mxu0 %v5058
    %5323 = vmatprep.subr.mxu0 0.0
    %5324 = vmatpush1.msra.mxu0 %v5057
    %5325 = vmatprep.subr.mxu0 0.0
    %5326 = vmatpush1.msra.mxu0 %v5056
    %5327 = vmatprep.subr.mxu0 0.0
    %5328 = vmatpush1.msra.mxu0 %v5055
    %5329 = vmatprep.subr.mxu0 0.0
    %5330 = vmatpush1.msra.mxu0 %v5054
    %5331 = vmatprep.subr.mxu0 0.0
    %5332 = vmatpush1.msra.mxu0 %v5053
    %5333 = vmatprep.subr.mxu0 0.0
    %5334 = vmatpush2.msra.mxu0 %v5084
    %5335 = vmatprep.subr.mxu0 0.0
    %5336 = vmatpush2.msra.mxu0 %v5083
    %5337 = vmatprep.subr.mxu0 0.0
    %5338 = vmatpush2.msra.mxu0 %v5082
    %5339 = vmatprep.subr.mxu0 0.0
    %5340 = vmatpush2.msra.mxu0 %v5081
    %5341 = vmatprep.subr.mxu0 0.0
    %5342 = vmatpush2.msra.mxu0 %v5080
    %5343 = vmatprep.subr.mxu0 0.0
    %5344 = vmatpush2.msra.mxu0 %v5079
    %5345 = vmatprep.subr.mxu0 0.0
    %5346 = vmatpush2.msra.mxu0 %v5078
    %5347 = vmatprep.subr.mxu0 0.0
    %5348 = vmatpush2.msra.mxu0 %v5077
    %5349 = vmatprep.subr.mxu0 0.0
    %5350 = vmatpush2.msra.mxu0 %v5076
    %5351 = vmatprep.subr.mxu0 0.0
    %5352 = vmatpush2.msra.mxu0 %v5075
    %5353 = vmatprep.subr.mxu0 0.0
    %5354 = vmatpush2.msra.mxu0 %v5074
    %5355 = vmatprep.subr.mxu0 0.0
    %5356 = vmatpush2.msra.mxu0 %v5073
    %5357 = vmatprep.subr.mxu0 0.0
    %5358 = vmatpush2.msra.mxu0 %v5072
    %5359 = vmatprep.subr.mxu0 0.0
    %5360 = vmatpush2.msra.mxu0 %v5071
    %5361 = vmatprep.subr.mxu0 0.0
    %5362 = vmatpush2.msra.mxu0 %v5070
    %5363 = vmatprep.subr.mxu0 0.0
    %5364 = vmatpush2.msra.mxu0 %v5069
    %5365 = vmatprep.mubr.f32.mxu0 %v4996
    %5366 = vmatmul.mubr.f32.gmra.mxu0 %v4995
    %v5367 = vpop.f32.mrf.mxu0
    %v5368 = vadd.f32 %v5298, %v5367
    %v5369 = vpop.f32.mrf.mxu0
    %5370 = vdwg.mxu0
    %5371 = vmatprep.subr.mxu0 0.0
    %5372 = vmatpush1.msra.mxu0 %v5100
    %5373 = vmatprep.subr.mxu0 0.0
    %5374 = vmatpush1.msra.mxu0 %v5099
    %5375 = vmatprep.subr.mxu0 0.0
    %5376 = vmatpush1.msra.mxu0 %v5098
    %5377 = vmatprep.subr.mxu0 0.0
    %5378 = vmatpush1.msra.mxu0 %v5097
    %5379 = vmatprep.subr.mxu0 0.0
    %5380 = vmatpush1.msra.mxu0 %v5096
    %5381 = vmatprep.subr.mxu0 0.0
    %5382 = vmatpush1.msra.mxu0 %v5095
    %5383 = vmatprep.subr.mxu0 0.0
    %5384 = vmatpush1.msra.mxu0 %v5094
    %5385 = vmatprep.subr.mxu0 0.0
    %5386 = vmatpush1.msra.mxu0 %v5093
    %5387 = vmatprep.subr.mxu0 0.0
    %5388 = vmatpush1.msra.mxu0 %v5092
    %5389 = vmatprep.subr.mxu0 0.0
    %5390 = vmatpush1.msra.mxu0 %v5091
    %5391 = vmatprep.subr.mxu0 0.0
    %5392 = vmatpush1.msra.mxu0 %v5090
    %5393 = vmatprep.subr.mxu0 0.0
    %5394 = vmatpush1.msra.mxu0 %v5089
    %5395 = vmatprep.subr.mxu0 0.0
    %5396 = vmatpush1.msra.mxu0 %v5088
    %5397 = vmatprep.subr.mxu0 0.0
    %5398 = vmatpush1.msra.mxu0 %v5087
    %5399 = vmatprep.subr.mxu0 0.0
    %5400 = vmatpush1.msra.mxu0 %v5086
    %5401 = vmatprep.subr.mxu0 0.0
    %5402 = vmatpush1.msra.mxu0 %v5085
    %5403 = vmatprep.subr.mxu0 0.0
    %5404 = vmatpush2.msra.mxu0 %v5116
    %5405 = vmatprep.subr.mxu0 0.0
    %5406 = vmatpush2.msra.mxu0 %v5115
    %5407 = vmatprep.subr.mxu0 0.0
    %5408 = vmatpush2.msra.mxu0 %v5114
    %5409 = vmatprep.subr.mxu0 0.0
    %5410 = vmatpush2.msra.mxu0 %v5113
    %5411 = vmatprep.subr.mxu0 0.0
    %5412 = vmatpush2.msra.mxu0 %v5112
    %5413 = vmatprep.subr.mxu0 0.0
    %5414 = vmatpush2.msra.mxu0 %v5111
    %5415 = vmatprep.subr.mxu0 0.0
    %5416 = vmatpush2.msra.mxu0 %v5110
    %5417 = vmatprep.subr.mxu0 0.0
    %5418 = vmatpush2.msra.mxu0 %v5109
    %5419 = vmatprep.subr.mxu0 0.0
    %5420 = vmatpush2.msra.mxu0 %v5108
    %5421 = vmatprep.subr.mxu0 0.0
    %5422 = vmatpush2.msra.mxu0 %v5107
    %5423 = vmatprep.subr.mxu0 0.0
    %5424 = vmatpush2.msra.mxu0 %v5106
    %5425 = vmatprep.subr.mxu0 0.0
    %5426 = vmatpush2.msra.mxu0 %v5105
    %5427 = vmatprep.subr.mxu0 0.0
    %5428 = vmatpush2.msra.mxu0 %v5104
    %5429 = vmatprep.subr.mxu0 0.0
    %5430 = vmatpush2.msra.mxu0 %v5103
    %5431 = vmatprep.subr.mxu0 0.0
    %5432 = vmatpush2.msra.mxu0 %v5102
    %5433 = vmatprep.subr.mxu0 0.0
    %5434 = vmatpush2.msra.mxu0 %v5101
    %5435 = vmatprep.mubr.f32.mxu0 %v4998
    %5436 = vmatmul.mubr.f32.gmra.mxu0 %v4997
    %v5437 = vpop.f32.mrf.mxu0
    %v5438 = vadd.f32 %v5368, %v5437
    %v5439 = vpop.f32.mrf.mxu0
    %5440 = vdwg.mxu0
    %5441 = vmatprep.subr.mxu0 0.0
    %5442 = vmatpush1.msra.mxu0 %v5132
    %5443 = vmatprep.subr.mxu0 0.0
    %5444 = vmatpush1.msra.mxu0 %v5131
    %5445 = vmatprep.subr.mxu0 0.0
    %5446 = vmatpush1.msra.mxu0 %v5130
    %5447 = vmatprep.subr.mxu0 0.0
    %5448 = vmatpush1.msra.mxu0 %v5129
    %5449 = vmatprep.subr.mxu0 0.0
    %5450 = vmatpush1.msra.mxu0 %v5128
    %5451 = vmatprep.subr.mxu0 0.0
    %5452 = vmatpush1.msra.mxu0 %v5127
    %5453 = vmatprep.subr.mxu0 0.0
    %5454 = vmatpush1.msra.mxu0 %v5126
    %5455 = vmatprep.subr.mxu0 0.0
    %5456 = vmatpush1.msra.mxu0 %v5125
    %5457 = vmatprep.subr.mxu0 0.0
    %5458 = vmatpush1.msra.mxu0 %v5124
    %5459 = vmatprep.subr.mxu0 0.0
    %5460 = vmatpush1.msra.mxu0 %v5123
    %5461 = vmatprep.subr.mxu0 0.0
    %5462 = vmatpush1.msra.mxu0 %v5122
    %5463 = vmatprep.subr.mxu0 0.0
    %5464 = vmatpush1.msra.mxu0 %v5121
    %5465 = vmatprep.subr.mxu0 0.0
    %5466 = vmatpush1.msra.mxu0 %v5120
    %5467 = vmatprep.subr.mxu0 0.0
    %5468 = vmatpush1.msra.mxu0 %v5119
    %5469 = vmatprep.subr.mxu0 0.0
    %5470 = vmatpush1.msra.mxu0 %v5118
    %5471 = vmatprep.subr.mxu0 0.0
    %5472 = vmatpush1.msra.mxu0 %v5117
    %5473 = vmatprep.subr.mxu0 0.0
    %5474 = vmatpush2.msra.mxu0 %v5148
    %5475 = vmatprep.subr.mxu0 0.0
    %5476 = vmatpush2.msra.mxu0 %v5147
    %5477 = vmatprep.subr.mxu0 0.0
    %5478 = vmatpush2.msra.mxu0 %v5146
    %5479 = vmatprep.subr.mxu0 0.0
    %5480 = vmatpush2.msra.mxu0 %v5145
    %5481 = vmatprep.subr.mxu0 0.0
    %5482 = vmatpush2.msra.mxu0 %v5144
    %5483 = vmatprep.subr.mxu0 0.0
    %5484 = vmatpush2.msra.mxu0 %v5143
    %5485 = vmatprep.subr.mxu0 0.0
    %5486 = vmatpush2.msra.mxu0 %v5142
    %5487 = vmatprep.subr.mxu0 0.0
    %5488 = vmatpush2.msra.mxu0 %v5141
    %5489 = vmatprep.subr.mxu0 0.0
    %5490 = vmatpush2.msra.mxu0 %v5140
    %5491 = vmatprep.subr.mxu0 0.0
    %5492 = vmatpush2.msra.mxu0 %v5139
    %5493 = vmatprep.subr.mxu0 0.0
    %5494 = vmatpush2.msra.mxu0 %v5138
    %5495 = vmatprep.subr.mxu0 0.0
    %5496 = vmatpush2.msra.mxu0 %v5137
    %5497 = vmatprep.subr.mxu0 0.0
    %5498 = vmatpush2.msra.mxu0 %v5136
    %5499 = vmatprep.subr.mxu0 0.0
    %5500 = vmatpush2.msra.mxu0 %v5135
    %5501 = vmatprep.subr.mxu0 0.0
    %5502 = vmatpush2.msra.mxu0 %v5134
    %5503 = vmatprep.subr.mxu0 0.0
    %5504 = vmatpush2.msra.mxu0 %v5133
    %5505 = vmatprep.mubr.f32.mxu0 %v5000
    %5506 = vmatmul.mubr.f32.gmra.mxu0 %v4999
    %v5507 = vpop.f32.mrf.mxu0
    %v5508 = vadd.f32 %v5438, %v5507
    %v5509 = vpop.f32.mrf.mxu0
    %5510 = vdwg.mxu0
    %5511 = vmatprep.subr.mxu0 0.0
    %5512 = vmatpush1.msra.mxu0 %v5164
    %5513 = vmatprep.subr.mxu0 0.0
    %5514 = vmatpush1.msra.mxu0 %v5163
    %5515 = vmatprep.subr.mxu0 0.0
    %5516 = vmatpush1.msra.mxu0 %v5162
    %5517 = vmatprep.subr.mxu0 0.0
    %5518 = vmatpush1.msra.mxu0 %v5161
    %5519 = vmatprep.subr.mxu0 0.0
    %5520 = vmatpush1.msra.mxu0 %v5160
    %5521 = vmatprep.subr.mxu0 0.0
    %5522 = vmatpush1.msra.mxu0 %v5159
    %5523 = vmatprep.subr.mxu0 0.0
    %5524 = vmatpush1.msra.mxu0 %v5158
    %5525 = vmatprep.subr.mxu0 0.0
    %5526 = vmatpush1.msra.mxu0 %v5157
    %5527 = vmatprep.subr.mxu0 0.0
    %5528 = vmatpush1.msra.mxu0 %v5156
    %5529 = vmatprep.subr.mxu0 0.0
    %5530 = vmatpush1.msra.mxu0 %v5155
    %5531 = vmatprep.subr.mxu0 0.0
    %5532 = vmatpush1.msra.mxu0 %v5154
    %5533 = vmatprep.subr.mxu0 0.0
    %5534 = vmatpush1.msra.mxu0 %v5153
    %5535 = vmatprep.subr.mxu0 0.0
    %5536 = vmatpush1.msra.mxu0 %v5152
    %5537 = vmatprep.subr.mxu0 0.0
    %5538 = vmatpush1.msra.mxu0 %v5151
    %5539 = vmatprep.subr.mxu0 0.0
    %5540 = vmatpush1.msra.mxu0 %v5150
    %5541 = vmatprep.subr.mxu0 0.0
    %5542 = vmatpush1.msra.mxu0 %v5149
    %5543 = vmatprep.subr.mxu0 0.0
    %5544 = vmatpush2.msra.mxu0 %v5180
    %5545 = vmatprep.subr.mxu0 0.0
    %5546 = vmatpush2.msra.mxu0 %v5179
    %5547 = vmatprep.subr.mxu0 0.0
    %5548 = vmatpush2.msra.mxu0 %v5178
    %5549 = vmatprep.subr.mxu0 0.0
    %5550 = vmatpush2.msra.mxu0 %v5177
    %5551 = vmatprep.subr.mxu0 0.0
    %5552 = vmatpush2.msra.mxu0 %v5176
    %5553 = vmatprep.subr.mxu0 0.0
    %5554 = vmatpush2.msra.mxu0 %v5175
    %5555 = vmatprep.subr.mxu0 0.0
    %5556 = vmatpush2.msra.mxu0 %v5174
    %5557 = vmatprep.subr.mxu0 0.0
    %5558 = vmatpush2.msra.mxu0 %v5173
    %5559 = vmatprep.subr.mxu0 0.0
    %5560 = vmatpush2.msra.mxu0 %v5172
    %5561 = vmatprep.subr.mxu0 0.0
    %5562 = vmatpush2.msra.mxu0 %v5171
    %5563 = vmatprep.subr.mxu0 0.0
    %5564 = vmatpush2.msra.mxu0 %v5170
    %5565 = vmatprep.subr.mxu0 0.0
    %5566 = vmatpush2.msra.mxu0 %v5169
    %5567 = vmatprep.subr.mxu0 0.0
    %5568 = vmatpush2.msra.mxu0 %v5168
    %5569 = vmatprep.subr.mxu0 0.0
    %5570 = vmatpush2.msra.mxu0 %v5167
    %5571 = vmatprep.subr.mxu0 0.0
    %5572 = vmatpush2.msra.mxu0 %v5166
    %5573 = vmatprep.subr.mxu0 0.0
    %5574 = vmatpush2.msra.mxu0 %v5165
    %5575 = vmatprep.mubr.f32.mxu0 %v5018
    %5576 = vmatmul.mubr.f32.gmra.mxu0 %v5017
    %v5577 = vpop.f32.mrf.mxu0
    %v5578 = vadd.f32 %v5508, %v5577
    %v5579 = vpop.f32.mrf.mxu0
    %5580 = vdwg.mxu0
    %5581 = vmatprep.subr.mxu0 0.0
    %5582 = vmatpush1.msra.mxu0 %v5196
    %5583 = vmatprep.subr.mxu0 0.0
    %5584 = vmatpush1.msra.mxu0 %v5195
    %5585 = vmatprep.subr.mxu0 0.0
    %5586 = vmatpush1.msra.mxu0 %v5194
    %5587 = vmatprep.subr.mxu0 0.0
    %5588 = vmatpush1.msra.mxu0 %v5193
    %5589 = vmatprep.subr.mxu0 0.0
    %5590 = vmatpush1.msra.mxu0 %v5192
    %5591 = vmatprep.subr.mxu0 0.0
    %5592 = vmatpush1.msra.mxu0 %v5191
    %5593 = vmatprep.subr.mxu0 0.0
    %5594 = vmatpush1.msra.mxu0 %v5190
    %5595 = vmatprep.subr.mxu0 0.0
    %5596 = vmatpush1.msra.mxu0 %v5189
    %5597 = vmatprep.subr.mxu0 0.0
    %5598 = vmatpush1.msra.mxu0 %v5188
    %5599 = vmatprep.subr.mxu0 0.0
    %5600 = vmatpush1.msra.mxu0 %v5187
    %5601 = vmatprep.subr.mxu0 0.0
    %5602 = vmatpush1.msra.mxu0 %v5186
    %5603 = vmatprep.subr.mxu0 0.0
    %5604 = vmatpush1.msra.mxu0 %v5185
    %5605 = vmatprep.subr.mxu0 0.0
    %5606 = vmatpush1.msra.mxu0 %v5184
    %5607 = vmatprep.subr.mxu0 0.0
    %5608 = vmatpush1.msra.mxu0 %v5183
    %5609 = vmatprep.subr.mxu0 0.0
    %5610 = vmatpush1.msra.mxu0 %v5182
    %5611 = vmatprep.subr.mxu0 0.0
    %5612 = vmatpush1.msra.mxu0 %v5181
    %5613 = vmatprep.subr.mxu0 0.0
    %5614 = vmatpush2.msra.mxu0 %v5212
    %5615 = vmatprep.subr.mxu0 0.0
    %5616 = vmatpush2.msra.mxu0 %v5211
    %5617 = vmatprep.subr.mxu0 0.0
    %5618 = vmatpush2.msra.mxu0 %v5210
    %5619 = vmatprep.subr.mxu0 0.0
    %5620 = vmatpush2.msra.mxu0 %v5209
    %5621 = vmatprep.subr.mxu0 0.0
    %5622 = vmatpush2.msra.mxu0 %v5208
    %5623 = vmatprep.subr.mxu0 0.0
    %5624 = vmatpush2.msra.mxu0 %v5207
    %5625 = vmatprep.subr.mxu0 0.0
    %5626 = vmatpush2.msra.mxu0 %v5206
    %5627 = vmatprep.subr.mxu0 0.0
    %5628 = vmatpush2.msra.mxu0 %v5205
    %5629 = vmatprep.subr.mxu0 0.0
    %5630 = vmatpush2.msra.mxu0 %v5204
    %5631 = vmatprep.subr.mxu0 0.0
    %5632 = vmatpush2.msra.mxu0 %v5203
    %5633 = vmatprep.subr.mxu0 0.0
    %5634 = vmatpush2.msra.mxu0 %v5202
    %5635 = vmatprep.subr.mxu0 0.0
    %5636 = vmatpush2.msra.mxu0 %v5201
    %5637 = vmatprep.subr.mxu0 0.0
    %5638 = vmatpush2.msra.mxu0 %v5200
    %5639 = vmatprep.subr.mxu0 0.0
    %5640 = vmatpush2.msra.mxu0 %v5199
    %5641 = vmatprep.subr.mxu0 0.0
    %5642 = vmatpush2.msra.mxu0 %v5198
    %5643 = vmatprep.subr.mxu0 0.0
    %5644 = vmatpush2.msra.mxu0 %v5197
    %5645 = vmatprep.mubr.f32.mxu0 %v5020
    %5646 = vmatmul.mubr.f32.gmra.mxu0 %v5019
    %v5647 = vpop.f32.mrf.mxu0
    %v5648 = vadd.f32 %v5578, %v5647
    %v5649 = vpop.f32.mrf.mxu0
    %5650 = vdwg.mxu0
    %5651 = vmatprep.subr.mxu0 0.0
    %5652 = vmatpush1.msra.mxu0 0.0
    %5653 = vmatprep.subr.mxu0 0.0
    %5654 = vmatpush1.msra.mxu0 0.0
    %5655 = vmatprep.subr.mxu0 0.0
    %5656 = vmatpush1.msra.mxu0 0.0
    %5657 = vmatprep.subr.mxu0 0.0
    %5658 = vmatpush1.msra.mxu0 0.0
    %5659 = vmatprep.subr.mxu0 0.0
    %5660 = vmatpush1.msra.mxu0 0.0
    %5661 = vmatprep.subr.mxu0 0.0
    %5662 = vmatpush1.msra.mxu0 0.0
    %5663 = vmatprep.subr.mxu0 0.0
    %5664 = vmatpush1.msra.mxu0 0.0
    %5665 = vmatprep.subr.mxu0 0.0
    %5666 = vmatpush1.msra.mxu0 0.0
    %5667 = vmatprep.subr.mxu0 0.0
    %5668 = vmatpush1.msra.mxu0 %v5220
    %5669 = vmatprep.subr.mxu0 0.0
    %5670 = vmatpush1.msra.mxu0 %v5219
    %5671 = vmatprep.subr.mxu0 0.0
    %5672 = vmatpush1.msra.mxu0 %v5218
    %5673 = vmatprep.subr.mxu0 0.0
    %5674 = vmatpush1.msra.mxu0 %v5217
    %5675 = vmatprep.subr.mxu0 0.0
    %5676 = vmatpush1.msra.mxu0 %v5216
    %5677 = vmatprep.subr.mxu0 0.0
    %5678 = vmatpush1.msra.mxu0 %v5215
    %5679 = vmatprep.subr.mxu0 0.0
    %5680 = vmatpush1.msra.mxu0 %v5214
    %5681 = vmatprep.subr.mxu0 0.0
    %5682 = vmatpush1.msra.mxu0 %v5213
    %5683 = vmatprep.subr.mxu0 0.0
    %5684 = vmatpush2.msra.mxu0 0.0
    %5685 = vmatprep.subr.mxu0 0.0
    %5686 = vmatpush2.msra.mxu0 0.0
    %5687 = vmatprep.subr.mxu0 0.0
    %5688 = vmatpush2.msra.mxu0 0.0
    %5689 = vmatprep.subr.mxu0 0.0
    %5690 = vmatpush2.msra.mxu0 0.0
    %5691 = vmatprep.subr.mxu0 0.0
    %5692 = vmatpush2.msra.mxu0 0.0
    %5693 = vmatprep.subr.mxu0 0.0
    %5694 = vmatpush2.msra.mxu0 0.0
    %5695 = vmatprep.subr.mxu0 0.0
    %5696 = vmatpush2.msra.mxu0 0.0
    %5697 = vmatprep.subr.mxu0 0.0
    %5698 = vmatpush2.msra.mxu0 0.0
    %5699 = vmatprep.subr.mxu0 0.0
    %5700 = vmatpush2.msra.mxu0 0.0
    %5701 = vmatprep.subr.mxu0 0.0
    %5702 = vmatpush2.msra.mxu0 0.0
    %5703 = vmatprep.subr.mxu0 0.0
    %5704 = vmatpush2.msra.mxu0 0.0
    %5705 = vmatprep.subr.mxu0 0.0
    %5706 = vmatpush2.msra.mxu0 0.0
    %5707 = vmatprep.subr.mxu0 0.0
    %5708 = vmatpush2.msra.mxu0 0.0
    %5709 = vmatprep.subr.mxu0 0.0
    %5710 = vmatpush2.msra.mxu0 0.0
    %5711 = vmatprep.subr.mxu0 0.0
    %5712 = vmatpush2.msra.mxu0 0.0
    %5713 = vmatprep.subr.mxu0 0.0
    %5714 = vmatpush2.msra.mxu0 0.0
    %5715 = vmatprep.mubr.f32.mxu0 0.0
    %5716 = vmatmul.mubr.f32.gmra.mxu0 %v5229
    %v5717 = vpop.f32.mrf.mxu0
    %v5718 = vadd.f32 %v5648, %v5717
    %v5719 = vpop.f32.mrf.mxu0
    %5720 = vdwg.mxu0
    %v5721 = vmax.f32 %v5718, 0.0
    %v5722 = vld [vmem:[#allocation7] sm:$0xff]
    %v5723 = vld [vmem:[#allocation7 + $0x8] sm:$0xff]
    %v5724 = vld [vmem:[#allocation7 + $0x10] sm:$0xff]
    %v5725 = vld [vmem:[#allocation7 + $0x18] sm:$0xff]
    %v5726 = vld [vmem:[#allocation7 + $0x20] sm:$0xff]
    %v5727 = vld [vmem:[#allocation7 + $0x28] sm:$0xff]
    %v5728 = vld [vmem:[#allocation7 + $0x30] sm:$0xff]
    %v5729 = vld [vmem:[#allocation7 + $0x38] sm:$0xff]
    %v5730 = vld [vmem:[#allocation7 + $0x40] sm:$0xff]
    %v5731 = vld [vmem:[#allocation7 + $0x48] sm:$0xff]
    %v5732 = vld [vmem:[#allocation7 + $0x50] sm:$0xff]
    %v5733 = vld [vmem:[#allocation7 + $0x58] sm:$0xff]
    %v5734 = vld [vmem:[#allocation7 + $0x60] sm:$0xff]
    %v5735 = vld [vmem:[#allocation7 + $0x68] sm:$0xff]
    %v5736 = vld [vmem:[#allocation7 + $0x70] sm:$0xff]
    %v5737 = vld [vmem:[#allocation7 + $0x78] sm:$0xff]
    %v5738 = vld [vmem:[%s12] sm:$0x1]
    %v5740 = vlaneseq
    %v5741 = vshrl.u32 %v5740, 7
    %v5742 = vsub.s32 0, %v5741
    %v5743 = vrot.slane %v5738, %v5742
    %5745 = vmatprep.subr.mxu0 0.0
    %5746 = vmatpush1.msra.mxu0 %v5737
    %5747 = vmatprep.subr.mxu0 0.0
    %5748 = vmatpush1.msra.mxu0 %v5736
    %5749 = vmatprep.subr.mxu0 0.0
    %5750 = vmatpush1.msra.mxu0 %v5735
    %5751 = vmatprep.subr.mxu0 0.0
    %5752 = vmatpush1.msra.mxu0 %v5734
    %5753 = vmatprep.subr.mxu0 0.0
    %5754 = vmatpush1.msra.mxu0 %v5733
    %5755 = vmatprep.subr.mxu0 0.0
    %5756 = vmatpush1.msra.mxu0 %v5732
    %5757 = vmatprep.subr.mxu0 0.0
    %5758 = vmatpush1.msra.mxu0 %v5731
    %5759 = vmatprep.subr.mxu0 0.0
    %5760 = vmatpush1.msra.mxu0 %v5730
    %5761 = vmatprep.subr.mxu0 0.0
    %5762 = vmatpush1.msra.mxu0 %v5729
    %5763 = vmatprep.subr.mxu0 0.0
    %5764 = vmatpush1.msra.mxu0 %v5728
    %5765 = vmatprep.subr.mxu0 0.0
    %5766 = vmatpush1.msra.mxu0 %v5727
    %5767 = vmatprep.subr.mxu0 0.0
    %5768 = vmatpush1.msra.mxu0 %v5726
    %5769 = vmatprep.subr.mxu0 0.0
    %5770 = vmatpush1.msra.mxu0 %v5725
    %5771 = vmatprep.subr.mxu0 0.0
    %5772 = vmatpush1.msra.mxu0 %v5724
    %5773 = vmatprep.subr.mxu0 0.0
    %5774 = vmatpush1.msra.mxu0 %v5723
    %5775 = vmatprep.subr.mxu0 0.0
    %5776 = vmatpush1.msra.mxu0 %v5722
    %5777 = vmatprep.subr.mxu0 0.0
    %5778 = vmatpush2.msra.mxu0 0.0
    %5779 = vmatprep.subr.mxu0 0.0
    %5780 = vmatpush2.msra.mxu0 0.0
    %5781 = vmatprep.subr.mxu0 0.0
    %5782 = vmatpush2.msra.mxu0 0.0
    %5783 = vmatprep.subr.mxu0 0.0
    %5784 = vmatpush2.msra.mxu0 0.0
    %5785 = vmatprep.subr.mxu0 0.0
    %5786 = vmatpush2.msra.mxu0 0.0
    %5787 = vmatprep.subr.mxu0 0.0
    %5788 = vmatpush2.msra.mxu0 0.0
    %5789 = vmatprep.subr.mxu0 0.0
    %5790 = vmatpush2.msra.mxu0 0.0
    %5791 = vmatprep.subr.mxu0 0.0
    %5792 = vmatpush2.msra.mxu0 0.0
    %5793 = vmatprep.subr.mxu0 0.0
    %5794 = vmatpush2.msra.mxu0 0.0
    %5795 = vmatprep.subr.mxu0 0.0
    %5796 = vmatpush2.msra.mxu0 0.0
    %5797 = vmatprep.subr.mxu0 0.0
    %5798 = vmatpush2.msra.mxu0 0.0
    %5799 = vmatprep.subr.mxu0 0.0
    %5800 = vmatpush2.msra.mxu0 0.0
    %5801 = vmatprep.subr.mxu0 0.0
    %5802 = vmatpush2.msra.mxu0 0.0
    %5803 = vmatprep.subr.mxu0 0.0
    %5804 = vmatpush2.msra.mxu0 0.0
    %5805 = vmatprep.subr.mxu0 0.0
    %5806 = vmatpush2.msra.mxu0 0.0
    %5807 = vmatprep.subr.mxu0 0.0
    %5808 = vmatpush2.msra.mxu0 0.0
    %5809 = vmatprep.mubr.f32.mxu0 0.0
    %5810 = vmatmul.mubr.f32.gmra.mxu0 %v5721
    %v5811 = vpop.f32.mrf.mxu0
    %v5812 = vadd.f32 %v5743, %v5811
    %v5813 = vpop.f32.mrf.mxu0
    %5814 = vdwg.mxu0
    %v5815 = vmax.f32 %v5812, 0.0
    %v5816 = vld [vmem:[#allocation9] sm:$0xff]
    %v5817 = vld [vmem:[#allocation9 + $0x8] sm:$0xff]
    %v5818 = vld [vmem:[#allocation9 + $0x10] sm:$0xff]
    %v5819 = vld [vmem:[#allocation9 + $0x18] sm:$0xff]
    %v5820 = vld [vmem:[#allocation9 + $0x20] sm:$0xff]
    %v5821 = vld [vmem:[#allocation9 + $0x28] sm:$0xff]
    %v5822 = vld [vmem:[#allocation9 + $0x30] sm:$0xff]
    %v5823 = vld [vmem:[#allocation9 + $0x38] sm:$0xff]
    %v5824 = vld [vmem:[#allocation9 + $0x40] sm:$0xff]
    %v5825 = vld [vmem:[#allocation9 + $0x48] sm:$0xff]
    %v5826 = vld [vmem:[#allocation9 + $0x50] sm:$0xff]
    %v5827 = vld [vmem:[#allocation9 + $0x58] sm:$0xff]
    %v5828 = vld [vmem:[#allocation9 + $0x60] sm:$0xff]
    %v5829 = vld [vmem:[#allocation9 + $0x68] sm:$0xff]
    %v5830 = vld [vmem:[#allocation9 + $0x70] sm:$0xff]
    %v5831 = vld [vmem:[#allocation9 + $0x78] sm:$0xff]
    %v5832 = vld [vmem:[%s14] sm:$0x1]
    %v5834 = vlaneseq
    %v5835 = vshrl.u32 %v5834, 7
    %v5836 = vsub.s32 0, %v5835
    %v5837 = vrot.slane %v5832, %v5836
    %5839 = vmatprep.subr.mxu0 0.0
    %5840 = vmatpush1.msra.mxu0 %v5831
    %5841 = vmatprep.subr.mxu0 0.0
    %5842 = vmatpush1.msra.mxu0 %v5830
    %5843 = vmatprep.subr.mxu0 0.0
    %5844 = vmatpush1.msra.mxu0 %v5829
    %5845 = vmatprep.subr.mxu0 0.0
    %5846 = vmatpush1.msra.mxu0 %v5828
    %5847 = vmatprep.subr.mxu0 0.0
    %5848 = vmatpush1.msra.mxu0 %v5827
    %5849 = vmatprep.subr.mxu0 0.0
    %5850 = vmatpush1.msra.mxu0 %v5826
    %5851 = vmatprep.subr.mxu0 0.0
    %5852 = vmatpush1.msra.mxu0 %v5825
    %5853 = vmatprep.subr.mxu0 0.0
    %5854 = vmatpush1.msra.mxu0 %v5824
    %5855 = vmatprep.subr.mxu0 0.0
    %5856 = vmatpush1.msra.mxu0 %v5823
    %5857 = vmatprep.subr.mxu0 0.0
    %5858 = vmatpush1.msra.mxu0 %v5822
    %5859 = vmatprep.subr.mxu0 0.0
    %5860 = vmatpush1.msra.mxu0 %v5821
    %5861 = vmatprep.subr.mxu0 0.0
    %5862 = vmatpush1.msra.mxu0 %v5820
    %5863 = vmatprep.subr.mxu0 0.0
    %5864 = vmatpush1.msra.mxu0 %v5819
    %5865 = vmatprep.subr.mxu0 0.0
    %5866 = vmatpush1.msra.mxu0 %v5818
    %5867 = vmatprep.subr.mxu0 0.0
    %5868 = vmatpush1.msra.mxu0 %v5817
    %5869 = vmatprep.subr.mxu0 0.0
    %5870 = vmatpush1.msra.mxu0 %v5816
    %5871 = vmatprep.subr.mxu0 0.0
    %5872 = vmatpush2.msra.mxu0 0.0
    %5873 = vmatprep.subr.mxu0 0.0
    %5874 = vmatpush2.msra.mxu0 0.0
    %5875 = vmatprep.subr.mxu0 0.0
    %5876 = vmatpush2.msra.mxu0 0.0
    %5877 = vmatprep.subr.mxu0 0.0
    %5878 = vmatpush2.msra.mxu0 0.0
    %5879 = vmatprep.subr.mxu0 0.0
    %5880 = vmatpush2.msra.mxu0 0.0
    %5881 = vmatprep.subr.mxu0 0.0
    %5882 = vmatpush2.msra.mxu0 0.0
    %5883 = vmatprep.subr.mxu0 0.0
    %5884 = vmatpush2.msra.mxu0 0.0
    %5885 = vmatprep.subr.mxu0 0.0
    %5886 = vmatpush2.msra.mxu0 0.0
    %5887 = vmatprep.subr.mxu0 0.0
    %5888 = vmatpush2.msra.mxu0 0.0
    %5889 = vmatprep.subr.mxu0 0.0
    %5890 = vmatpush2.msra.mxu0 0.0
    %5891 = vmatprep.subr.mxu0 0.0
    %5892 = vmatpush2.msra.mxu0 0.0
    %5893 = vmatprep.subr.mxu0 0.0
    %5894 = vmatpush2.msra.mxu0 0.0
    %5895 = vmatprep.subr.mxu0 0.0
    %5896 = vmatpush2.msra.mxu0 0.0
    %5897 = vmatprep.subr.mxu0 0.0
    %5898 = vmatpush2.msra.mxu0 0.0
    %5899 = vmatprep.subr.mxu0 0.0
    %5900 = vmatpush2.msra.mxu0 0.0
    %5901 = vmatprep.subr.mxu0 0.0
    %5902 = vmatpush2.msra.mxu0 0.0
    %5903 = vmatprep.mubr.f32.mxu0 0.0
    %5904 = vmatmul.mubr.f32.gmra.mxu0 %v5815
    %v5905 = vpop.f32.mrf.mxu0
    %v5906 = vadd.f32 %v5837, %v5905
    %v5907 = vpop.f32.mrf.mxu0
    %5908 = vdwg.mxu0
    %5909 = vst [vmem:[%s15] sm:$0xff] %v5906
    // Predicated region
    $region82: #{network_forward.1} parent=1 // pred_check
      _
    $region83: #{network_forward.1} parent=1 // pred_check_branch
      %5911 = sbr.rel (0) target = $region85
    $region84: #{network_forward.1} parent=1 // pred_region
      _
    $region85: #{network_forward.1} parent=1 // pred_fallthru
      _
    // Predicated region
    $region86: #{network_forward.1} parent=1 // pred_check
      _
    $region87: #{network_forward.1} parent=1 // pred_check_branch
      %5913 = sbr.rel (0) target = $region89
    $region88: #{network_forward.1} parent=1 // pred_region
      _
    $region89: #{network_forward.1} parent=1 // pred_fallthru
      _
    %5914 = vsyncpa [#allocation3], 1
    %5915 = vsyncpa [#allocation5], 1
    %5916 = vsyncpa [#allocation8], 1

</llo_original>
